<compile_context>
chip_gen: v7x
topology: tpu7x:2x2x1
jax: 0.10.0
libtpu: 0.0.40
codegen_flags: <defaults>
</compile_context>

<pallas_src>
import functools

import jax
import jax.numpy as jnp
from jax.experimental import pallas as pl
from jax.experimental.pallas import tpu as pltpu


# --------------------------------------------------------------------------
# Kernel 1: Conv2d(2, 1, kernel=8, stride=8) + Linear(784, D), gridded over N.
# --------------------------------------------------------------------------
def _conv_fc_kernel(patches_ref, wc_ref, wfc_ref, bfc_ref, ve_ref):
    # patches: (TN, 128, P) bf16   wc: (128, 1) f32
    # wfc:     (P, D)       f32    bfc: (1, D)  f32 (conv bias already folded in)
    x = patches_ref[...].astype(jnp.float32)                  # (TN, 128, P)
    z = jnp.sum(x * wc_ref[...], axis=1)                      # conv as per-patch dot -> (TN, P)
    ve_ref[...] = (jnp.dot(z, wfc_ref[...],
                           preferred_element_type=jnp.float32)
                   + bfc_ref[...])                             # (TN, D)


# --------------------------------------------------------------------------
# Kernel 2: tiny epilogue on (B, S, D): bos / eos / pos-embed / LayerNorm.
# --------------------------------------------------------------------------
def _epilogue_kernel(ve_ref, bos_ref, eos_ref, pos_ref, ends_ref, g_ref, b_ref,
                     out_ref, *, B, S, D, eps):
    # ve_ref: (B, S, D) with rows 1..L = frame embeddings, rows 0 and S-1 = 0.
    full = ve_ref[...]
    s_idx = jax.lax.broadcasted_iota(jnp.int32, (B, S, D), 1)
    full = jnp.where(s_idx == 0, bos_ref[...].reshape(1, 1, D), full)
    full = jnp.where(s_idx == ends_ref[...].reshape(B, 1, 1),
                     eos_ref[...].reshape(1, 1, D), full)
    full = full + pos_ref[...].reshape(1, S, D)

    mean = jnp.mean(full, axis=-1, keepdims=True)
    var = jnp.mean(jnp.square(full - mean), axis=-1, keepdims=True)
    normed = (full - mean) * jax.lax.rsqrt(var + eps)
    out_ref[...] = (normed * g_ref[...].reshape(1, 1, D)
                    + b_ref[...].reshape(1, 1, D))
    # nn.Dropout(p=0) is the identity.


def temporal_of_embedding(video, video_mask, params, *, frame_block=64):
    B, L, C, H, W = video.shape
    assert C == 2 and H % 8 == 0 and W % 8 == 0
    Ph, Pw = H // 8, W // 8
    P = Ph * Pw
    N = B * L
    S = L + 2
    D = params["fc_w"].shape[0]
    K = C * 64                                                # 128 conv taps

    # ---- im2col for the stride-8/kernel-8 conv (pure layout), emitted in bf16
    # to halve the dominant HBM traffic.
    # TODO(synk): fuse the im2col into kernel 1 with strided DMAs from `video`
    # (memory_space=pl.ANY) to avoid the extra HBM round trip entirely.
    x = video.reshape(N, C, Ph, 8, Pw, 8)
    x = jnp.transpose(x, (0, 1, 3, 5, 2, 4))                  # (N, C, kh, kw, Ph, Pw)
    patches = x.reshape(N, K, P).astype(jnp.bfloat16)

    wc = params["conv_w"].reshape(K, 1).astype(jnp.float32)   # (128, 1)
    wfc = params["fc_w"].T.astype(jnp.float32)                # (P, D)
    # Fold conv bias into fc bias.
    bfc = (params["conv_b"].reshape(()) * jnp.sum(wfc, axis=0)
           + params["fc_b"]).reshape(1, D).astype(jnp.float32)

    # Tile the frame axis: TN <= 64 keeps two in-flight patch buffers well under
    # v7x's VMEM budget; TN == N when N is small (demo).
    TN = min(frame_block, N)
    grid_n = pl.cdiv(N, TN)

    patches_bytes = N * K * P * 2
    vmem_needed = (2 * TN * K * P * 2        # double-buffered patches block
                   + P * D * 4 + K * 4       # invariant weights
                   + 2 * TN * D * 4          # double-buffered output block
                   + (1 << 20))              # slack
    vmem_limit = int(min(max(2 * vmem_needed, 16 << 20), 48 << 20))

    ve = pl.pallas_call(
        _conv_fc_kernel,
        out_shape=jax.ShapeDtypeStruct((N, D), jnp.float32),
        grid=(grid_n,),
        in_specs=[
            pl.BlockSpec((TN, K, P), lambda i: (i, 0, 0)),    # streamed per block
            pl.BlockSpec((K, 1), lambda i: (0, 0)),           # grid-invariant
            pl.BlockSpec((P, D), lambda i: (0, 0)),           # grid-invariant
            pl.BlockSpec((1, D), lambda i: (0, 0)),           # grid-invariant
        ],
        out_specs=pl.BlockSpec((TN, D), lambda i: (i, 0)),
        compiler_params=pltpu.CompilerParams(
            dimension_semantics=("parallel",),
            vmem_limit_bytes=vmem_limit),
        cost_estimate=pl.CostEstimate(
            flops=2 * N * P * (K + D),
            transcendentals=0,
            bytes_accessed=patches_bytes + P * D * 4 + N * D * 4),
    )(patches, wc, wfc, bfc)

    # ---- tiny epilogue (B*S*D floats): assemble [bos | frames | 0], eos scatter,
    # pos-embed add, LayerNorm — one grid-less pallas_call.
    ve_padded = jnp.pad(ve.reshape(B, L, D), ((0, 0), (1, 1), (0, 0)))   # (B, S, D)

    ends = jnp.sum(video_mask.astype(jnp.int32), axis=1) - 1
    ends = jnp.where(ends < 0, ends + S, ends).reshape(B, 1)  # torch negative-index wrap
    pos = params["pos_embed"][:S].astype(jnp.float32)         # static arange lookup -> slice

    vmem = lambda: pl.BlockSpec(memory_space=pltpu.MemorySpace.VMEM)
    kernel = functools.partial(_epilogue_kernel, B=B, S=S, D=D, eps=1e-5)
    return pl.pallas_call(
        kernel,
        out_shape=jax.ShapeDtypeStruct((B, S, D), jnp.float32),
        in_specs=[vmem() for _ in range(7)],
        out_specs=vmem(),
    )(ve_padded,
      params["bos"].reshape(1, D).astype(jnp.float32),
      params["eos"].reshape(1, D).astype(jnp.float32),
      pos,
      ends,
      params["ln_w"].reshape(1, D).astype(jnp.float32),
      params["ln_b"].reshape(1, D).astype(jnp.float32))


def reference(video, video_mask, params):
    """Pure-JAX (f32) reference mirroring the PyTorch forward."""
    B, L, C, H, W = video.shape
    y = jax.lax.conv_general_dilated(
        video.reshape(B * L, C, H, W), params["conv_w"],
        window_strides=(8, 8), padding="VALID",
        dimension_numbers=("NCHW", "OIHW", "NCHW"))
    y = y + params["conv_b"].reshape(1, 1, 1, 1)
    ve = y.reshape(B, L, -1) @ params["fc_w"].T + params["fc_b"]
    D = ve.shape[-1]
    full = jnp.concatenate(
        [jnp.broadcast_to(params["bos"], (B, 1, D)), ve,
         jnp.zeros((B, 1, D), jnp.float32)], axis=1)
    ends = video_mask.sum(axis=1) - 1
    full = full.at[jnp.arange(B), ends].set(params["eos"])
    full = full + params["pos_embed"][:L + 2][None]
    mean = full.mean(-1, keepdims=True)
    var = ((full - mean) ** 2).mean(-1, keepdims=True)
    full = (full - mean) / jnp.sqrt(var + 1e-5)
    return full * params["ln_w"] + params["ln_b"]


if __name__ == "__main__":
    # H = W = 224 is fixed by the module (fc input size = (224//8)**2 = 784).
    B, L, C, H, W, D = 2, 4, 2, 224, 224, 32
    max_pos_len = 16
    key = jax.random.PRNGKey(0)
    ks = jax.random.split(key, 8)

    params = {
        "conv_w": jax.random.normal(ks[0], (1, C, 8, 8), jnp.float32) * 0.02,
        "conv_b": jnp.full((1,), 0.1, jnp.float32),        # nonzero: exercises bias folding
        "fc_w": jax.random.normal(ks[1], (D, (H // 8) * (W // 8)), jnp.float32) * 0.02,
        "fc_b": jnp.zeros((D,), jnp.float32),
        "bos": jax.random.normal(ks[2], (D,), jnp.float32) * 0.02,
        "eos": jax.random.normal(ks[3], (D,), jnp.float32) * 0.02,
        "pos_embed": jax.random.normal(ks[4], (max_pos_len + 2, D), jnp.float32) * 0.02,
        "ln_w": jnp.ones((D,), jnp.float32),
        "ln_b": jnp.zeros((D,), jnp.float32),
    }

    video = jax.random.normal(ks[5], (B, L, C, H, W), jnp.float32)
    # mask covers [bos, L frames, eos]; batch 1 has one padded position.
    video_mask = jnp.array([[1] * (L + 2),
                            [1] * (L + 1) + [0]], dtype=jnp.int32)

    out = temporal_of_embedding(video, video_mask, params)
    out = jax.block_until_ready(out)

    ref = reference(video, video_mask, params)
    assert out.shape == (B, L + 2, D)
    # bf16 patches + bf16-pass MXU vs. pure-f32 reference -> slightly looser tol.
    assert jnp.allclose(out, ref, atol=2e-2, rtol=2e-2), float(
        jnp.max(jnp.abs(out - ref)))
    print("KERNEL_OK")
</pallas_src>

<mosaic_0001>
module attributes {stable_mosaic.version = 11 : i64} {
  func.func @_conv_fc_kernel(%arg0: i32, %arg1: memref<8x128x784xbf16, #tpu.memory_space<vmem>>, %arg2: memref<128x1xf32, #tpu.memory_space<vmem>>, %arg3: memref<784x32xf32, #tpu.memory_space<vmem>>, %arg4: memref<1x32xf32, #tpu.memory_space<vmem>>, %arg5: memref<8x32xf32, #tpu.memory_space<vmem>>) attributes {dimension_semantics = [#tpu.dimension_semantics<parallel>], iteration_bounds = array<i64: 1>, scalar_prefetch = 0 : i64, scratch_operands = 0 : i64, tpu.core_type = #tpu.core_type<tc>, window_params = [{transform_indices = @transform_0, window_bounds = array<i64: 8, 128, 784>}, {pipeline_mode = #tpu.pipeline_mode<synchronous>, transform_indices = @transform_1, window_bounds = array<i64: 128, 1>}, {pipeline_mode = #tpu.pipeline_mode<synchronous>, transform_indices = @transform_2, window_bounds = array<i64: 784, 32>}, {pipeline_mode = #tpu.pipeline_mode<synchronous>, transform_indices = @transform_3, window_bounds = array<i64: 1, 32>}, {transform_indices = @transform_4, window_bounds = array<i64: 8, 32>}]} {
    %c0 = arith.constant 0 : index
    %c0_0 = arith.constant 0 : index
    %c0_1 = arith.constant 0 : index
    %0 = vector.load %arg1[%c0, %c0_0, %c0_1] : memref<8x128x784xbf16, #tpu.memory_space<vmem>>, vector<8x128x784xbf16>
    %1 = arith.extf %0 : vector<8x128x784xbf16> to vector<8x128x784xf32>
    %c0_2 = arith.constant 0 : index
    %c0_3 = arith.constant 0 : index
    %2 = vector.load %arg2[%c0_2, %c0_3] : memref<128x1xf32, #tpu.memory_space<vmem>>, vector<128x1xf32>
    %3 = vector.shape_cast %2 : vector<128x1xf32> to vector<1x128x1xf32>
    %4 = vector.broadcast %3 : vector<1x128x1xf32> to vector<8x128x784xf32>
    %5 = arith.mulf %1, %4 : vector<8x128x784xf32>
    %cst = arith.constant dense<0.000000e+00> : vector<8x784xf32>
    %6 = vector.multi_reduction <add>, %5, %cst [1] : vector<8x128x784xf32> to vector<8x784xf32>
    %c0_4 = arith.constant 0 : index
    %c0_5 = arith.constant 0 : index
    %7 = vector.load %arg3[%c0_4, %c0_5] : memref<784x32xf32, #tpu.memory_space<vmem>>, vector<784x32xf32>
    %cst_6 = arith.constant dense<0.000000e+00> : vector<8x32xf32>
    %8 = tpu.matmul %6, %7, %cst_6 {dimension_numbers = #tpu.dot_dimension_numbers<[1], [0], [0], [1], [0, 0, 1, 1], [], []>} : vector<8x784xf32>, vector<784x32xf32>, vector<8x32xf32> -> vector<8x32xf32>
    %c0_7 = arith.constant 0 : index
    %c0_8 = arith.constant 0 : index
    %9 = vector.load %arg4[%c0_7, %c0_8] : memref<1x32xf32, #tpu.memory_space<vmem>>, vector<1x32xf32>
    %10 = vector.broadcast %9 : vector<1x32xf32> to vector<8x32xf32>
    %11 = arith.addf %8, %10 : vector<8x32xf32>
    %c0_9 = arith.constant 0 : index
    %c0_10 = arith.constant 0 : index
    %12 = vector.load %arg5[%c0_9, %c0_10] : memref<8x32xf32, #tpu.memory_space<vmem>>, vector<8x32xf32>
    tpu.vector_store %arg5[%c0_9, %c0_10], %11 {strides = array<i32>} : memref<8x32xf32, #tpu.memory_space<vmem>>, vector<8x32xf32>,
    return
  }
  func.func @transform_0(%arg0: i32) -> (i32, i32, i32) {
    %c0_i32 = arith.constant 0 : i32
    %c0_i32_0 = arith.constant 0 : i32
    %c0_i32_1 = arith.constant 0 : i32
    return %arg0, %c0_i32, %c0_i32_0 : i32, i32, i32
  }
  func.func @transform_1(%arg0: i32) -> (i32, i32) {
    %c0_i32 = arith.constant 0 : i32
    %c0_i32_0 = arith.constant 0 : i32
    %c0_i32_1 = arith.constant 0 : i32
    return %c0_i32, %c0_i32_0 : i32, i32
  }
  func.func @transform_2(%arg0: i32) -> (i32, i32) {
    %c0_i32 = arith.constant 0 : i32
    %c0_i32_0 = arith.constant 0 : i32
    %c0_i32_1 = arith.constant 0 : i32
    return %c0_i32, %c0_i32_0 : i32, i32
  }
  func.func @transform_3(%arg0: i32) -> (i32, i32) {
    %c0_i32 = arith.constant 0 : i32
    %c0_i32_0 = arith.constant 0 : i32
    %c0_i32_1 = arith.constant 0 : i32
    return %c0_i32, %c0_i32_0 : i32, i32
  }
  func.func @transform_4(%arg0: i32) -> (i32, i32) {
    %c0_i32 = arith.constant 0 : i32
    %c0_i32_0 = arith.constant 0 : i32
    return %arg0, %c0_i32 : i32, i32
  }
}

</mosaic_0001>

<llo_original>
// kernel: tpu_custom_call.1
$region0: #{tpu_custom_call.1}
  #allocation0 [shape = 'u32[]', space=smem, size = 0x4, offset = 0x4, fixed_abs, tag = 'smem constant byte address 0x4 - core index']
  #allocation1 [shape = 'u32[144,128]{1,0:T(1,128)}', space=vmem, size = 0x12000, scoped, tag = 'internal scratch']
  %s0 = inlined_call_operand.vmem [shape: bf16[8,128,784], index: 0, kind: input, shape index: {}]
  %s1 = inlined_call_operand.vmem [shape: f32[128,1], index: 1, kind: input, shape index: {}]
  %s2 = inlined_call_operand.vmem [shape: f32[784,32], index: 2, kind: input, shape index: {}]
  %s3 = inlined_call_operand.vmem [shape: f32[1,32], index: 3, kind: input, shape index: {}]
  %s4 = inlined_call_operand.hbm [shape: f32[8,32], index: 4, kind: output, shape index: {}]
  %s5 = sld [smem:[#allocation0]]
  $region26: #{tpu_custom_call.1} parent=0
    _
  %s7 = ssub.s32 1, %s5
  %s8 = scalar_select 0, %s7, %s5
  $region1: #{tpu_custom_call.1} parent=0
    #allocation2 [shape = 'u8[4096]{0}', space=vmem, size = 0x1000, scoped, tag = 'output window, operand 0, single buffered']
    #allocation3 [shape = 's32[1]{0}', space=sflag, size = 0x4, scoped, tag = 'scoped memory for tpu_custom_call.1']
    %9 = vsyncpa [#allocation3], 0
    // Predicated region
    $region2: #{tpu_custom_call.1} parent=1 // pred_check
      _
    $region3: #{tpu_custom_call.1} parent=1 // pred_check_branch
      %11 = sbr.rel (0) target = $region5
    $region4: #{tpu_custom_call.1} parent=1 // pred_region
      _
    $region5: #{tpu_custom_call.1} parent=1 // pred_fallthru
      _
    // Predicated region
    $region6: #{tpu_custom_call.1} parent=1 // pred_check
      _
    $region7: #{tpu_custom_call.1} parent=1 // pred_check_branch
      %13 = sbr.rel (0) target = $region9
    $region8: #{tpu_custom_call.1} parent=1 // pred_region
      _
    $region9: #{tpu_custom_call.1} parent=1 // pred_fallthru
      _
    // Predicated region
    $region10: #{tpu_custom_call.1} parent=1 // pred_check
      _
    $region11: #{tpu_custom_call.1} parent=1 // pred_check_branch
      %15 = sbr.rel (0) target = $region13
    $region12: #{tpu_custom_call.1} parent=1 // pred_region
      _
    $region13: #{tpu_custom_call.1} parent=1 // pred_fallthru
      _
    // Predicated region
    $region14: #{tpu_custom_call.1} parent=1 // pred_check
      _
    $region15: #{tpu_custom_call.1} parent=1 // pred_check_branch
      %17 = sbr.rel (0) target = $region17
    $region16: #{tpu_custom_call.1} parent=1 // pred_region
      _
    $region17: #{tpu_custom_call.1} parent=1 // pred_fallthru
      _
    %v18 = vld [vmem:[%s0] sm:$0xff]
    %v19 = vld [vmem:[%s0 + $0x8] sm:$0xff]
    %v20 = vld [vmem:[%s0 + $0x10] sm:$0xff]
    %v21 = vld [vmem:[%s0 + $0x18] sm:$0xf]
    %v22 = vld [vmem:[%s0 + $0x1c] sm:$0xff]
    %v23 = vld [vmem:[%s0 + $0x24] sm:$0xff]
    %v24 = vld [vmem:[%s0 + $0x2c] sm:$0xff]
    %v25 = vld [vmem:[%s0 + $0x34] sm:$0xf]
    %v26 = vld [vmem:[%s0 + $0x38] sm:$0xff]
    %v27 = vld [vmem:[%s0 + $0x40] sm:$0xff]
    %v28 = vld [vmem:[%s0 + $0x48] sm:$0xff]
    %v29 = vld [vmem:[%s0 + $0x50] sm:$0xf]
    %v30 = vld [vmem:[%s0 + $0x54] sm:$0xff]
    %v31 = vld [vmem:[%s0 + $0x5c] sm:$0xff]
    %v32 = vld [vmem:[%s0 + $0x64] sm:$0xff]
    %v33 = vld [vmem:[%s0 + $0x6c] sm:$0xf]
    %v34 = vld [vmem:[%s0 + $0x70] sm:$0xff]
    %v35 = vld [vmem:[%s0 + $0x78] sm:$0xff]
    %v36 = vld [vmem:[%s0 + $0x80] sm:$0xff]
    %v37 = vld [vmem:[%s0 + $0x88] sm:$0xf]
    %v38 = vld [vmem:[%s0 + $0x8c] sm:$0xff]
    %v39 = vld [vmem:[%s0 + $0x94] sm:$0xff]
    %v40 = vld [vmem:[%s0 + $0x9c] sm:$0xff]
    %v41 = vld [vmem:[%s0 + $0xa4] sm:$0xf]
    %v42 = vld [vmem:[%s0 + $0xa8] sm:$0xff]
    %v43 = vld [vmem:[%s0 + $0xb0] sm:$0xff]
    %v44 = vld [vmem:[%s0 + $0xb8] sm:$0xff]
    %v45 = vld [vmem:[%s0 + $0xc0] sm:$0xf]
    %v46 = vld [vmem:[%s0 + $0xc4] sm:$0xff]
    %v47 = vld [vmem:[%s0 + $0xcc] sm:$0xff]
    %v48 = vld [vmem:[%s0 + $0xd4] sm:$0xff]
    %v49 = vld [vmem:[%s0 + $0xdc] sm:$0xf]
    %v50 = vld [vmem:[%s0 + $0xe0] sm:$0xff]
    %v51 = vld [vmem:[%s0 + $0xe8] sm:$0xff]
    %v52 = vld [vmem:[%s0 + $0xf0] sm:$0xff]
    %v53 = vld [vmem:[%s0 + $0xf8] sm:$0xf]
    %v54 = vld [vmem:[%s0 + $0xfc] sm:$0xff]
    %v55 = vld [vmem:[%s0 + $0x104] sm:$0xff]
    %v56 = vld [vmem:[%s0 + $0x10c] sm:$0xff]
    %v57 = vld [vmem:[%s0 + $0x114] sm:$0xf]
    %v58 = vld [vmem:[%s0 + $0x118] sm:$0xff]
    %v59 = vld [vmem:[%s0 + $0x120] sm:$0xff]
    %v60 = vld [vmem:[%s0 + $0x128] sm:$0xff]
    %v61 = vld [vmem:[%s0 + $0x130] sm:$0xf]
    %v62 = vld [vmem:[%s0 + $0x134] sm:$0xff]
    %v63 = vld [vmem:[%s0 + $0x13c] sm:$0xff]
    %v64 = vld [vmem:[%s0 + $0x144] sm:$0xff]
    %v65 = vld [vmem:[%s0 + $0x14c] sm:$0xf]
    %v66 = vld [vmem:[%s0 + $0x150] sm:$0xff]
    %v67 = vld [vmem:[%s0 + $0x158] sm:$0xff]
    %v68 = vld [vmem:[%s0 + $0x160] sm:$0xff]
    %v69 = vld [vmem:[%s0 + $0x168] sm:$0xf]
    %v70 = vld [vmem:[%s0 + $0x16c] sm:$0xff]
    %v71 = vld [vmem:[%s0 + $0x174] sm:$0xff]
    %v72 = vld [vmem:[%s0 + $0x17c] sm:$0xff]
    %v73 = vld [vmem:[%s0 + $0x184] sm:$0xf]
    %v74 = vld [vmem:[%s0 + $0x188] sm:$0xff]
    %v75 = vld [vmem:[%s0 + $0x190] sm:$0xff]
    %v76 = vld [vmem:[%s0 + $0x198] sm:$0xff]
    %v77 = vld [vmem:[%s0 + $0x1a0] sm:$0xf]
    %v78 = vld [vmem:[%s0 + $0x1a4] sm:$0xff]
    %v79 = vld [vmem:[%s0 + $0x1ac] sm:$0xff]
    %v80 = vld [vmem:[%s0 + $0x1b4] sm:$0xff]
    %v81 = vld [vmem:[%s0 + $0x1bc] sm:$0xf]
    %v82 = vld [vmem:[%s0 + $0x1c0] sm:$0xff]
    %v83 = vld [vmem:[%s0 + $0x1c8] sm:$0xff]
    %v84 = vld [vmem:[%s0 + $0x1d0] sm:$0xff]
    %v85 = vld [vmem:[%s0 + $0x1d8] sm:$0xf]
    %v86 = vld [vmem:[%s0 + $0x1dc] sm:$0xff]
    %v87 = vld [vmem:[%s0 + $0x1e4] sm:$0xff]
    %v88 = vld [vmem:[%s0 + $0x1ec] sm:$0xff]
    %v89 = vld [vmem:[%s0 + $0x1f4] sm:$0xf]
    %v90 = vld [vmem:[%s0 + $0x1f8] sm:$0xff]
    %v91 = vld [vmem:[%s0 + $0x200] sm:$0xff]
    %v92 = vld [vmem:[%s0 + $0x208] sm:$0xff]
    %v93 = vld [vmem:[%s0 + $0x210] sm:$0xf]
    %v94 = vld [vmem:[%s0 + $0x214] sm:$0xff]
    %v95 = vld [vmem:[%s0 + $0x21c] sm:$0xff]
    %v96 = vld [vmem:[%s0 + $0x224] sm:$0xff]
    %v97 = vld [vmem:[%s0 + $0x22c] sm:$0xf]
    %v98 = vld [vmem:[%s0 + $0x230] sm:$0xff]
    %v99 = vld [vmem:[%s0 + $0x238] sm:$0xff]
    %v100 = vld [vmem:[%s0 + $0x240] sm:$0xff]
    %v101 = vld [vmem:[%s0 + $0x248] sm:$0xf]
    %v102 = vld [vmem:[%s0 + $0x24c] sm:$0xff]
    %v103 = vld [vmem:[%s0 + $0x254] sm:$0xff]
    %v104 = vld [vmem:[%s0 + $0x25c] sm:$0xff]
    %v105 = vld [vmem:[%s0 + $0x264] sm:$0xf]
    %v106 = vld [vmem:[%s0 + $0x268] sm:$0xff]
    %v107 = vld [vmem:[%s0 + $0x270] sm:$0xff]
    %v108 = vld [vmem:[%s0 + $0x278] sm:$0xff]
    %v109 = vld [vmem:[%s0 + $0x280] sm:$0xf]
    %v110 = vld [vmem:[%s0 + $0x284] sm:$0xff]
    %v111 = vld [vmem:[%s0 + $0x28c] sm:$0xff]
    %v112 = vld [vmem:[%s0 + $0x294] sm:$0xff]
    %v113 = vld [vmem:[%s0 + $0x29c] sm:$0xf]
    %v114 = vld [vmem:[%s0 + $0x2a0] sm:$0xff]
    %v115 = vld [vmem:[%s0 + $0x2a8] sm:$0xff]
    %v116 = vld [vmem:[%s0 + $0x2b0] sm:$0xff]
    %v117 = vld [vmem:[%s0 + $0x2b8] sm:$0xf]
    %v118 = vld [vmem:[%s0 + $0x2bc] sm:$0xff]
    %v119 = vld [vmem:[%s0 + $0x2c4] sm:$0xff]
    %v120 = vld [vmem:[%s0 + $0x2cc] sm:$0xff]
    %v121 = vld [vmem:[%s0 + $0x2d4] sm:$0xf]
    %v122 = vld [vmem:[%s0 + $0x2d8] sm:$0xff]
    %v123 = vld [vmem:[%s0 + $0x2e0] sm:$0xff]
    %v124 = vld [vmem:[%s0 + $0x2e8] sm:$0xff]
    %v125 = vld [vmem:[%s0 + $0x2f0] sm:$0xf]
    %v126 = vld [vmem:[%s0 + $0x2f4] sm:$0xff]
    %v127 = vld [vmem:[%s0 + $0x2fc] sm:$0xff]
    %v128 = vld [vmem:[%s0 + $0x304] sm:$0xff]
    %v129 = vld [vmem:[%s0 + $0x30c] sm:$0xf]
    %v130 = vld [vmem:[%s0 + $0x310] sm:$0xff]
    %v131 = vld [vmem:[%s0 + $0x318] sm:$0xff]
    %v132 = vld [vmem:[%s0 + $0x320] sm:$0xff]
    %v133 = vld [vmem:[%s0 + $0x328] sm:$0xf]
    %v134 = vld [vmem:[%s0 + $0x32c] sm:$0xff]
    %v135 = vld [vmem:[%s0 + $0x334] sm:$0xff]
    %v136 = vld [vmem:[%s0 + $0x33c] sm:$0xff]
    %v137 = vld [vmem:[%s0 + $0x344] sm:$0xf]
    %v138 = vld [vmem:[%s0 + $0x348] sm:$0xff]
    %v139 = vld [vmem:[%s0 + $0x350] sm:$0xff]
    %v140 = vld [vmem:[%s0 + $0x358] sm:$0xff]
    %v141 = vld [vmem:[%s0 + $0x360] sm:$0xf]
    %v142 = vld [vmem:[%s0 + $0x364] sm:$0xff]
    %v143 = vld [vmem:[%s0 + $0x36c] sm:$0xff]
    %v144 = vld [vmem:[%s0 + $0x374] sm:$0xff]
    %v145 = vld [vmem:[%s0 + $0x37c] sm:$0xf]
    %v146 = vld [vmem:[%s0 + $0x380] sm:$0xff]
    %v147 = vld [vmem:[%s0 + $0x388] sm:$0xff]
    %v148 = vld [vmem:[%s0 + $0x390] sm:$0xff]
    %v149 = vld [vmem:[%s0 + $0x398] sm:$0xf]
    %v150 = vld [vmem:[%s0 + $0x39c] sm:$0xff]
    %v151 = vld [vmem:[%s0 + $0x3a4] sm:$0xff]
    %v152 = vld [vmem:[%s0 + $0x3ac] sm:$0xff]
    %v153 = vld [vmem:[%s0 + $0x3b4] sm:$0xf]
    %v154 = vld [vmem:[%s0 + $0x3b8] sm:$0xff]
    %v155 = vld [vmem:[%s0 + $0x3c0] sm:$0xff]
    %v156 = vld [vmem:[%s0 + $0x3c8] sm:$0xff]
    %v157 = vld [vmem:[%s0 + $0x3d0] sm:$0xf]
    %v158 = vld [vmem:[%s0 + $0x3d4] sm:$0xff]
    %v159 = vld [vmem:[%s0 + $0x3dc] sm:$0xff]
    %v160 = vld [vmem:[%s0 + $0x3e4] sm:$0xff]
    %v161 = vld [vmem:[%s0 + $0x3ec] sm:$0xf]
    %v162 = vld [vmem:[%s0 + $0x3f0] sm:$0xff]
    %v163 = vld [vmem:[%s0 + $0x3f8] sm:$0xff]
    %v164 = vld [vmem:[%s0 + $0x400] sm:$0xff]
    %v165 = vld [vmem:[%s0 + $0x408] sm:$0xf]
    %v166 = vld [vmem:[%s0 + $0x40c] sm:$0xff]
    %v167 = vld [vmem:[%s0 + $0x414] sm:$0xff]
    %v168 = vld [vmem:[%s0 + $0x41c] sm:$0xff]
    %v169 = vld [vmem:[%s0 + $0x424] sm:$0xf]
    %v170 = vld [vmem:[%s0 + $0x428] sm:$0xff]
    %v171 = vld [vmem:[%s0 + $0x430] sm:$0xff]
    %v172 = vld [vmem:[%s0 + $0x438] sm:$0xff]
    %v173 = vld [vmem:[%s0 + $0x440] sm:$0xf]
    %v174 = vld [vmem:[%s0 + $0x444] sm:$0xff]
    %v175 = vld [vmem:[%s0 + $0x44c] sm:$0xff]
    %v176 = vld [vmem:[%s0 + $0x454] sm:$0xff]
    %v177 = vld [vmem:[%s0 + $0x45c] sm:$0xf]
    %v178 = vld [vmem:[%s0 + $0x460] sm:$0xff]
    %v179 = vld [vmem:[%s0 + $0x468] sm:$0xff]
    %v180 = vld [vmem:[%s0 + $0x470] sm:$0xff]
    %v181 = vld [vmem:[%s0 + $0x478] sm:$0xf]
    %v182 = vld [vmem:[%s0 + $0x47c] sm:$0xff]
    %v183 = vld [vmem:[%s0 + $0x484] sm:$0xff]
    %v184 = vld [vmem:[%s0 + $0x48c] sm:$0xff]
    %v185 = vld [vmem:[%s0 + $0x494] sm:$0xf]
    %v186 = vld [vmem:[%s0 + $0x498] sm:$0xff]
    %v187 = vld [vmem:[%s0 + $0x4a0] sm:$0xff]
    %v188 = vld [vmem:[%s0 + $0x4a8] sm:$0xff]
    %v189 = vld [vmem:[%s0 + $0x4b0] sm:$0xf]
    %v190 = vld [vmem:[%s0 + $0x4b4] sm:$0xff]
    %v191 = vld [vmem:[%s0 + $0x4bc] sm:$0xff]
    %v192 = vld [vmem:[%s0 + $0x4c4] sm:$0xff]
    %v193 = vld [vmem:[%s0 + $0x4cc] sm:$0xf]
    %v194 = vld [vmem:[%s0 + $0x4d0] sm:$0xff]
    %v195 = vld [vmem:[%s0 + $0x4d8] sm:$0xff]
    %v196 = vld [vmem:[%s0 + $0x4e0] sm:$0xff]
    %v197 = vld [vmem:[%s0 + $0x4e8] sm:$0xf]
    %v198 = vld [vmem:[%s0 + $0x4ec] sm:$0xff]
    %v199 = vld [vmem:[%s0 + $0x4f4] sm:$0xff]
    %v200 = vld [vmem:[%s0 + $0x4fc] sm:$0xff]
    %v201 = vld [vmem:[%s0 + $0x504] sm:$0xf]
    %v202 = vld [vmem:[%s0 + $0x508] sm:$0xff]
    %v203 = vld [vmem:[%s0 + $0x510] sm:$0xff]
    %v204 = vld [vmem:[%s0 + $0x518] sm:$0xff]
    %v205 = vld [vmem:[%s0 + $0x520] sm:$0xf]
    %v206 = vld [vmem:[%s0 + $0x524] sm:$0xff]
    %v207 = vld [vmem:[%s0 + $0x52c] sm:$0xff]
    %v208 = vld [vmem:[%s0 + $0x534] sm:$0xff]
    %v209 = vld [vmem:[%s0 + $0x53c] sm:$0xf]
    %v210 = vld [vmem:[%s0 + $0x540] sm:$0xff]
    %v211 = vld [vmem:[%s0 + $0x548] sm:$0xff]
    %v212 = vld [vmem:[%s0 + $0x550] sm:$0xff]
    %v213 = vld [vmem:[%s0 + $0x558] sm:$0xf]
    %v214 = vld [vmem:[%s0 + $0x55c] sm:$0xff]
    %v215 = vld [vmem:[%s0 + $0x564] sm:$0xff]
    %v216 = vld [vmem:[%s0 + $0x56c] sm:$0xff]
    %v217 = vld [vmem:[%s0 + $0x574] sm:$0xf]
    %v218 = vld [vmem:[%s0 + $0x578] sm:$0xff]
    %v219 = vld [vmem:[%s0 + $0x580] sm:$0xff]
    %v220 = vld [vmem:[%s0 + $0x588] sm:$0xff]
    %v221 = vld [vmem:[%s0 + $0x590] sm:$0xf]
    %v222 = vld [vmem:[%s0 + $0x594] sm:$0xff]
    %v223 = vld [vmem:[%s0 + $0x59c] sm:$0xff]
    %v224 = vld [vmem:[%s0 + $0x5a4] sm:$0xff]
    %v225 = vld [vmem:[%s0 + $0x5ac] sm:$0xf]
    %v226 = vld [vmem:[%s0 + $0x5b0] sm:$0xff]
    %v227 = vld [vmem:[%s0 + $0x5b8] sm:$0xff]
    %v228 = vld [vmem:[%s0 + $0x5c0] sm:$0xff]
    %v229 = vld [vmem:[%s0 + $0x5c8] sm:$0xf]
    %v230 = vld [vmem:[%s0 + $0x5cc] sm:$0xff]
    %v231 = vld [vmem:[%s0 + $0x5d4] sm:$0xff]
    %v232 = vld [vmem:[%s0 + $0x5dc] sm:$0xff]
    %v233 = vld [vmem:[%s0 + $0x5e4] sm:$0xf]
    %v234 = vld [vmem:[%s0 + $0x5e8] sm:$0xff]
    %v235 = vld [vmem:[%s0 + $0x5f0] sm:$0xff]
    %v236 = vld [vmem:[%s0 + $0x5f8] sm:$0xff]
    %v237 = vld [vmem:[%s0 + $0x600] sm:$0xf]
    %v238 = vld [vmem:[%s0 + $0x604] sm:$0xff]
    %v239 = vld [vmem:[%s0 + $0x60c] sm:$0xff]
    %v240 = vld [vmem:[%s0 + $0x614] sm:$0xff]
    %v241 = vld [vmem:[%s0 + $0x61c] sm:$0xf]
    %v242 = vld [vmem:[%s0 + $0x620] sm:$0xff]
    %v243 = vld [vmem:[%s0 + $0x628] sm:$0xff]
    %v244 = vld [vmem:[%s0 + $0x630] sm:$0xff]
    %v245 = vld [vmem:[%s0 + $0x638] sm:$0xf]
    %v246 = vld [vmem:[%s0 + $0x63c] sm:$0xff]
    %v247 = vld [vmem:[%s0 + $0x644] sm:$0xff]
    %v248 = vld [vmem:[%s0 + $0x64c] sm:$0xff]
    %v249 = vld [vmem:[%s0 + $0x654] sm:$0xf]
    %v250 = vld [vmem:[%s0 + $0x658] sm:$0xff]
    %v251 = vld [vmem:[%s0 + $0x660] sm:$0xff]
    %v252 = vld [vmem:[%s0 + $0x668] sm:$0xff]
    %v253 = vld [vmem:[%s0 + $0x670] sm:$0xf]
    %v254 = vld [vmem:[%s0 + $0x674] sm:$0xff]
    %v255 = vld [vmem:[%s0 + $0x67c] sm:$0xff]
    %v256 = vld [vmem:[%s0 + $0x684] sm:$0xff]
    %v257 = vld [vmem:[%s0 + $0x68c] sm:$0xf]
    %v258 = vld [vmem:[%s0 + $0x690] sm:$0xff]
    %v259 = vld [vmem:[%s0 + $0x698] sm:$0xff]
    %v260 = vld [vmem:[%s0 + $0x6a0] sm:$0xff]
    %v261 = vld [vmem:[%s0 + $0x6a8] sm:$0xf]
    %v262 = vld [vmem:[%s0 + $0x6ac] sm:$0xff]
    %v263 = vld [vmem:[%s0 + $0x6b4] sm:$0xff]
    %v264 = vld [vmem:[%s0 + $0x6bc] sm:$0xff]
    %v265 = vld [vmem:[%s0 + $0x6c4] sm:$0xf]
    %v266 = vld [vmem:[%s0 + $0x6c8] sm:$0xff]
    %v267 = vld [vmem:[%s0 + $0x6d0] sm:$0xff]
    %v268 = vld [vmem:[%s0 + $0x6d8] sm:$0xff]
    %v269 = vld [vmem:[%s0 + $0x6e0] sm:$0xf]
    %v270 = vld [vmem:[%s0 + $0x6e4] sm:$0xff]
    %v271 = vld [vmem:[%s0 + $0x6ec] sm:$0xff]
    %v272 = vld [vmem:[%s0 + $0x6f4] sm:$0xff]
    %v273 = vld [vmem:[%s0 + $0x6fc] sm:$0xf]
    %v274 = vld [vmem:[%s0 + $0x700] sm:$0xff]
    %v275 = vld [vmem:[%s0 + $0x708] sm:$0xff]
    %v276 = vld [vmem:[%s0 + $0x710] sm:$0xff]
    %v277 = vld [vmem:[%s0 + $0x718] sm:$0xf]
    %v278 = vld [vmem:[%s0 + $0x71c] sm:$0xff]
    %v279 = vld [vmem:[%s0 + $0x724] sm:$0xff]
    %v280 = vld [vmem:[%s0 + $0x72c] sm:$0xff]
    %v281 = vld [vmem:[%s0 + $0x734] sm:$0xf]
    %v282 = vld [vmem:[%s0 + $0x738] sm:$0xff]
    %v283 = vld [vmem:[%s0 + $0x740] sm:$0xff]
    %v284 = vld [vmem:[%s0 + $0x748] sm:$0xff]
    %v285 = vld [vmem:[%s0 + $0x750] sm:$0xf]
    %v286 = vld [vmem:[%s0 + $0x754] sm:$0xff]
    %v287 = vld [vmem:[%s0 + $0x75c] sm:$0xff]
    %v288 = vld [vmem:[%s0 + $0x764] sm:$0xff]
    %v289 = vld [vmem:[%s0 + $0x76c] sm:$0xf]
    %v290 = vld [vmem:[%s0 + $0x770] sm:$0xff]
    %v291 = vld [vmem:[%s0 + $0x778] sm:$0xff]
    %v292 = vld [vmem:[%s0 + $0x780] sm:$0xff]
    %v293 = vld [vmem:[%s0 + $0x788] sm:$0xf]
    %v294 = vld [vmem:[%s0 + $0x78c] sm:$0xff]
    %v295 = vld [vmem:[%s0 + $0x794] sm:$0xff]
    %v296 = vld [vmem:[%s0 + $0x79c] sm:$0xff]
    %v297 = vld [vmem:[%s0 + $0x7a4] sm:$0xf]
    %v298 = vld [vmem:[%s0 + $0x7a8] sm:$0xff]
    %v299 = vld [vmem:[%s0 + $0x7b0] sm:$0xff]
    %v300 = vld [vmem:[%s0 + $0x7b8] sm:$0xff]
    %v301 = vld [vmem:[%s0 + $0x7c0] sm:$0xf]
    %v302 = vld [vmem:[%s0 + $0x7c4] sm:$0xff]
    %v303 = vld [vmem:[%s0 + $0x7cc] sm:$0xff]
    %v304 = vld [vmem:[%s0 + $0x7d4] sm:$0xff]
    %v305 = vld [vmem:[%s0 + $0x7dc] sm:$0xf]
    %v306 = vld [vmem:[%s0 + $0x7e0] sm:$0xff]
    %v307 = vld [vmem:[%s0 + $0x7e8] sm:$0xff]
    %v308 = vld [vmem:[%s0 + $0x7f0] sm:$0xff]
    %v309 = vld [vmem:[%s0 + $0x7f8] sm:$0xf]
    %v310 = vld [vmem:[%s0 + $0x7fc] sm:$0xff]
    %v311 = vld [vmem:[%s0 + $0x804] sm:$0xff]
    %v312 = vld [vmem:[%s0 + $0x80c] sm:$0xff]
    %v313 = vld [vmem:[%s0 + $0x814] sm:$0xf]
    %v314 = vld [vmem:[%s0 + $0x818] sm:$0xff]
    %v315 = vld [vmem:[%s0 + $0x820] sm:$0xff]
    %v316 = vld [vmem:[%s0 + $0x828] sm:$0xff]
    %v317 = vld [vmem:[%s0 + $0x830] sm:$0xf]
    %v318 = vld [vmem:[%s0 + $0x834] sm:$0xff]
    %v319 = vld [vmem:[%s0 + $0x83c] sm:$0xff]
    %v320 = vld [vmem:[%s0 + $0x844] sm:$0xff]
    %v321 = vld [vmem:[%s0 + $0x84c] sm:$0xf]
    %v322 = vld [vmem:[%s0 + $0x850] sm:$0xff]
    %v323 = vld [vmem:[%s0 + $0x858] sm:$0xff]
    %v324 = vld [vmem:[%s0 + $0x860] sm:$0xff]
    %v325 = vld [vmem:[%s0 + $0x868] sm:$0xf]
    %v326 = vld [vmem:[%s0 + $0x86c] sm:$0xff]
    %v327 = vld [vmem:[%s0 + $0x874] sm:$0xff]
    %v328 = vld [vmem:[%s0 + $0x87c] sm:$0xff]
    %v329 = vld [vmem:[%s0 + $0x884] sm:$0xf]
    %v330 = vld [vmem:[%s0 + $0x888] sm:$0xff]
    %v331 = vld [vmem:[%s0 + $0x890] sm:$0xff]
    %v332 = vld [vmem:[%s0 + $0x898] sm:$0xff]
    %v333 = vld [vmem:[%s0 + $0x8a0] sm:$0xf]
    %v334 = vld [vmem:[%s0 + $0x8a4] sm:$0xff]
    %v335 = vld [vmem:[%s0 + $0x8ac] sm:$0xff]
    %v336 = vld [vmem:[%s0 + $0x8b4] sm:$0xff]
    %v337 = vld [vmem:[%s0 + $0x8bc] sm:$0xf]
    %v338 = vld [vmem:[%s0 + $0x8c0] sm:$0xff]
    %v339 = vld [vmem:[%s0 + $0x8c8] sm:$0xff]
    %v340 = vld [vmem:[%s0 + $0x8d0] sm:$0xff]
    %v341 = vld [vmem:[%s0 + $0x8d8] sm:$0xf]
    %v342 = vld [vmem:[%s0 + $0x8dc] sm:$0xff]
    %v343 = vld [vmem:[%s0 + $0x8e4] sm:$0xff]
    %v344 = vld [vmem:[%s0 + $0x8ec] sm:$0xff]
    %v345 = vld [vmem:[%s0 + $0x8f4] sm:$0xf]
    %v346 = vld [vmem:[%s0 + $0x8f8] sm:$0xff]
    %v347 = vld [vmem:[%s0 + $0x900] sm:$0xff]
    %v348 = vld [vmem:[%s0 + $0x908] sm:$0xff]
    %v349 = vld [vmem:[%s0 + $0x910] sm:$0xf]
    %v350 = vld [vmem:[%s0 + $0x914] sm:$0xff]
    %v351 = vld [vmem:[%s0 + $0x91c] sm:$0xff]
    %v352 = vld [vmem:[%s0 + $0x924] sm:$0xff]
    %v353 = vld [vmem:[%s0 + $0x92c] sm:$0xf]
    %v354 = vld [vmem:[%s0 + $0x930] sm:$0xff]
    %v355 = vld [vmem:[%s0 + $0x938] sm:$0xff]
    %v356 = vld [vmem:[%s0 + $0x940] sm:$0xff]
    %v357 = vld [vmem:[%s0 + $0x948] sm:$0xf]
    %v358 = vld [vmem:[%s0 + $0x94c] sm:$0xff]
    %v359 = vld [vmem:[%s0 + $0x954] sm:$0xff]
    %v360 = vld [vmem:[%s0 + $0x95c] sm:$0xff]
    %v361 = vld [vmem:[%s0 + $0x964] sm:$0xf]
    %v362 = vld [vmem:[%s0 + $0x968] sm:$0xff]
    %v363 = vld [vmem:[%s0 + $0x970] sm:$0xff]
    %v364 = vld [vmem:[%s0 + $0x978] sm:$0xff]
    %v365 = vld [vmem:[%s0 + $0x980] sm:$0xf]
    %v366 = vld [vmem:[%s0 + $0x984] sm:$0xff]
    %v367 = vld [vmem:[%s0 + $0x98c] sm:$0xff]
    %v368 = vld [vmem:[%s0 + $0x994] sm:$0xff]
    %v369 = vld [vmem:[%s0 + $0x99c] sm:$0xf]
    %v370 = vld [vmem:[%s0 + $0x9a0] sm:$0xff]
    %v371 = vld [vmem:[%s0 + $0x9a8] sm:$0xff]
    %v372 = vld [vmem:[%s0 + $0x9b0] sm:$0xff]
    %v373 = vld [vmem:[%s0 + $0x9b8] sm:$0xf]
    %v374 = vld [vmem:[%s0 + $0x9bc] sm:$0xff]
    %v375 = vld [vmem:[%s0 + $0x9c4] sm:$0xff]
    %v376 = vld [vmem:[%s0 + $0x9cc] sm:$0xff]
    %v377 = vld [vmem:[%s0 + $0x9d4] sm:$0xf]
    %v378 = vld [vmem:[%s0 + $0x9d8] sm:$0xff]
    %v379 = vld [vmem:[%s0 + $0x9e0] sm:$0xff]
    %v380 = vld [vmem:[%s0 + $0x9e8] sm:$0xff]
    %v381 = vld [vmem:[%s0 + $0x9f0] sm:$0xf]
    %v382 = vld [vmem:[%s0 + $0x9f4] sm:$0xff]
    %v383 = vld [vmem:[%s0 + $0x9fc] sm:$0xff]
    %v384 = vld [vmem:[%s0 + $0xa04] sm:$0xff]
    %v385 = vld [vmem:[%s0 + $0xa0c] sm:$0xf]
    %v386 = vld [vmem:[%s0 + $0xa10] sm:$0xff]
    %v387 = vld [vmem:[%s0 + $0xa18] sm:$0xff]
    %v388 = vld [vmem:[%s0 + $0xa20] sm:$0xff]
    %v389 = vld [vmem:[%s0 + $0xa28] sm:$0xf]
    %v390 = vld [vmem:[%s0 + $0xa2c] sm:$0xff]
    %v391 = vld [vmem:[%s0 + $0xa34] sm:$0xff]
    %v392 = vld [vmem:[%s0 + $0xa3c] sm:$0xff]
    %v393 = vld [vmem:[%s0 + $0xa44] sm:$0xf]
    %v394 = vld [vmem:[%s0 + $0xa48] sm:$0xff]
    %v395 = vld [vmem:[%s0 + $0xa50] sm:$0xff]
    %v396 = vld [vmem:[%s0 + $0xa58] sm:$0xff]
    %v397 = vld [vmem:[%s0 + $0xa60] sm:$0xf]
    %v398 = vld [vmem:[%s0 + $0xa64] sm:$0xff]
    %v399 = vld [vmem:[%s0 + $0xa6c] sm:$0xff]
    %v400 = vld [vmem:[%s0 + $0xa74] sm:$0xff]
    %v401 = vld [vmem:[%s0 + $0xa7c] sm:$0xf]
    %v402 = vld [vmem:[%s0 + $0xa80] sm:$0xff]
    %v403 = vld [vmem:[%s0 + $0xa88] sm:$0xff]
    %v404 = vld [vmem:[%s0 + $0xa90] sm:$0xff]
    %v405 = vld [vmem:[%s0 + $0xa98] sm:$0xf]
    %v406 = vld [vmem:[%s0 + $0xa9c] sm:$0xff]
    %v407 = vld [vmem:[%s0 + $0xaa4] sm:$0xff]
    %v408 = vld [vmem:[%s0 + $0xaac] sm:$0xff]
    %v409 = vld [vmem:[%s0 + $0xab4] sm:$0xf]
    %v410 = vld [vmem:[%s0 + $0xab8] sm:$0xff]
    %v411 = vld [vmem:[%s0 + $0xac0] sm:$0xff]
    %v412 = vld [vmem:[%s0 + $0xac8] sm:$0xff]
    %v413 = vld [vmem:[%s0 + $0xad0] sm:$0xf]
    %v414 = vld [vmem:[%s0 + $0xad4] sm:$0xff]
    %v415 = vld [vmem:[%s0 + $0xadc] sm:$0xff]
    %v416 = vld [vmem:[%s0 + $0xae4] sm:$0xff]
    %v417 = vld [vmem:[%s0 + $0xaec] sm:$0xf]
    %v418 = vld [vmem:[%s0 + $0xaf0] sm:$0xff]
    %v419 = vld [vmem:[%s0 + $0xaf8] sm:$0xff]
    %v420 = vld [vmem:[%s0 + $0xb00] sm:$0xff]
    %v421 = vld [vmem:[%s0 + $0xb08] sm:$0xf]
    %v422 = vld [vmem:[%s0 + $0xb0c] sm:$0xff]
    %v423 = vld [vmem:[%s0 + $0xb14] sm:$0xff]
    %v424 = vld [vmem:[%s0 + $0xb1c] sm:$0xff]
    %v425 = vld [vmem:[%s0 + $0xb24] sm:$0xf]
    %v426 = vld [vmem:[%s0 + $0xb28] sm:$0xff]
    %v427 = vld [vmem:[%s0 + $0xb30] sm:$0xff]
    %v428 = vld [vmem:[%s0 + $0xb38] sm:$0xff]
    %v429 = vld [vmem:[%s0 + $0xb40] sm:$0xf]
    %v430 = vld [vmem:[%s0 + $0xb44] sm:$0xff]
    %v431 = vld [vmem:[%s0 + $0xb4c] sm:$0xff]
    %v432 = vld [vmem:[%s0 + $0xb54] sm:$0xff]
    %v433 = vld [vmem:[%s0 + $0xb5c] sm:$0xf]
    %v434 = vld [vmem:[%s0 + $0xb60] sm:$0xff]
    %v435 = vld [vmem:[%s0 + $0xb68] sm:$0xff]
    %v436 = vld [vmem:[%s0 + $0xb70] sm:$0xff]
    %v437 = vld [vmem:[%s0 + $0xb78] sm:$0xf]
    %v438 = vld [vmem:[%s0 + $0xb7c] sm:$0xff]
    %v439 = vld [vmem:[%s0 + $0xb84] sm:$0xff]
    %v440 = vld [vmem:[%s0 + $0xb8c] sm:$0xff]
    %v441 = vld [vmem:[%s0 + $0xb94] sm:$0xf]
    %v442 = vld [vmem:[%s0 + $0xb98] sm:$0xff]
    %v443 = vld [vmem:[%s0 + $0xba0] sm:$0xff]
    %v444 = vld [vmem:[%s0 + $0xba8] sm:$0xff]
    %v445 = vld [vmem:[%s0 + $0xbb0] sm:$0xf]
    %v446 = vld [vmem:[%s0 + $0xbb4] sm:$0xff]
    %v447 = vld [vmem:[%s0 + $0xbbc] sm:$0xff]
    %v448 = vld [vmem:[%s0 + $0xbc4] sm:$0xff]
    %v449 = vld [vmem:[%s0 + $0xbcc] sm:$0xf]
    %v450 = vld [vmem:[%s0 + $0xbd0] sm:$0xff]
    %v451 = vld [vmem:[%s0 + $0xbd8] sm:$0xff]
    %v452 = vld [vmem:[%s0 + $0xbe0] sm:$0xff]
    %v453 = vld [vmem:[%s0 + $0xbe8] sm:$0xf]
    %v454 = vld [vmem:[%s0 + $0xbec] sm:$0xff]
    %v455 = vld [vmem:[%s0 + $0xbf4] sm:$0xff]
    %v456 = vld [vmem:[%s0 + $0xbfc] sm:$0xff]
    %v457 = vld [vmem:[%s0 + $0xc04] sm:$0xf]
    %v458 = vld [vmem:[%s0 + $0xc08] sm:$0xff]
    %v459 = vld [vmem:[%s0 + $0xc10] sm:$0xff]
    %v460 = vld [vmem:[%s0 + $0xc18] sm:$0xff]
    %v461 = vld [vmem:[%s0 + $0xc20] sm:$0xf]
    %v462 = vld [vmem:[%s0 + $0xc24] sm:$0xff]
    %v463 = vld [vmem:[%s0 + $0xc2c] sm:$0xff]
    %v464 = vld [vmem:[%s0 + $0xc34] sm:$0xff]
    %v465 = vld [vmem:[%s0 + $0xc3c] sm:$0xf]
    %v466 = vld [vmem:[%s0 + $0xc40] sm:$0xff]
    %v467 = vld [vmem:[%s0 + $0xc48] sm:$0xff]
    %v468 = vld [vmem:[%s0 + $0xc50] sm:$0xff]
    %v469 = vld [vmem:[%s0 + $0xc58] sm:$0xf]
    %v470 = vld [vmem:[%s0 + $0xc5c] sm:$0xff]
    %v471 = vld [vmem:[%s0 + $0xc64] sm:$0xff]
    %v472 = vld [vmem:[%s0 + $0xc6c] sm:$0xff]
    %v473 = vld [vmem:[%s0 + $0xc74] sm:$0xf]
    %v474 = vld [vmem:[%s0 + $0xc78] sm:$0xff]
    %v475 = vld [vmem:[%s0 + $0xc80] sm:$0xff]
    %v476 = vld [vmem:[%s0 + $0xc88] sm:$0xff]
    %v477 = vld [vmem:[%s0 + $0xc90] sm:$0xf]
    %v478 = vld [vmem:[%s0 + $0xc94] sm:$0xff]
    %v479 = vld [vmem:[%s0 + $0xc9c] sm:$0xff]
    %v480 = vld [vmem:[%s0 + $0xca4] sm:$0xff]
    %v481 = vld [vmem:[%s0 + $0xcac] sm:$0xf]
    %v482 = vld [vmem:[%s0 + $0xcb0] sm:$0xff]
    %v483 = vld [vmem:[%s0 + $0xcb8] sm:$0xff]
    %v484 = vld [vmem:[%s0 + $0xcc0] sm:$0xff]
    %v485 = vld [vmem:[%s0 + $0xcc8] sm:$0xf]
    %v486 = vld [vmem:[%s0 + $0xccc] sm:$0xff]
    %v487 = vld [vmem:[%s0 + $0xcd4] sm:$0xff]
    %v488 = vld [vmem:[%s0 + $0xcdc] sm:$0xff]
    %v489 = vld [vmem:[%s0 + $0xce4] sm:$0xf]
    %v490 = vld [vmem:[%s0 + $0xce8] sm:$0xff]
    %v491 = vld [vmem:[%s0 + $0xcf0] sm:$0xff]
    %v492 = vld [vmem:[%s0 + $0xcf8] sm:$0xff]
    %v493 = vld [vmem:[%s0 + $0xd00] sm:$0xf]
    %v494 = vld [vmem:[%s0 + $0xd04] sm:$0xff]
    %v495 = vld [vmem:[%s0 + $0xd0c] sm:$0xff]
    %v496 = vld [vmem:[%s0 + $0xd14] sm:$0xff]
    %v497 = vld [vmem:[%s0 + $0xd1c] sm:$0xf]
    %v498 = vld [vmem:[%s0 + $0xd20] sm:$0xff]
    %v499 = vld [vmem:[%s0 + $0xd28] sm:$0xff]
    %v500 = vld [vmem:[%s0 + $0xd30] sm:$0xff]
    %v501 = vld [vmem:[%s0 + $0xd38] sm:$0xf]
    %v502 = vld [vmem:[%s0 + $0xd3c] sm:$0xff]
    %v503 = vld [vmem:[%s0 + $0xd44] sm:$0xff]
    %v504 = vld [vmem:[%s0 + $0xd4c] sm:$0xff]
    %v505 = vld [vmem:[%s0 + $0xd54] sm:$0xf]
    %v506 = vld [vmem:[%s0 + $0xd58] sm:$0xff]
    %v507 = vld [vmem:[%s0 + $0xd60] sm:$0xff]
    %v508 = vld [vmem:[%s0 + $0xd68] sm:$0xff]
    %v509 = vld [vmem:[%s0 + $0xd70] sm:$0xf]
    %v510 = vld [vmem:[%s0 + $0xd74] sm:$0xff]
    %v511 = vld [vmem:[%s0 + $0xd7c] sm:$0xff]
    %v512 = vld [vmem:[%s0 + $0xd84] sm:$0xff]
    %v513 = vld [vmem:[%s0 + $0xd8c] sm:$0xf]
    %v514 = vld [vmem:[%s0 + $0xd90] sm:$0xff]
    %v515 = vld [vmem:[%s0 + $0xd98] sm:$0xff]
    %v516 = vld [vmem:[%s0 + $0xda0] sm:$0xff]
    %v517 = vld [vmem:[%s0 + $0xda8] sm:$0xf]
    %v518 = vld [vmem:[%s0 + $0xdac] sm:$0xff]
    %v519 = vld [vmem:[%s0 + $0xdb4] sm:$0xff]
    %v520 = vld [vmem:[%s0 + $0xdbc] sm:$0xff]
    %v521 = vld [vmem:[%s0 + $0xdc4] sm:$0xf]
    %v522 = vld [vmem:[%s0 + $0xdc8] sm:$0xff]
    %v523 = vld [vmem:[%s0 + $0xdd0] sm:$0xff]
    %v524 = vld [vmem:[%s0 + $0xdd8] sm:$0xff]
    %v525 = vld [vmem:[%s0 + $0xde0] sm:$0xf]
    %v526 = vld [vmem:[%s0 + $0xde4] sm:$0xff]
    %v527 = vld [vmem:[%s0 + $0xdec] sm:$0xff]
    %v528 = vld [vmem:[%s0 + $0xdf4] sm:$0xff]
    %v529 = vld [vmem:[%s0 + $0xdfc] sm:$0xf]
    %v530 = vunpack.c.l.bf16 %v18
    %v531 = vunpack.c.h.bf16 %v18
    %v532 = vunpack.c.l.bf16 %v19
    %v533 = vunpack.c.h.bf16 %v19
    %v534 = vunpack.c.l.bf16 %v20
    %v535 = vunpack.c.h.bf16 %v20
    %v536 = vunpack.c.l.bf16 %v21
    %v537 = vunpack.c.l.bf16 %v22
    %v538 = vunpack.c.h.bf16 %v22
    %v539 = vunpack.c.l.bf16 %v23
    %v540 = vunpack.c.h.bf16 %v23
    %v541 = vunpack.c.l.bf16 %v24
    %v542 = vunpack.c.h.bf16 %v24
    %v543 = vunpack.c.l.bf16 %v25
    %v544 = vunpack.c.l.bf16 %v26
    %v545 = vunpack.c.h.bf16 %v26
    %v546 = vunpack.c.l.bf16 %v27
    %v547 = vunpack.c.h.bf16 %v27
    %v548 = vunpack.c.l.bf16 %v28
    %v549 = vunpack.c.h.bf16 %v28
    %v550 = vunpack.c.l.bf16 %v29
    %v551 = vunpack.c.l.bf16 %v30
    %v552 = vunpack.c.h.bf16 %v30
    %v553 = vunpack.c.l.bf16 %v31
    %v554 = vunpack.c.h.bf16 %v31
    %v555 = vunpack.c.l.bf16 %v32
    %v556 = vunpack.c.h.bf16 %v32
    %v557 = vunpack.c.l.bf16 %v33
    %v558 = vunpack.c.l.bf16 %v34
    %v559 = vunpack.c.h.bf16 %v34
    %v560 = vunpack.c.l.bf16 %v35
    %v561 = vunpack.c.h.bf16 %v35
    %v562 = vunpack.c.l.bf16 %v36
    %v563 = vunpack.c.h.bf16 %v36
    %v564 = vunpack.c.l.bf16 %v37
    %v565 = vunpack.c.l.bf16 %v38
    %v566 = vunpack.c.h.bf16 %v38
    %v567 = vunpack.c.l.bf16 %v39
    %v568 = vunpack.c.h.bf16 %v39
    %v569 = vunpack.c.l.bf16 %v40
    %v570 = vunpack.c.h.bf16 %v40
    %v571 = vunpack.c.l.bf16 %v41
    %v572 = vunpack.c.l.bf16 %v42
    %v573 = vunpack.c.h.bf16 %v42
    %v574 = vunpack.c.l.bf16 %v43
    %v575 = vunpack.c.h.bf16 %v43
    %v576 = vunpack.c.l.bf16 %v44
    %v577 = vunpack.c.h.bf16 %v44
    %v578 = vunpack.c.l.bf16 %v45
    %v579 = vunpack.c.l.bf16 %v46
    %v580 = vunpack.c.h.bf16 %v46
    %v581 = vunpack.c.l.bf16 %v47
    %v582 = vunpack.c.h.bf16 %v47
    %v583 = vunpack.c.l.bf16 %v48
    %v584 = vunpack.c.h.bf16 %v48
    %v585 = vunpack.c.l.bf16 %v49
    %v586 = vunpack.c.l.bf16 %v50
    %v587 = vunpack.c.h.bf16 %v50
    %v588 = vunpack.c.l.bf16 %v51
    %v589 = vunpack.c.h.bf16 %v51
    %v590 = vunpack.c.l.bf16 %v52
    %v591 = vunpack.c.h.bf16 %v52
    %v592 = vunpack.c.l.bf16 %v53
    %v593 = vunpack.c.l.bf16 %v54
    %v594 = vunpack.c.h.bf16 %v54
    %v595 = vunpack.c.l.bf16 %v55
    %v596 = vunpack.c.h.bf16 %v55
    %v597 = vunpack.c.l.bf16 %v56
    %v598 = vunpack.c.h.bf16 %v56
    %v599 = vunpack.c.l.bf16 %v57
    %v600 = vunpack.c.l.bf16 %v58
    %v601 = vunpack.c.h.bf16 %v58
    %v602 = vunpack.c.l.bf16 %v59
    %v603 = vunpack.c.h.bf16 %v59
    %v604 = vunpack.c.l.bf16 %v60
    %v605 = vunpack.c.h.bf16 %v60
    %v606 = vunpack.c.l.bf16 %v61
    %v607 = vunpack.c.l.bf16 %v62
    %v608 = vunpack.c.h.bf16 %v62
    %v609 = vunpack.c.l.bf16 %v63
    %v610 = vunpack.c.h.bf16 %v63
    %v611 = vunpack.c.l.bf16 %v64
    %v612 = vunpack.c.h.bf16 %v64
    %v613 = vunpack.c.l.bf16 %v65
    %v614 = vunpack.c.l.bf16 %v66
    %v615 = vunpack.c.h.bf16 %v66
    %v616 = vunpack.c.l.bf16 %v67
    %v617 = vunpack.c.h.bf16 %v67
    %v618 = vunpack.c.l.bf16 %v68
    %v619 = vunpack.c.h.bf16 %v68
    %v620 = vunpack.c.l.bf16 %v69
    %v621 = vunpack.c.l.bf16 %v70
    %v622 = vunpack.c.h.bf16 %v70
    %v623 = vunpack.c.l.bf16 %v71
    %v624 = vunpack.c.h.bf16 %v71
    %v625 = vunpack.c.l.bf16 %v72
    %v626 = vunpack.c.h.bf16 %v72
    %v627 = vunpack.c.l.bf16 %v73
    %v628 = vunpack.c.l.bf16 %v74
    %v629 = vunpack.c.h.bf16 %v74
    %v630 = vunpack.c.l.bf16 %v75
    %v631 = vunpack.c.h.bf16 %v75
    %v632 = vunpack.c.l.bf16 %v76
    %v633 = vunpack.c.h.bf16 %v76
    %v634 = vunpack.c.l.bf16 %v77
    %v635 = vunpack.c.l.bf16 %v78
    %v636 = vunpack.c.h.bf16 %v78
    %v637 = vunpack.c.l.bf16 %v79
    %v638 = vunpack.c.h.bf16 %v79
    %v639 = vunpack.c.l.bf16 %v80
    %v640 = vunpack.c.h.bf16 %v80
    %v641 = vunpack.c.l.bf16 %v81
    %v642 = vunpack.c.l.bf16 %v82
    %v643 = vunpack.c.h.bf16 %v82
    %v644 = vunpack.c.l.bf16 %v83
    %v645 = vunpack.c.h.bf16 %v83
    %v646 = vunpack.c.l.bf16 %v84
    %v647 = vunpack.c.h.bf16 %v84
    %v648 = vunpack.c.l.bf16 %v85
    %v649 = vunpack.c.l.bf16 %v86
    %v650 = vunpack.c.h.bf16 %v86
    %v651 = vunpack.c.l.bf16 %v87
    %v652 = vunpack.c.h.bf16 %v87
    %v653 = vunpack.c.l.bf16 %v88
    %v654 = vunpack.c.h.bf16 %v88
    %v655 = vunpack.c.l.bf16 %v89
    %v656 = vunpack.c.l.bf16 %v90
    %v657 = vunpack.c.h.bf16 %v90
    %v658 = vunpack.c.l.bf16 %v91
    %v659 = vunpack.c.h.bf16 %v91
    %v660 = vunpack.c.l.bf16 %v92
    %v661 = vunpack.c.h.bf16 %v92
    %v662 = vunpack.c.l.bf16 %v93
    %v663 = vunpack.c.l.bf16 %v94
    %v664 = vunpack.c.h.bf16 %v94
    %v665 = vunpack.c.l.bf16 %v95
    %v666 = vunpack.c.h.bf16 %v95
    %v667 = vunpack.c.l.bf16 %v96
    %v668 = vunpack.c.h.bf16 %v96
    %v669 = vunpack.c.l.bf16 %v97
    %v670 = vunpack.c.l.bf16 %v98
    %v671 = vunpack.c.h.bf16 %v98
    %v672 = vunpack.c.l.bf16 %v99
    %v673 = vunpack.c.h.bf16 %v99
    %v674 = vunpack.c.l.bf16 %v100
    %v675 = vunpack.c.h.bf16 %v100
    %v676 = vunpack.c.l.bf16 %v101
    %v677 = vunpack.c.l.bf16 %v102
    %v678 = vunpack.c.h.bf16 %v102
    %v679 = vunpack.c.l.bf16 %v103
    %v680 = vunpack.c.h.bf16 %v103
    %v681 = vunpack.c.l.bf16 %v104
    %v682 = vunpack.c.h.bf16 %v104
    %v683 = vunpack.c.l.bf16 %v105
    %v684 = vunpack.c.l.bf16 %v106
    %v685 = vunpack.c.h.bf16 %v106
    %v686 = vunpack.c.l.bf16 %v107
    %v687 = vunpack.c.h.bf16 %v107
    %v688 = vunpack.c.l.bf16 %v108
    %v689 = vunpack.c.h.bf16 %v108
    %v690 = vunpack.c.l.bf16 %v109
    %v691 = vunpack.c.l.bf16 %v110
    %v692 = vunpack.c.h.bf16 %v110
    %v693 = vunpack.c.l.bf16 %v111
    %v694 = vunpack.c.h.bf16 %v111
    %v695 = vunpack.c.l.bf16 %v112
    %v696 = vunpack.c.h.bf16 %v112
    %v697 = vunpack.c.l.bf16 %v113
    %v698 = vunpack.c.l.bf16 %v114
    %v699 = vunpack.c.h.bf16 %v114
    %v700 = vunpack.c.l.bf16 %v115
    %v701 = vunpack.c.h.bf16 %v115
    %v702 = vunpack.c.l.bf16 %v116
    %v703 = vunpack.c.h.bf16 %v116
    %v704 = vunpack.c.l.bf16 %v117
    %v705 = vunpack.c.l.bf16 %v118
    %v706 = vunpack.c.h.bf16 %v118
    %v707 = vunpack.c.l.bf16 %v119
    %v708 = vunpack.c.h.bf16 %v119
    %v709 = vunpack.c.l.bf16 %v120
    %v710 = vunpack.c.h.bf16 %v120
    %v711 = vunpack.c.l.bf16 %v121
    %v712 = vunpack.c.l.bf16 %v122
    %v713 = vunpack.c.h.bf16 %v122
    %v714 = vunpack.c.l.bf16 %v123
    %v715 = vunpack.c.h.bf16 %v123
    %v716 = vunpack.c.l.bf16 %v124
    %v717 = vunpack.c.h.bf16 %v124
    %v718 = vunpack.c.l.bf16 %v125
    %v719 = vunpack.c.l.bf16 %v126
    %v720 = vunpack.c.h.bf16 %v126
    %v721 = vunpack.c.l.bf16 %v127
    %v722 = vunpack.c.h.bf16 %v127
    %v723 = vunpack.c.l.bf16 %v128
    %v724 = vunpack.c.h.bf16 %v128
    %v725 = vunpack.c.l.bf16 %v129
    %v726 = vunpack.c.l.bf16 %v130
    %v727 = vunpack.c.h.bf16 %v130
    %v728 = vunpack.c.l.bf16 %v131
    %v729 = vunpack.c.h.bf16 %v131
    %v730 = vunpack.c.l.bf16 %v132
    %v731 = vunpack.c.h.bf16 %v132
    %v732 = vunpack.c.l.bf16 %v133
    %v733 = vunpack.c.l.bf16 %v134
    %v734 = vunpack.c.h.bf16 %v134
    %v735 = vunpack.c.l.bf16 %v135
    %v736 = vunpack.c.h.bf16 %v135
    %v737 = vunpack.c.l.bf16 %v136
    %v738 = vunpack.c.h.bf16 %v136
    %v739 = vunpack.c.l.bf16 %v137
    %v740 = vunpack.c.l.bf16 %v138
    %v741 = vunpack.c.h.bf16 %v138
    %v742 = vunpack.c.l.bf16 %v139
    %v743 = vunpack.c.h.bf16 %v139
    %v744 = vunpack.c.l.bf16 %v140
    %v745 = vunpack.c.h.bf16 %v140
    %v746 = vunpack.c.l.bf16 %v141
    %v747 = vunpack.c.l.bf16 %v142
    %v748 = vunpack.c.h.bf16 %v142
    %v749 = vunpack.c.l.bf16 %v143
    %v750 = vunpack.c.h.bf16 %v143
    %v751 = vunpack.c.l.bf16 %v144
    %v752 = vunpack.c.h.bf16 %v144
    %v753 = vunpack.c.l.bf16 %v145
    %v754 = vunpack.c.l.bf16 %v146
    %v755 = vunpack.c.h.bf16 %v146
    %v756 = vunpack.c.l.bf16 %v147
    %v757 = vunpack.c.h.bf16 %v147
    %v758 = vunpack.c.l.bf16 %v148
    %v759 = vunpack.c.h.bf16 %v148
    %v760 = vunpack.c.l.bf16 %v149
    %v761 = vunpack.c.l.bf16 %v150
    %v762 = vunpack.c.h.bf16 %v150
    %v763 = vunpack.c.l.bf16 %v151
    %v764 = vunpack.c.h.bf16 %v151
    %v765 = vunpack.c.l.bf16 %v152
    %v766 = vunpack.c.h.bf16 %v152
    %v767 = vunpack.c.l.bf16 %v153
    %v768 = vunpack.c.l.bf16 %v154
    %v769 = vunpack.c.h.bf16 %v154
    %v770 = vunpack.c.l.bf16 %v155
    %v771 = vunpack.c.h.bf16 %v155
    %v772 = vunpack.c.l.bf16 %v156
    %v773 = vunpack.c.h.bf16 %v156
    %v774 = vunpack.c.l.bf16 %v157
    %v775 = vunpack.c.l.bf16 %v158
    %v776 = vunpack.c.h.bf16 %v158
    %v777 = vunpack.c.l.bf16 %v159
    %v778 = vunpack.c.h.bf16 %v159
    %v779 = vunpack.c.l.bf16 %v160
    %v780 = vunpack.c.h.bf16 %v160
    %v781 = vunpack.c.l.bf16 %v161
    %v782 = vunpack.c.l.bf16 %v162
    %v783 = vunpack.c.h.bf16 %v162
    %v784 = vunpack.c.l.bf16 %v163
    %v785 = vunpack.c.h.bf16 %v163
    %v786 = vunpack.c.l.bf16 %v164
    %v787 = vunpack.c.h.bf16 %v164
    %v788 = vunpack.c.l.bf16 %v165
    %v789 = vunpack.c.l.bf16 %v166
    %v790 = vunpack.c.h.bf16 %v166
    %v791 = vunpack.c.l.bf16 %v167
    %v792 = vunpack.c.h.bf16 %v167
    %v793 = vunpack.c.l.bf16 %v168
    %v794 = vunpack.c.h.bf16 %v168
    %v795 = vunpack.c.l.bf16 %v169
    %v796 = vunpack.c.l.bf16 %v170
    %v797 = vunpack.c.h.bf16 %v170
    %v798 = vunpack.c.l.bf16 %v171
    %v799 = vunpack.c.h.bf16 %v171
    %v800 = vunpack.c.l.bf16 %v172
    %v801 = vunpack.c.h.bf16 %v172
    %v802 = vunpack.c.l.bf16 %v173
    %v803 = vunpack.c.l.bf16 %v174
    %v804 = vunpack.c.h.bf16 %v174
    %v805 = vunpack.c.l.bf16 %v175
    %v806 = vunpack.c.h.bf16 %v175
    %v807 = vunpack.c.l.bf16 %v176
    %v808 = vunpack.c.h.bf16 %v176
    %v809 = vunpack.c.l.bf16 %v177
    %v810 = vunpack.c.l.bf16 %v178
    %v811 = vunpack.c.h.bf16 %v178
    %v812 = vunpack.c.l.bf16 %v179
    %v813 = vunpack.c.h.bf16 %v179
    %v814 = vunpack.c.l.bf16 %v180
    %v815 = vunpack.c.h.bf16 %v180
    %v816 = vunpack.c.l.bf16 %v181
    %v817 = vunpack.c.l.bf16 %v182
    %v818 = vunpack.c.h.bf16 %v182
    %v819 = vunpack.c.l.bf16 %v183
    %v820 = vunpack.c.h.bf16 %v183
    %v821 = vunpack.c.l.bf16 %v184
    %v822 = vunpack.c.h.bf16 %v184
    %v823 = vunpack.c.l.bf16 %v185
    %v824 = vunpack.c.l.bf16 %v186
    %v825 = vunpack.c.h.bf16 %v186
    %v826 = vunpack.c.l.bf16 %v187
    %v827 = vunpack.c.h.bf16 %v187
    %v828 = vunpack.c.l.bf16 %v188
    %v829 = vunpack.c.h.bf16 %v188
    %v830 = vunpack.c.l.bf16 %v189
    %v831 = vunpack.c.l.bf16 %v190
    %v832 = vunpack.c.h.bf16 %v190
    %v833 = vunpack.c.l.bf16 %v191
    %v834 = vunpack.c.h.bf16 %v191
    %v835 = vunpack.c.l.bf16 %v192
    %v836 = vunpack.c.h.bf16 %v192
    %v837 = vunpack.c.l.bf16 %v193
    %v838 = vunpack.c.l.bf16 %v194
    %v839 = vunpack.c.h.bf16 %v194
    %v840 = vunpack.c.l.bf16 %v195
    %v841 = vunpack.c.h.bf16 %v195
    %v842 = vunpack.c.l.bf16 %v196
    %v843 = vunpack.c.h.bf16 %v196
    %v844 = vunpack.c.l.bf16 %v197
    %v845 = vunpack.c.l.bf16 %v198
    %v846 = vunpack.c.h.bf16 %v198
    %v847 = vunpack.c.l.bf16 %v199
    %v848 = vunpack.c.h.bf16 %v199
    %v849 = vunpack.c.l.bf16 %v200
    %v850 = vunpack.c.h.bf16 %v200
    %v851 = vunpack.c.l.bf16 %v201
    %v852 = vunpack.c.l.bf16 %v202
    %v853 = vunpack.c.h.bf16 %v202
    %v854 = vunpack.c.l.bf16 %v203
    %v855 = vunpack.c.h.bf16 %v203
    %v856 = vunpack.c.l.bf16 %v204
    %v857 = vunpack.c.h.bf16 %v204
    %v858 = vunpack.c.l.bf16 %v205
    %v859 = vunpack.c.l.bf16 %v206
    %v860 = vunpack.c.h.bf16 %v206
    %v861 = vunpack.c.l.bf16 %v207
    %v862 = vunpack.c.h.bf16 %v207
    %v863 = vunpack.c.l.bf16 %v208
    %v864 = vunpack.c.h.bf16 %v208
    %v865 = vunpack.c.l.bf16 %v209
    %v866 = vunpack.c.l.bf16 %v210
    %v867 = vunpack.c.h.bf16 %v210
    %v868 = vunpack.c.l.bf16 %v211
    %v869 = vunpack.c.h.bf16 %v211
    %v870 = vunpack.c.l.bf16 %v212
    %v871 = vunpack.c.h.bf16 %v212
    %v872 = vunpack.c.l.bf16 %v213
    %v873 = vunpack.c.l.bf16 %v214
    %v874 = vunpack.c.h.bf16 %v214
    %v875 = vunpack.c.l.bf16 %v215
    %v876 = vunpack.c.h.bf16 %v215
    %v877 = vunpack.c.l.bf16 %v216
    %v878 = vunpack.c.h.bf16 %v216
    %v879 = vunpack.c.l.bf16 %v217
    %v880 = vunpack.c.l.bf16 %v218
    %v881 = vunpack.c.h.bf16 %v218
    %v882 = vunpack.c.l.bf16 %v219
    %v883 = vunpack.c.h.bf16 %v219
    %v884 = vunpack.c.l.bf16 %v220
    %v885 = vunpack.c.h.bf16 %v220
    %v886 = vunpack.c.l.bf16 %v221
    %v887 = vunpack.c.l.bf16 %v222
    %v888 = vunpack.c.h.bf16 %v222
    %v889 = vunpack.c.l.bf16 %v223
    %v890 = vunpack.c.h.bf16 %v223
    %v891 = vunpack.c.l.bf16 %v224
    %v892 = vunpack.c.h.bf16 %v224
    %v893 = vunpack.c.l.bf16 %v225
    %v894 = vunpack.c.l.bf16 %v226
    %v895 = vunpack.c.h.bf16 %v226
    %v896 = vunpack.c.l.bf16 %v227
    %v897 = vunpack.c.h.bf16 %v227
    %v898 = vunpack.c.l.bf16 %v228
    %v899 = vunpack.c.h.bf16 %v228
    %v900 = vunpack.c.l.bf16 %v229
    %v901 = vunpack.c.l.bf16 %v230
    %v902 = vunpack.c.h.bf16 %v230
    %v903 = vunpack.c.l.bf16 %v231
    %v904 = vunpack.c.h.bf16 %v231
    %v905 = vunpack.c.l.bf16 %v232
    %v906 = vunpack.c.h.bf16 %v232
    %v907 = vunpack.c.l.bf16 %v233
    %v908 = vunpack.c.l.bf16 %v234
    %v909 = vunpack.c.h.bf16 %v234
    %v910 = vunpack.c.l.bf16 %v235
    %v911 = vunpack.c.h.bf16 %v235
    %v912 = vunpack.c.l.bf16 %v236
    %v913 = vunpack.c.h.bf16 %v236
    %v914 = vunpack.c.l.bf16 %v237
    %v915 = vunpack.c.l.bf16 %v238
    %v916 = vunpack.c.h.bf16 %v238
    %v917 = vunpack.c.l.bf16 %v239
    %v918 = vunpack.c.h.bf16 %v239
    %v919 = vunpack.c.l.bf16 %v240
    %v920 = vunpack.c.h.bf16 %v240
    %v921 = vunpack.c.l.bf16 %v241
    %v922 = vunpack.c.l.bf16 %v242
    %v923 = vunpack.c.h.bf16 %v242
    %v924 = vunpack.c.l.bf16 %v243
    %v925 = vunpack.c.h.bf16 %v243
    %v926 = vunpack.c.l.bf16 %v244
    %v927 = vunpack.c.h.bf16 %v244
    %v928 = vunpack.c.l.bf16 %v245
    %v929 = vunpack.c.l.bf16 %v246
    %v930 = vunpack.c.h.bf16 %v246
    %v931 = vunpack.c.l.bf16 %v247
    %v932 = vunpack.c.h.bf16 %v247
    %v933 = vunpack.c.l.bf16 %v248
    %v934 = vunpack.c.h.bf16 %v248
    %v935 = vunpack.c.l.bf16 %v249
    %v936 = vunpack.c.l.bf16 %v250
    %v937 = vunpack.c.h.bf16 %v250
    %v938 = vunpack.c.l.bf16 %v251
    %v939 = vunpack.c.h.bf16 %v251
    %v940 = vunpack.c.l.bf16 %v252
    %v941 = vunpack.c.h.bf16 %v252
    %v942 = vunpack.c.l.bf16 %v253
    %v943 = vunpack.c.l.bf16 %v254
    %v944 = vunpack.c.h.bf16 %v254
    %v945 = vunpack.c.l.bf16 %v255
    %v946 = vunpack.c.h.bf16 %v255
    %v947 = vunpack.c.l.bf16 %v256
    %v948 = vunpack.c.h.bf16 %v256
    %v949 = vunpack.c.l.bf16 %v257
    %v950 = vunpack.c.l.bf16 %v258
    %v951 = vunpack.c.h.bf16 %v258
    %v952 = vunpack.c.l.bf16 %v259
    %v953 = vunpack.c.h.bf16 %v259
    %v954 = vunpack.c.l.bf16 %v260
    %v955 = vunpack.c.h.bf16 %v260
    %v956 = vunpack.c.l.bf16 %v261
    %v957 = vunpack.c.l.bf16 %v262
    %v958 = vunpack.c.h.bf16 %v262
    %v959 = vunpack.c.l.bf16 %v263
    %v960 = vunpack.c.h.bf16 %v263
    %v961 = vunpack.c.l.bf16 %v264
    %v962 = vunpack.c.h.bf16 %v264
    %v963 = vunpack.c.l.bf16 %v265
    %v964 = vunpack.c.l.bf16 %v266
    %v965 = vunpack.c.h.bf16 %v266
    %v966 = vunpack.c.l.bf16 %v267
    %v967 = vunpack.c.h.bf16 %v267
    %v968 = vunpack.c.l.bf16 %v268
    %v969 = vunpack.c.h.bf16 %v268
    %v970 = vunpack.c.l.bf16 %v269
    %v971 = vunpack.c.l.bf16 %v270
    %v972 = vunpack.c.h.bf16 %v270
    %v973 = vunpack.c.l.bf16 %v271
    %v974 = vunpack.c.h.bf16 %v271
    %v975 = vunpack.c.l.bf16 %v272
    %v976 = vunpack.c.h.bf16 %v272
    %v977 = vunpack.c.l.bf16 %v273
    %v978 = vunpack.c.l.bf16 %v274
    %v979 = vunpack.c.h.bf16 %v274
    %v980 = vunpack.c.l.bf16 %v275
    %v981 = vunpack.c.h.bf16 %v275
    %v982 = vunpack.c.l.bf16 %v276
    %v983 = vunpack.c.h.bf16 %v276
    %v984 = vunpack.c.l.bf16 %v277
    %v985 = vunpack.c.l.bf16 %v278
    %v986 = vunpack.c.h.bf16 %v278
    %v987 = vunpack.c.l.bf16 %v279
    %v988 = vunpack.c.h.bf16 %v279
    %v989 = vunpack.c.l.bf16 %v280
    %v990 = vunpack.c.h.bf16 %v280
    %v991 = vunpack.c.l.bf16 %v281
    %v992 = vunpack.c.l.bf16 %v282
    %v993 = vunpack.c.h.bf16 %v282
    %v994 = vunpack.c.l.bf16 %v283
    %v995 = vunpack.c.h.bf16 %v283
    %v996 = vunpack.c.l.bf16 %v284
    %v997 = vunpack.c.h.bf16 %v284
    %v998 = vunpack.c.l.bf16 %v285
    %v999 = vunpack.c.l.bf16 %v286
    %v1000 = vunpack.c.h.bf16 %v286
    %v1001 = vunpack.c.l.bf16 %v287
    %v1002 = vunpack.c.h.bf16 %v287
    %v1003 = vunpack.c.l.bf16 %v288
    %v1004 = vunpack.c.h.bf16 %v288
    %v1005 = vunpack.c.l.bf16 %v289
    %v1006 = vunpack.c.l.bf16 %v290
    %v1007 = vunpack.c.h.bf16 %v290
    %v1008 = vunpack.c.l.bf16 %v291
    %v1009 = vunpack.c.h.bf16 %v291
    %v1010 = vunpack.c.l.bf16 %v292
    %v1011 = vunpack.c.h.bf16 %v292
    %v1012 = vunpack.c.l.bf16 %v293
    %v1013 = vunpack.c.l.bf16 %v294
    %v1014 = vunpack.c.h.bf16 %v294
    %v1015 = vunpack.c.l.bf16 %v295
    %v1016 = vunpack.c.h.bf16 %v295
    %v1017 = vunpack.c.l.bf16 %v296
    %v1018 = vunpack.c.h.bf16 %v296
    %v1019 = vunpack.c.l.bf16 %v297
    %v1020 = vunpack.c.l.bf16 %v298
    %v1021 = vunpack.c.h.bf16 %v298
    %v1022 = vunpack.c.l.bf16 %v299
    %v1023 = vunpack.c.h.bf16 %v299
    %v1024 = vunpack.c.l.bf16 %v300
    %v1025 = vunpack.c.h.bf16 %v300
    %v1026 = vunpack.c.l.bf16 %v301
    %v1027 = vunpack.c.l.bf16 %v302
    %v1028 = vunpack.c.h.bf16 %v302
    %v1029 = vunpack.c.l.bf16 %v303
    %v1030 = vunpack.c.h.bf16 %v303
    %v1031 = vunpack.c.l.bf16 %v304
    %v1032 = vunpack.c.h.bf16 %v304
    %v1033 = vunpack.c.l.bf16 %v305
    %v1034 = vunpack.c.l.bf16 %v306
    %v1035 = vunpack.c.h.bf16 %v306
    %v1036 = vunpack.c.l.bf16 %v307
    %v1037 = vunpack.c.h.bf16 %v307
    %v1038 = vunpack.c.l.bf16 %v308
    %v1039 = vunpack.c.h.bf16 %v308
    %v1040 = vunpack.c.l.bf16 %v309
    %v1041 = vunpack.c.l.bf16 %v310
    %v1042 = vunpack.c.h.bf16 %v310
    %v1043 = vunpack.c.l.bf16 %v311
    %v1044 = vunpack.c.h.bf16 %v311
    %v1045 = vunpack.c.l.bf16 %v312
    %v1046 = vunpack.c.h.bf16 %v312
    %v1047 = vunpack.c.l.bf16 %v313
    %v1048 = vunpack.c.l.bf16 %v314
    %v1049 = vunpack.c.h.bf16 %v314
    %v1050 = vunpack.c.l.bf16 %v315
    %v1051 = vunpack.c.h.bf16 %v315
    %v1052 = vunpack.c.l.bf16 %v316
    %v1053 = vunpack.c.h.bf16 %v316
    %v1054 = vunpack.c.l.bf16 %v317
    %v1055 = vunpack.c.l.bf16 %v318
    %v1056 = vunpack.c.h.bf16 %v318
    %v1057 = vunpack.c.l.bf16 %v319
    %v1058 = vunpack.c.h.bf16 %v319
    %v1059 = vunpack.c.l.bf16 %v320
    %v1060 = vunpack.c.h.bf16 %v320
    %v1061 = vunpack.c.l.bf16 %v321
    %v1062 = vunpack.c.l.bf16 %v322
    %v1063 = vunpack.c.h.bf16 %v322
    %v1064 = vunpack.c.l.bf16 %v323
    %v1065 = vunpack.c.h.bf16 %v323
    %v1066 = vunpack.c.l.bf16 %v324
    %v1067 = vunpack.c.h.bf16 %v324
    %v1068 = vunpack.c.l.bf16 %v325
    %v1069 = vunpack.c.l.bf16 %v326
    %v1070 = vunpack.c.h.bf16 %v326
    %v1071 = vunpack.c.l.bf16 %v327
    %v1072 = vunpack.c.h.bf16 %v327
    %v1073 = vunpack.c.l.bf16 %v328
    %v1074 = vunpack.c.h.bf16 %v328
    %v1075 = vunpack.c.l.bf16 %v329
    %v1076 = vunpack.c.l.bf16 %v330
    %v1077 = vunpack.c.h.bf16 %v330
    %v1078 = vunpack.c.l.bf16 %v331
    %v1079 = vunpack.c.h.bf16 %v331
    %v1080 = vunpack.c.l.bf16 %v332
    %v1081 = vunpack.c.h.bf16 %v332
    %v1082 = vunpack.c.l.bf16 %v333
    %v1083 = vunpack.c.l.bf16 %v334
    %v1084 = vunpack.c.h.bf16 %v334
    %v1085 = vunpack.c.l.bf16 %v335
    %v1086 = vunpack.c.h.bf16 %v335
    %v1087 = vunpack.c.l.bf16 %v336
    %v1088 = vunpack.c.h.bf16 %v336
    %v1089 = vunpack.c.l.bf16 %v337
    %v1090 = vunpack.c.l.bf16 %v338
    %v1091 = vunpack.c.h.bf16 %v338
    %v1092 = vunpack.c.l.bf16 %v339
    %v1093 = vunpack.c.h.bf16 %v339
    %v1094 = vunpack.c.l.bf16 %v340
    %v1095 = vunpack.c.h.bf16 %v340
    %v1096 = vunpack.c.l.bf16 %v341
    %v1097 = vunpack.c.l.bf16 %v342
    %v1098 = vunpack.c.h.bf16 %v342
    %v1099 = vunpack.c.l.bf16 %v343
    %v1100 = vunpack.c.h.bf16 %v343
    %v1101 = vunpack.c.l.bf16 %v344
    %v1102 = vunpack.c.h.bf16 %v344
    %v1103 = vunpack.c.l.bf16 %v345
    %v1104 = vunpack.c.l.bf16 %v346
    %v1105 = vunpack.c.h.bf16 %v346
    %v1106 = vunpack.c.l.bf16 %v347
    %v1107 = vunpack.c.h.bf16 %v347
    %v1108 = vunpack.c.l.bf16 %v348
    %v1109 = vunpack.c.h.bf16 %v348
    %v1110 = vunpack.c.l.bf16 %v349
    %v1111 = vunpack.c.l.bf16 %v350
    %v1112 = vunpack.c.h.bf16 %v350
    %v1113 = vunpack.c.l.bf16 %v351
    %v1114 = vunpack.c.h.bf16 %v351
    %v1115 = vunpack.c.l.bf16 %v352
    %v1116 = vunpack.c.h.bf16 %v352
    %v1117 = vunpack.c.l.bf16 %v353
    %v1118 = vunpack.c.l.bf16 %v354
    %v1119 = vunpack.c.h.bf16 %v354
    %v1120 = vunpack.c.l.bf16 %v355
    %v1121 = vunpack.c.h.bf16 %v355
    %v1122 = vunpack.c.l.bf16 %v356
    %v1123 = vunpack.c.h.bf16 %v356
    %v1124 = vunpack.c.l.bf16 %v357
    %v1125 = vunpack.c.l.bf16 %v358
    %v1126 = vunpack.c.h.bf16 %v358
    %v1127 = vunpack.c.l.bf16 %v359
    %v1128 = vunpack.c.h.bf16 %v359
    %v1129 = vunpack.c.l.bf16 %v360
    %v1130 = vunpack.c.h.bf16 %v360
    %v1131 = vunpack.c.l.bf16 %v361
    %v1132 = vunpack.c.l.bf16 %v362
    %v1133 = vunpack.c.h.bf16 %v362
    %v1134 = vunpack.c.l.bf16 %v363
    %v1135 = vunpack.c.h.bf16 %v363
    %v1136 = vunpack.c.l.bf16 %v364
    %v1137 = vunpack.c.h.bf16 %v364
    %v1138 = vunpack.c.l.bf16 %v365
    %v1139 = vunpack.c.l.bf16 %v366
    %v1140 = vunpack.c.h.bf16 %v366
    %v1141 = vunpack.c.l.bf16 %v367
    %v1142 = vunpack.c.h.bf16 %v367
    %v1143 = vunpack.c.l.bf16 %v368
    %v1144 = vunpack.c.h.bf16 %v368
    %v1145 = vunpack.c.l.bf16 %v369
    %v1146 = vunpack.c.l.bf16 %v370
    %v1147 = vunpack.c.h.bf16 %v370
    %v1148 = vunpack.c.l.bf16 %v371
    %v1149 = vunpack.c.h.bf16 %v371
    %v1150 = vunpack.c.l.bf16 %v372
    %v1151 = vunpack.c.h.bf16 %v372
    %v1152 = vunpack.c.l.bf16 %v373
    %v1153 = vunpack.c.l.bf16 %v374
    %v1154 = vunpack.c.h.bf16 %v374
    %v1155 = vunpack.c.l.bf16 %v375
    %v1156 = vunpack.c.h.bf16 %v375
    %v1157 = vunpack.c.l.bf16 %v376
    %v1158 = vunpack.c.h.bf16 %v376
    %v1159 = vunpack.c.l.bf16 %v377
    %v1160 = vunpack.c.l.bf16 %v378
    %v1161 = vunpack.c.h.bf16 %v378
    %v1162 = vunpack.c.l.bf16 %v379
    %v1163 = vunpack.c.h.bf16 %v379
    %v1164 = vunpack.c.l.bf16 %v380
    %v1165 = vunpack.c.h.bf16 %v380
    %v1166 = vunpack.c.l.bf16 %v381
    %v1167 = vunpack.c.l.bf16 %v382
    %v1168 = vunpack.c.h.bf16 %v382
    %v1169 = vunpack.c.l.bf16 %v383
    %v1170 = vunpack.c.h.bf16 %v383
    %v1171 = vunpack.c.l.bf16 %v384
    %v1172 = vunpack.c.h.bf16 %v384
    %v1173 = vunpack.c.l.bf16 %v385
    %v1174 = vunpack.c.l.bf16 %v386
    %v1175 = vunpack.c.h.bf16 %v386
    %v1176 = vunpack.c.l.bf16 %v387
    %v1177 = vunpack.c.h.bf16 %v387
    %v1178 = vunpack.c.l.bf16 %v388
    %v1179 = vunpack.c.h.bf16 %v388
    %v1180 = vunpack.c.l.bf16 %v389
    %v1181 = vunpack.c.l.bf16 %v390
    %v1182 = vunpack.c.h.bf16 %v390
    %v1183 = vunpack.c.l.bf16 %v391
    %v1184 = vunpack.c.h.bf16 %v391
    %v1185 = vunpack.c.l.bf16 %v392
    %v1186 = vunpack.c.h.bf16 %v392
    %v1187 = vunpack.c.l.bf16 %v393
    %v1188 = vunpack.c.l.bf16 %v394
    %v1189 = vunpack.c.h.bf16 %v394
    %v1190 = vunpack.c.l.bf16 %v395
    %v1191 = vunpack.c.h.bf16 %v395
    %v1192 = vunpack.c.l.bf16 %v396
    %v1193 = vunpack.c.h.bf16 %v396
    %v1194 = vunpack.c.l.bf16 %v397
    %v1195 = vunpack.c.l.bf16 %v398
    %v1196 = vunpack.c.h.bf16 %v398
    %v1197 = vunpack.c.l.bf16 %v399
    %v1198 = vunpack.c.h.bf16 %v399
    %v1199 = vunpack.c.l.bf16 %v400
    %v1200 = vunpack.c.h.bf16 %v400
    %v1201 = vunpack.c.l.bf16 %v401
    %v1202 = vunpack.c.l.bf16 %v402
    %v1203 = vunpack.c.h.bf16 %v402
    %v1204 = vunpack.c.l.bf16 %v403
    %v1205 = vunpack.c.h.bf16 %v403
    %v1206 = vunpack.c.l.bf16 %v404
    %v1207 = vunpack.c.h.bf16 %v404
    %v1208 = vunpack.c.l.bf16 %v405
    %v1209 = vunpack.c.l.bf16 %v406
    %v1210 = vunpack.c.h.bf16 %v406
    %v1211 = vunpack.c.l.bf16 %v407
    %v1212 = vunpack.c.h.bf16 %v407
    %v1213 = vunpack.c.l.bf16 %v408
    %v1214 = vunpack.c.h.bf16 %v408
    %v1215 = vunpack.c.l.bf16 %v409
    %v1216 = vunpack.c.l.bf16 %v410
    %v1217 = vunpack.c.h.bf16 %v410
    %v1218 = vunpack.c.l.bf16 %v411
    %v1219 = vunpack.c.h.bf16 %v411
    %v1220 = vunpack.c.l.bf16 %v412
    %v1221 = vunpack.c.h.bf16 %v412
    %v1222 = vunpack.c.l.bf16 %v413
    %v1223 = vunpack.c.l.bf16 %v414
    %v1224 = vunpack.c.h.bf16 %v414
    %v1225 = vunpack.c.l.bf16 %v415
    %v1226 = vunpack.c.h.bf16 %v415
    %v1227 = vunpack.c.l.bf16 %v416
    %v1228 = vunpack.c.h.bf16 %v416
    %v1229 = vunpack.c.l.bf16 %v417
    %v1230 = vunpack.c.l.bf16 %v418
    %v1231 = vunpack.c.h.bf16 %v418
    %v1232 = vunpack.c.l.bf16 %v419
    %v1233 = vunpack.c.h.bf16 %v419
    %v1234 = vunpack.c.l.bf16 %v420
    %v1235 = vunpack.c.h.bf16 %v420
    %v1236 = vunpack.c.l.bf16 %v421
    %v1237 = vunpack.c.l.bf16 %v422
    %v1238 = vunpack.c.h.bf16 %v422
    %v1239 = vunpack.c.l.bf16 %v423
    %v1240 = vunpack.c.h.bf16 %v423
    %v1241 = vunpack.c.l.bf16 %v424
    %v1242 = vunpack.c.h.bf16 %v424
    %v1243 = vunpack.c.l.bf16 %v425
    %v1244 = vunpack.c.l.bf16 %v426
    %v1245 = vunpack.c.h.bf16 %v426
    %v1246 = vunpack.c.l.bf16 %v427
    %v1247 = vunpack.c.h.bf16 %v427
    %v1248 = vunpack.c.l.bf16 %v428
    %v1249 = vunpack.c.h.bf16 %v428
    %v1250 = vunpack.c.l.bf16 %v429
    %v1251 = vunpack.c.l.bf16 %v430
    %v1252 = vunpack.c.h.bf16 %v430
    %v1253 = vunpack.c.l.bf16 %v431
    %v1254 = vunpack.c.h.bf16 %v431
    %v1255 = vunpack.c.l.bf16 %v432
    %v1256 = vunpack.c.h.bf16 %v432
    %v1257 = vunpack.c.l.bf16 %v433
    %v1258 = vunpack.c.l.bf16 %v434
    %v1259 = vunpack.c.h.bf16 %v434
    %v1260 = vunpack.c.l.bf16 %v435
    %v1261 = vunpack.c.h.bf16 %v435
    %v1262 = vunpack.c.l.bf16 %v436
    %v1263 = vunpack.c.h.bf16 %v436
    %v1264 = vunpack.c.l.bf16 %v437
    %v1265 = vunpack.c.l.bf16 %v438
    %v1266 = vunpack.c.h.bf16 %v438
    %v1267 = vunpack.c.l.bf16 %v439
    %v1268 = vunpack.c.h.bf16 %v439
    %v1269 = vunpack.c.l.bf16 %v440
    %v1270 = vunpack.c.h.bf16 %v440
    %v1271 = vunpack.c.l.bf16 %v441
    %v1272 = vunpack.c.l.bf16 %v442
    %v1273 = vunpack.c.h.bf16 %v442
    %v1274 = vunpack.c.l.bf16 %v443
    %v1275 = vunpack.c.h.bf16 %v443
    %v1276 = vunpack.c.l.bf16 %v444
    %v1277 = vunpack.c.h.bf16 %v444
    %v1278 = vunpack.c.l.bf16 %v445
    %v1279 = vunpack.c.l.bf16 %v446
    %v1280 = vunpack.c.h.bf16 %v446
    %v1281 = vunpack.c.l.bf16 %v447
    %v1282 = vunpack.c.h.bf16 %v447
    %v1283 = vunpack.c.l.bf16 %v448
    %v1284 = vunpack.c.h.bf16 %v448
    %v1285 = vunpack.c.l.bf16 %v449
    %v1286 = vunpack.c.l.bf16 %v450
    %v1287 = vunpack.c.h.bf16 %v450
    %v1288 = vunpack.c.l.bf16 %v451
    %v1289 = vunpack.c.h.bf16 %v451
    %v1290 = vunpack.c.l.bf16 %v452
    %v1291 = vunpack.c.h.bf16 %v452
    %v1292 = vunpack.c.l.bf16 %v453
    %v1293 = vunpack.c.l.bf16 %v454
    %v1294 = vunpack.c.h.bf16 %v454
    %v1295 = vunpack.c.l.bf16 %v455
    %v1296 = vunpack.c.h.bf16 %v455
    %v1297 = vunpack.c.l.bf16 %v456
    %v1298 = vunpack.c.h.bf16 %v456
    %v1299 = vunpack.c.l.bf16 %v457
    %v1300 = vunpack.c.l.bf16 %v458
    %v1301 = vunpack.c.h.bf16 %v458
    %v1302 = vunpack.c.l.bf16 %v459
    %v1303 = vunpack.c.h.bf16 %v459
    %v1304 = vunpack.c.l.bf16 %v460
    %v1305 = vunpack.c.h.bf16 %v460
    %v1306 = vunpack.c.l.bf16 %v461
    %v1307 = vunpack.c.l.bf16 %v462
    %v1308 = vunpack.c.h.bf16 %v462
    %v1309 = vunpack.c.l.bf16 %v463
    %v1310 = vunpack.c.h.bf16 %v463
    %v1311 = vunpack.c.l.bf16 %v464
    %v1312 = vunpack.c.h.bf16 %v464
    %v1313 = vunpack.c.l.bf16 %v465
    %v1314 = vunpack.c.l.bf16 %v466
    %v1315 = vunpack.c.h.bf16 %v466
    %v1316 = vunpack.c.l.bf16 %v467
    %v1317 = vunpack.c.h.bf16 %v467
    %v1318 = vunpack.c.l.bf16 %v468
    %v1319 = vunpack.c.h.bf16 %v468
    %v1320 = vunpack.c.l.bf16 %v469
    %v1321 = vunpack.c.l.bf16 %v470
    %v1322 = vunpack.c.h.bf16 %v470
    %v1323 = vunpack.c.l.bf16 %v471
    %v1324 = vunpack.c.h.bf16 %v471
    %v1325 = vunpack.c.l.bf16 %v472
    %v1326 = vunpack.c.h.bf16 %v472
    %v1327 = vunpack.c.l.bf16 %v473
    %v1328 = vunpack.c.l.bf16 %v474
    %v1329 = vunpack.c.h.bf16 %v474
    %v1330 = vunpack.c.l.bf16 %v475
    %v1331 = vunpack.c.h.bf16 %v475
    %v1332 = vunpack.c.l.bf16 %v476
    %v1333 = vunpack.c.h.bf16 %v476
    %v1334 = vunpack.c.l.bf16 %v477
    %v1335 = vunpack.c.l.bf16 %v478
    %v1336 = vunpack.c.h.bf16 %v478
    %v1337 = vunpack.c.l.bf16 %v479
    %v1338 = vunpack.c.h.bf16 %v479
    %v1339 = vunpack.c.l.bf16 %v480
    %v1340 = vunpack.c.h.bf16 %v480
    %v1341 = vunpack.c.l.bf16 %v481
    %v1342 = vunpack.c.l.bf16 %v482
    %v1343 = vunpack.c.h.bf16 %v482
    %v1344 = vunpack.c.l.bf16 %v483
    %v1345 = vunpack.c.h.bf16 %v483
    %v1346 = vunpack.c.l.bf16 %v484
    %v1347 = vunpack.c.h.bf16 %v484
    %v1348 = vunpack.c.l.bf16 %v485
    %v1349 = vunpack.c.l.bf16 %v486
    %v1350 = vunpack.c.h.bf16 %v486
    %v1351 = vunpack.c.l.bf16 %v487
    %v1352 = vunpack.c.h.bf16 %v487
    %v1353 = vunpack.c.l.bf16 %v488
    %v1354 = vunpack.c.h.bf16 %v488
    %v1355 = vunpack.c.l.bf16 %v489
    %v1356 = vunpack.c.l.bf16 %v490
    %v1357 = vunpack.c.h.bf16 %v490
    %v1358 = vunpack.c.l.bf16 %v491
    %v1359 = vunpack.c.h.bf16 %v491
    %v1360 = vunpack.c.l.bf16 %v492
    %v1361 = vunpack.c.h.bf16 %v492
    %v1362 = vunpack.c.l.bf16 %v493
    %v1363 = vunpack.c.l.bf16 %v494
    %v1364 = vunpack.c.h.bf16 %v494
    %v1365 = vunpack.c.l.bf16 %v495
    %v1366 = vunpack.c.h.bf16 %v495
    %v1367 = vunpack.c.l.bf16 %v496
    %v1368 = vunpack.c.h.bf16 %v496
    %v1369 = vunpack.c.l.bf16 %v497
    %v1370 = vunpack.c.l.bf16 %v498
    %v1371 = vunpack.c.h.bf16 %v498
    %v1372 = vunpack.c.l.bf16 %v499
    %v1373 = vunpack.c.h.bf16 %v499
    %v1374 = vunpack.c.l.bf16 %v500
    %v1375 = vunpack.c.h.bf16 %v500
    %v1376 = vunpack.c.l.bf16 %v501
    %v1377 = vunpack.c.l.bf16 %v502
    %v1378 = vunpack.c.h.bf16 %v502
    %v1379 = vunpack.c.l.bf16 %v503
    %v1380 = vunpack.c.h.bf16 %v503
    %v1381 = vunpack.c.l.bf16 %v504
    %v1382 = vunpack.c.h.bf16 %v504
    %v1383 = vunpack.c.l.bf16 %v505
    %v1384 = vunpack.c.l.bf16 %v506
    %v1385 = vunpack.c.h.bf16 %v506
    %v1386 = vunpack.c.l.bf16 %v507
    %v1387 = vunpack.c.h.bf16 %v507
    %v1388 = vunpack.c.l.bf16 %v508
    %v1389 = vunpack.c.h.bf16 %v508
    %v1390 = vunpack.c.l.bf16 %v509
    %v1391 = vunpack.c.l.bf16 %v510
    %v1392 = vunpack.c.h.bf16 %v510
    %v1393 = vunpack.c.l.bf16 %v511
    %v1394 = vunpack.c.h.bf16 %v511
    %v1395 = vunpack.c.l.bf16 %v512
    %v1396 = vunpack.c.h.bf16 %v512
    %v1397 = vunpack.c.l.bf16 %v513
    %v1398 = vunpack.c.l.bf16 %v514
    %v1399 = vunpack.c.h.bf16 %v514
    %v1400 = vunpack.c.l.bf16 %v515
    %v1401 = vunpack.c.h.bf16 %v515
    %v1402 = vunpack.c.l.bf16 %v516
    %v1403 = vunpack.c.h.bf16 %v516
    %v1404 = vunpack.c.l.bf16 %v517
    %v1405 = vunpack.c.l.bf16 %v518
    %v1406 = vunpack.c.h.bf16 %v518
    %v1407 = vunpack.c.l.bf16 %v519
    %v1408 = vunpack.c.h.bf16 %v519
    %v1409 = vunpack.c.l.bf16 %v520
    %v1410 = vunpack.c.h.bf16 %v520
    %v1411 = vunpack.c.l.bf16 %v521
    %v1412 = vunpack.c.l.bf16 %v522
    %v1413 = vunpack.c.h.bf16 %v522
    %v1414 = vunpack.c.l.bf16 %v523
    %v1415 = vunpack.c.h.bf16 %v523
    %v1416 = vunpack.c.l.bf16 %v524
    %v1417 = vunpack.c.h.bf16 %v524
    %v1418 = vunpack.c.l.bf16 %v525
    %v1419 = vunpack.c.l.bf16 %v526
    %v1420 = vunpack.c.h.bf16 %v526
    %v1421 = vunpack.c.l.bf16 %v527
    %v1422 = vunpack.c.h.bf16 %v527
    %v1423 = vunpack.c.l.bf16 %v528
    %v1424 = vunpack.c.h.bf16 %v528
    %v1425 = vunpack.c.l.bf16 %v529
    %v1426 = vld [vmem:[%s1] sm:$0xff]
    %v1427 = vld [vmem:[%s1 + $0x8] sm:$0xff]
    %v1428 = vld [vmem:[%s1 + $0x10] sm:$0xff]
    %v1429 = vld [vmem:[%s1 + $0x18] sm:$0xff]
    %v1430 = vld [vmem:[%s1 + $0x20] sm:$0xff]
    %v1431 = vld [vmem:[%s1 + $0x28] sm:$0xff]
    %v1432 = vld [vmem:[%s1 + $0x30] sm:$0xff]
    %v1433 = vld [vmem:[%s1 + $0x38] sm:$0xff]
    %v1434 = vld [vmem:[%s1 + $0x40] sm:$0xff]
    %v1435 = vld [vmem:[%s1 + $0x48] sm:$0xff]
    %v1436 = vld [vmem:[%s1 + $0x50] sm:$0xff]
    %v1437 = vld [vmem:[%s1 + $0x58] sm:$0xff]
    %v1438 = vld [vmem:[%s1 + $0x60] sm:$0xff]
    %v1439 = vld [vmem:[%s1 + $0x68] sm:$0xff]
    %v1440 = vld [vmem:[%s1 + $0x70] sm:$0xff]
    %v1441 = vld [vmem:[%s1 + $0x78] sm:$0xff]
    %1443 = vset.pattern.permute.xlu0 0
    %1444 = vperm.xlu0 %1443, %v1426
    %v1445 = vpop.permute.xlu0 %1444
    %1448 = vset.pattern.permute.xlu0 0
    %1449 = vperm.xlu0 %1448, %v1427
    %v1450 = vpop.permute.xlu0 %1449
    %1453 = vset.pattern.permute.xlu0 0
    %1454 = vperm.xlu0 %1453, %v1428
    %v1455 = vpop.permute.xlu0 %1454
    %1458 = vset.pattern.permute.xlu0 0
    %1459 = vperm.xlu0 %1458, %v1429
    %v1460 = vpop.permute.xlu0 %1459
    %1463 = vset.pattern.permute.xlu0 0
    %1464 = vperm.xlu0 %1463, %v1430
    %v1465 = vpop.permute.xlu0 %1464
    %1468 = vset.pattern.permute.xlu0 0
    %1469 = vperm.xlu0 %1468, %v1431
    %v1470 = vpop.permute.xlu0 %1469
    %1473 = vset.pattern.permute.xlu0 0
    %1474 = vperm.xlu0 %1473, %v1432
    %v1475 = vpop.permute.xlu0 %1474
    %1478 = vset.pattern.permute.xlu0 0
    %1479 = vperm.xlu0 %1478, %v1433
    %v1480 = vpop.permute.xlu0 %1479
    %1483 = vset.pattern.permute.xlu0 0
    %1484 = vperm.xlu0 %1483, %v1434
    %v1485 = vpop.permute.xlu0 %1484
    %1488 = vset.pattern.permute.xlu0 0
    %1489 = vperm.xlu0 %1488, %v1435
    %v1490 = vpop.permute.xlu0 %1489
    %1493 = vset.pattern.permute.xlu0 0
    %1494 = vperm.xlu0 %1493, %v1436
    %v1495 = vpop.permute.xlu0 %1494
    %1498 = vset.pattern.permute.xlu0 0
    %1499 = vperm.xlu0 %1498, %v1437
    %v1500 = vpop.permute.xlu0 %1499
    %1503 = vset.pattern.permute.xlu0 0
    %1504 = vperm.xlu0 %1503, %v1438
    %v1505 = vpop.permute.xlu0 %1504
    %1508 = vset.pattern.permute.xlu0 0
    %1509 = vperm.xlu0 %1508, %v1439
    %v1510 = vpop.permute.xlu0 %1509
    %1513 = vset.pattern.permute.xlu0 0
    %1514 = vperm.xlu0 %1513, %v1440
    %v1515 = vpop.permute.xlu0 %1514
    %1518 = vset.pattern.permute.xlu0 0
    %1519 = vperm.xlu0 %1518, %v1441
    %v1520 = vpop.permute.xlu0 %1519
    %v1522 = vmul.f32 %v530, %v1445
    %v1523 = vmul.f32 %v531, %v1445
    %v1524 = vmul.f32 %v532, %v1445
    %v1525 = vmul.f32 %v533, %v1445
    %v1526 = vmul.f32 %v534, %v1445
    %v1527 = vmul.f32 %v535, %v1445
    %v1528 = vmul.f32 %v536, %v1445
    %v1529 = vmul.f32 %v537, %v1450
    %v1530 = vmul.f32 %v538, %v1450
    %v1531 = vmul.f32 %v539, %v1450
    %v1532 = vmul.f32 %v540, %v1450
    %v1533 = vmul.f32 %v541, %v1450
    %v1534 = vmul.f32 %v542, %v1450
    %v1535 = vmul.f32 %v543, %v1450
    %v1536 = vmul.f32 %v544, %v1455
    %v1537 = vmul.f32 %v545, %v1455
    %v1538 = vmul.f32 %v546, %v1455
    %v1539 = vmul.f32 %v547, %v1455
    %v1540 = vmul.f32 %v548, %v1455
    %v1541 = vmul.f32 %v549, %v1455
    %v1542 = vmul.f32 %v550, %v1455
    %v1543 = vmul.f32 %v551, %v1460
    %v1544 = vmul.f32 %v552, %v1460
    %v1545 = vmul.f32 %v553, %v1460
    %v1546 = vmul.f32 %v554, %v1460
    %v1547 = vmul.f32 %v555, %v1460
    %v1548 = vmul.f32 %v556, %v1460
    %v1549 = vmul.f32 %v557, %v1460
    %v1550 = vmul.f32 %v558, %v1465
    %v1551 = vmul.f32 %v559, %v1465
    %v1552 = vmul.f32 %v560, %v1465
    %v1553 = vmul.f32 %v561, %v1465
    %v1554 = vmul.f32 %v562, %v1465
    %v1555 = vmul.f32 %v563, %v1465
    %v1556 = vmul.f32 %v564, %v1465
    %v1557 = vmul.f32 %v565, %v1470
    %v1558 = vmul.f32 %v566, %v1470
    %v1559 = vmul.f32 %v567, %v1470
    %v1560 = vmul.f32 %v568, %v1470
    %v1561 = vmul.f32 %v569, %v1470
    %v1562 = vmul.f32 %v570, %v1470
    %v1563 = vmul.f32 %v571, %v1470
    %v1564 = vmul.f32 %v572, %v1475
    %v1565 = vmul.f32 %v573, %v1475
    %v1566 = vmul.f32 %v574, %v1475
    %v1567 = vmul.f32 %v575, %v1475
    %v1568 = vmul.f32 %v576, %v1475
    %v1569 = vmul.f32 %v577, %v1475
    %v1570 = vmul.f32 %v578, %v1475
    %v1571 = vmul.f32 %v579, %v1480
    %v1572 = vmul.f32 %v580, %v1480
    %v1573 = vmul.f32 %v581, %v1480
    %v1574 = vmul.f32 %v582, %v1480
    %v1575 = vmul.f32 %v583, %v1480
    %v1576 = vmul.f32 %v584, %v1480
    %v1577 = vmul.f32 %v585, %v1480
    %v1578 = vmul.f32 %v586, %v1485
    %v1579 = vmul.f32 %v587, %v1485
    %v1580 = vmul.f32 %v588, %v1485
    %v1581 = vmul.f32 %v589, %v1485
    %v1582 = vmul.f32 %v590, %v1485
    %v1583 = vmul.f32 %v591, %v1485
    %v1584 = vmul.f32 %v592, %v1485
    %v1585 = vmul.f32 %v593, %v1490
    %v1586 = vmul.f32 %v594, %v1490
    %v1587 = vmul.f32 %v595, %v1490
    %v1588 = vmul.f32 %v596, %v1490
    %v1589 = vmul.f32 %v597, %v1490
    %v1590 = vmul.f32 %v598, %v1490
    %v1591 = vmul.f32 %v599, %v1490
    %v1592 = vmul.f32 %v600, %v1495
    %v1593 = vmul.f32 %v601, %v1495
    %v1594 = vmul.f32 %v602, %v1495
    %v1595 = vmul.f32 %v603, %v1495
    %v1596 = vmul.f32 %v604, %v1495
    %v1597 = vmul.f32 %v605, %v1495
    %v1598 = vmul.f32 %v606, %v1495
    %v1599 = vmul.f32 %v607, %v1500
    %v1600 = vmul.f32 %v608, %v1500
    %v1601 = vmul.f32 %v609, %v1500
    %v1602 = vmul.f32 %v610, %v1500
    %v1603 = vmul.f32 %v611, %v1500
    %v1604 = vmul.f32 %v612, %v1500
    %v1605 = vmul.f32 %v613, %v1500
    %v1606 = vmul.f32 %v614, %v1505
    %v1607 = vmul.f32 %v615, %v1505
    %v1608 = vmul.f32 %v616, %v1505
    %v1609 = vmul.f32 %v617, %v1505
    %v1610 = vmul.f32 %v618, %v1505
    %v1611 = vmul.f32 %v619, %v1505
    %v1612 = vmul.f32 %v620, %v1505
    %v1613 = vmul.f32 %v621, %v1510
    %v1614 = vmul.f32 %v622, %v1510
    %v1615 = vmul.f32 %v623, %v1510
    %v1616 = vmul.f32 %v624, %v1510
    %v1617 = vmul.f32 %v625, %v1510
    %v1618 = vmul.f32 %v626, %v1510
    %v1619 = vmul.f32 %v627, %v1510
    %v1620 = vmul.f32 %v628, %v1515
    %v1621 = vmul.f32 %v629, %v1515
    %v1622 = vmul.f32 %v630, %v1515
    %v1623 = vmul.f32 %v631, %v1515
    %v1624 = vmul.f32 %v632, %v1515
    %v1625 = vmul.f32 %v633, %v1515
    %v1626 = vmul.f32 %v634, %v1515
    %v1627 = vmul.f32 %v635, %v1520
    %v1628 = vmul.f32 %v636, %v1520
    %v1629 = vmul.f32 %v637, %v1520
    %v1630 = vmul.f32 %v638, %v1520
    %v1631 = vmul.f32 %v639, %v1520
    %v1632 = vmul.f32 %v640, %v1520
    %v1633 = vmul.f32 %v641, %v1520
    %v1634 = vmul.f32 %v642, %v1445
    %v1635 = vmul.f32 %v643, %v1445
    %v1636 = vmul.f32 %v644, %v1445
    %v1637 = vmul.f32 %v645, %v1445
    %v1638 = vmul.f32 %v646, %v1445
    %v1639 = vmul.f32 %v647, %v1445
    %v1640 = vmul.f32 %v648, %v1445
    %v1641 = vmul.f32 %v649, %v1450
    %v1642 = vmul.f32 %v650, %v1450
    %v1643 = vmul.f32 %v651, %v1450
    %v1644 = vmul.f32 %v652, %v1450
    %v1645 = vmul.f32 %v653, %v1450
    %v1646 = vmul.f32 %v654, %v1450
    %v1647 = vmul.f32 %v655, %v1450
    %v1648 = vmul.f32 %v656, %v1455
    %v1649 = vmul.f32 %v657, %v1455
    %v1650 = vmul.f32 %v658, %v1455
    %v1651 = vmul.f32 %v659, %v1455
    %v1652 = vmul.f32 %v660, %v1455
    %v1653 = vmul.f32 %v661, %v1455
    %v1654 = vmul.f32 %v662, %v1455
    %v1655 = vmul.f32 %v663, %v1460
    %v1656 = vmul.f32 %v664, %v1460
    %v1657 = vmul.f32 %v665, %v1460
    %v1658 = vmul.f32 %v666, %v1460
    %v1659 = vmul.f32 %v667, %v1460
    %v1660 = vmul.f32 %v668, %v1460
    %v1661 = vmul.f32 %v669, %v1460
    %v1662 = vmul.f32 %v670, %v1465
    %v1663 = vmul.f32 %v671, %v1465
    %v1664 = vmul.f32 %v672, %v1465
    %v1665 = vmul.f32 %v673, %v1465
    %v1666 = vmul.f32 %v674, %v1465
    %v1667 = vmul.f32 %v675, %v1465
    %v1668 = vmul.f32 %v676, %v1465
    %v1669 = vmul.f32 %v677, %v1470
    %v1670 = vmul.f32 %v678, %v1470
    %v1671 = vmul.f32 %v679, %v1470
    %v1672 = vmul.f32 %v680, %v1470
    %v1673 = vmul.f32 %v681, %v1470
    %v1674 = vmul.f32 %v682, %v1470
    %v1675 = vmul.f32 %v683, %v1470
    %v1676 = vmul.f32 %v684, %v1475
    %v1677 = vmul.f32 %v685, %v1475
    %v1678 = vmul.f32 %v686, %v1475
    %v1679 = vmul.f32 %v687, %v1475
    %v1680 = vmul.f32 %v688, %v1475
    %v1681 = vmul.f32 %v689, %v1475
    %v1682 = vmul.f32 %v690, %v1475
    %v1683 = vmul.f32 %v691, %v1480
    %v1684 = vmul.f32 %v692, %v1480
    %v1685 = vmul.f32 %v693, %v1480
    %v1686 = vmul.f32 %v694, %v1480
    %v1687 = vmul.f32 %v695, %v1480
    %v1688 = vmul.f32 %v696, %v1480
    %v1689 = vmul.f32 %v697, %v1480
    %v1690 = vmul.f32 %v698, %v1485
    %v1691 = vmul.f32 %v699, %v1485
    %v1692 = vmul.f32 %v700, %v1485
    %v1693 = vmul.f32 %v701, %v1485
    %v1694 = vmul.f32 %v702, %v1485
    %v1695 = vmul.f32 %v703, %v1485
    %v1696 = vmul.f32 %v704, %v1485
    %v1697 = vmul.f32 %v705, %v1490
    %v1698 = vmul.f32 %v706, %v1490
    %v1699 = vmul.f32 %v707, %v1490
    %v1700 = vmul.f32 %v708, %v1490
    %v1701 = vmul.f32 %v709, %v1490
    %v1702 = vmul.f32 %v710, %v1490
    %v1703 = vmul.f32 %v711, %v1490
    %v1704 = vmul.f32 %v712, %v1495
    %v1705 = vmul.f32 %v713, %v1495
    %v1706 = vmul.f32 %v714, %v1495
    %v1707 = vmul.f32 %v715, %v1495
    %v1708 = vmul.f32 %v716, %v1495
    %v1709 = vmul.f32 %v717, %v1495
    %v1710 = vmul.f32 %v718, %v1495
    %v1711 = vmul.f32 %v719, %v1500
    %v1712 = vmul.f32 %v720, %v1500
    %v1713 = vmul.f32 %v721, %v1500
    %v1714 = vmul.f32 %v722, %v1500
    %v1715 = vmul.f32 %v723, %v1500
    %v1716 = vmul.f32 %v724, %v1500
    %v1717 = vmul.f32 %v725, %v1500
    %v1718 = vmul.f32 %v726, %v1505
    %v1719 = vmul.f32 %v727, %v1505
    %v1720 = vmul.f32 %v728, %v1505
    %v1721 = vmul.f32 %v729, %v1505
    %v1722 = vmul.f32 %v730, %v1505
    %v1723 = vmul.f32 %v731, %v1505
    %v1724 = vmul.f32 %v732, %v1505
    %v1725 = vmul.f32 %v733, %v1510
    %v1726 = vmul.f32 %v734, %v1510
    %v1727 = vmul.f32 %v735, %v1510
    %v1728 = vmul.f32 %v736, %v1510
    %v1729 = vmul.f32 %v737, %v1510
    %v1730 = vmul.f32 %v738, %v1510
    %v1731 = vmul.f32 %v739, %v1510
    %v1732 = vmul.f32 %v740, %v1515
    %v1733 = vmul.f32 %v741, %v1515
    %v1734 = vmul.f32 %v742, %v1515
    %v1735 = vmul.f32 %v743, %v1515
    %v1736 = vmul.f32 %v744, %v1515
    %v1737 = vmul.f32 %v745, %v1515
    %v1738 = vmul.f32 %v746, %v1515
    %v1739 = vmul.f32 %v747, %v1520
    %v1740 = vmul.f32 %v748, %v1520
    %v1741 = vmul.f32 %v749, %v1520
    %v1742 = vmul.f32 %v750, %v1520
    %v1743 = vmul.f32 %v751, %v1520
    %v1744 = vmul.f32 %v752, %v1520
    %v1745 = vmul.f32 %v753, %v1520
    %v1746 = vmul.f32 %v754, %v1445
    %v1747 = vmul.f32 %v755, %v1445
    %v1748 = vmul.f32 %v756, %v1445
    %v1749 = vmul.f32 %v757, %v1445
    %v1750 = vmul.f32 %v758, %v1445
    %v1751 = vmul.f32 %v759, %v1445
    %v1752 = vmul.f32 %v760, %v1445
    %v1753 = vmul.f32 %v761, %v1450
    %v1754 = vmul.f32 %v762, %v1450
    %v1755 = vmul.f32 %v763, %v1450
    %v1756 = vmul.f32 %v764, %v1450
    %v1757 = vmul.f32 %v765, %v1450
    %v1758 = vmul.f32 %v766, %v1450
    %v1759 = vmul.f32 %v767, %v1450
    %v1760 = vmul.f32 %v768, %v1455
    %v1761 = vmul.f32 %v769, %v1455
    %v1762 = vmul.f32 %v770, %v1455
    %v1763 = vmul.f32 %v771, %v1455
    %v1764 = vmul.f32 %v772, %v1455
    %v1765 = vmul.f32 %v773, %v1455
    %v1766 = vmul.f32 %v774, %v1455
    %v1767 = vmul.f32 %v775, %v1460
    %v1768 = vmul.f32 %v776, %v1460
    %v1769 = vmul.f32 %v777, %v1460
    %v1770 = vmul.f32 %v778, %v1460
    %v1771 = vmul.f32 %v779, %v1460
    %v1772 = vmul.f32 %v780, %v1460
    %v1773 = vmul.f32 %v781, %v1460
    %v1774 = vmul.f32 %v782, %v1465
    %v1775 = vmul.f32 %v783, %v1465
    %v1776 = vmul.f32 %v784, %v1465
    %v1777 = vmul.f32 %v785, %v1465
    %v1778 = vmul.f32 %v786, %v1465
    %v1779 = vmul.f32 %v787, %v1465
    %v1780 = vmul.f32 %v788, %v1465
    %v1781 = vmul.f32 %v789, %v1470
    %v1782 = vmul.f32 %v790, %v1470
    %v1783 = vmul.f32 %v791, %v1470
    %v1784 = vmul.f32 %v792, %v1470
    %v1785 = vmul.f32 %v793, %v1470
    %v1786 = vmul.f32 %v794, %v1470
    %v1787 = vmul.f32 %v795, %v1470
    %v1788 = vmul.f32 %v796, %v1475
    %v1789 = vmul.f32 %v797, %v1475
    %v1790 = vmul.f32 %v798, %v1475
    %v1791 = vmul.f32 %v799, %v1475
    %v1792 = vmul.f32 %v800, %v1475
    %v1793 = vmul.f32 %v801, %v1475
    %v1794 = vmul.f32 %v802, %v1475
    %v1795 = vmul.f32 %v803, %v1480
    %v1796 = vmul.f32 %v804, %v1480
    %v1797 = vmul.f32 %v805, %v1480
    %v1798 = vmul.f32 %v806, %v1480
    %v1799 = vmul.f32 %v807, %v1480
    %v1800 = vmul.f32 %v808, %v1480
    %v1801 = vmul.f32 %v809, %v1480
    %v1802 = vmul.f32 %v810, %v1485
    %v1803 = vmul.f32 %v811, %v1485
    %v1804 = vmul.f32 %v812, %v1485
    %v1805 = vmul.f32 %v813, %v1485
    %v1806 = vmul.f32 %v814, %v1485
    %v1807 = vmul.f32 %v815, %v1485
    %v1808 = vmul.f32 %v816, %v1485
    %v1809 = vmul.f32 %v817, %v1490
    %v1810 = vmul.f32 %v818, %v1490
    %v1811 = vmul.f32 %v819, %v1490
    %v1812 = vmul.f32 %v820, %v1490
    %v1813 = vmul.f32 %v821, %v1490
    %v1814 = vmul.f32 %v822, %v1490
    %v1815 = vmul.f32 %v823, %v1490
    %v1816 = vmul.f32 %v824, %v1495
    %v1817 = vmul.f32 %v825, %v1495
    %v1818 = vmul.f32 %v826, %v1495
    %v1819 = vmul.f32 %v827, %v1495
    %v1820 = vmul.f32 %v828, %v1495
    %v1821 = vmul.f32 %v829, %v1495
    %v1822 = vmul.f32 %v830, %v1495
    %v1823 = vmul.f32 %v831, %v1500
    %v1824 = vmul.f32 %v832, %v1500
    %v1825 = vmul.f32 %v833, %v1500
    %v1826 = vmul.f32 %v834, %v1500
    %v1827 = vmul.f32 %v835, %v1500
    %v1828 = vmul.f32 %v836, %v1500
    %v1829 = vmul.f32 %v837, %v1500
    %v1830 = vmul.f32 %v838, %v1505
    %v1831 = vmul.f32 %v839, %v1505
    %v1832 = vmul.f32 %v840, %v1505
    %v1833 = vmul.f32 %v841, %v1505
    %v1834 = vmul.f32 %v842, %v1505
    %v1835 = vmul.f32 %v843, %v1505
    %v1836 = vmul.f32 %v844, %v1505
    %v1837 = vmul.f32 %v845, %v1510
    %v1838 = vmul.f32 %v846, %v1510
    %v1839 = vmul.f32 %v847, %v1510
    %v1840 = vmul.f32 %v848, %v1510
    %v1841 = vmul.f32 %v849, %v1510
    %v1842 = vmul.f32 %v850, %v1510
    %v1843 = vmul.f32 %v851, %v1510
    %v1844 = vmul.f32 %v852, %v1515
    %v1845 = vmul.f32 %v853, %v1515
    %v1846 = vmul.f32 %v854, %v1515
    %v1847 = vmul.f32 %v855, %v1515
    %v1848 = vmul.f32 %v856, %v1515
    %v1849 = vmul.f32 %v857, %v1515
    %v1850 = vmul.f32 %v858, %v1515
    %v1851 = vmul.f32 %v859, %v1520
    %v1852 = vmul.f32 %v860, %v1520
    %v1853 = vmul.f32 %v861, %v1520
    %v1854 = vmul.f32 %v862, %v1520
    %v1855 = vmul.f32 %v863, %v1520
    %v1856 = vmul.f32 %v864, %v1520
    %v1857 = vmul.f32 %v865, %v1520
    %v1858 = vmul.f32 %v866, %v1445
    %v1859 = vmul.f32 %v867, %v1445
    %v1860 = vmul.f32 %v868, %v1445
    %v1861 = vmul.f32 %v869, %v1445
    %v1862 = vmul.f32 %v870, %v1445
    %v1863 = vmul.f32 %v871, %v1445
    %v1864 = vmul.f32 %v872, %v1445
    %v1865 = vmul.f32 %v873, %v1450
    %v1866 = vmul.f32 %v874, %v1450
    %v1867 = vmul.f32 %v875, %v1450
    %v1868 = vmul.f32 %v876, %v1450
    %v1869 = vmul.f32 %v877, %v1450
    %v1870 = vmul.f32 %v878, %v1450
    %v1871 = vmul.f32 %v879, %v1450
    %v1872 = vmul.f32 %v880, %v1455
    %v1873 = vmul.f32 %v881, %v1455
    %v1874 = vmul.f32 %v882, %v1455
    %v1875 = vmul.f32 %v883, %v1455
    %v1876 = vmul.f32 %v884, %v1455
    %v1877 = vmul.f32 %v885, %v1455
    %v1878 = vmul.f32 %v886, %v1455
    %v1879 = vmul.f32 %v887, %v1460
    %v1880 = vmul.f32 %v888, %v1460
    %v1881 = vmul.f32 %v889, %v1460
    %v1882 = vmul.f32 %v890, %v1460
    %v1883 = vmul.f32 %v891, %v1460
    %v1884 = vmul.f32 %v892, %v1460
    %v1885 = vmul.f32 %v893, %v1460
    %v1886 = vmul.f32 %v894, %v1465
    %v1887 = vmul.f32 %v895, %v1465
    %v1888 = vmul.f32 %v896, %v1465
    %v1889 = vmul.f32 %v897, %v1465
    %v1890 = vmul.f32 %v898, %v1465
    %v1891 = vmul.f32 %v899, %v1465
    %v1892 = vmul.f32 %v900, %v1465
    %v1893 = vmul.f32 %v901, %v1470
    %v1894 = vmul.f32 %v902, %v1470
    %v1895 = vmul.f32 %v903, %v1470
    %v1896 = vmul.f32 %v904, %v1470
    %v1897 = vmul.f32 %v905, %v1470
    %v1898 = vmul.f32 %v906, %v1470
    %v1899 = vmul.f32 %v907, %v1470
    %v1900 = vmul.f32 %v908, %v1475
    %v1901 = vmul.f32 %v909, %v1475
    %v1902 = vmul.f32 %v910, %v1475
    %v1903 = vmul.f32 %v911, %v1475
    %v1904 = vmul.f32 %v912, %v1475
    %v1905 = vmul.f32 %v913, %v1475
    %v1906 = vmul.f32 %v914, %v1475
    %v1907 = vmul.f32 %v915, %v1480
    %v1908 = vmul.f32 %v916, %v1480
    %v1909 = vmul.f32 %v917, %v1480
    %v1910 = vmul.f32 %v918, %v1480
    %v1911 = vmul.f32 %v919, %v1480
    %v1912 = vmul.f32 %v920, %v1480
    %v1913 = vmul.f32 %v921, %v1480
    %v1914 = vmul.f32 %v922, %v1485
    %v1915 = vmul.f32 %v923, %v1485
    %v1916 = vmul.f32 %v924, %v1485
    %v1917 = vmul.f32 %v925, %v1485
    %v1918 = vmul.f32 %v926, %v1485
    %v1919 = vmul.f32 %v927, %v1485
    %v1920 = vmul.f32 %v928, %v1485
    %v1921 = vmul.f32 %v929, %v1490
    %v1922 = vmul.f32 %v930, %v1490
    %v1923 = vmul.f32 %v931, %v1490
    %v1924 = vmul.f32 %v932, %v1490
    %v1925 = vmul.f32 %v933, %v1490
    %v1926 = vmul.f32 %v934, %v1490
    %v1927 = vmul.f32 %v935, %v1490
    %v1928 = vmul.f32 %v936, %v1495
    %v1929 = vmul.f32 %v937, %v1495
    %v1930 = vmul.f32 %v938, %v1495
    %v1931 = vmul.f32 %v939, %v1495
    %v1932 = vmul.f32 %v940, %v1495
    %v1933 = vmul.f32 %v941, %v1495
    %v1934 = vmul.f32 %v942, %v1495
    %v1935 = vmul.f32 %v943, %v1500
    %v1936 = vmul.f32 %v944, %v1500
    %v1937 = vmul.f32 %v945, %v1500
    %v1938 = vmul.f32 %v946, %v1500
    %v1939 = vmul.f32 %v947, %v1500
    %v1940 = vmul.f32 %v948, %v1500
    %v1941 = vmul.f32 %v949, %v1500
    %v1942 = vmul.f32 %v950, %v1505
    %v1943 = vmul.f32 %v951, %v1505
    %v1944 = vmul.f32 %v952, %v1505
    %v1945 = vmul.f32 %v953, %v1505
    %v1946 = vmul.f32 %v954, %v1505
    %v1947 = vmul.f32 %v955, %v1505
    %v1948 = vmul.f32 %v956, %v1505
    %v1949 = vmul.f32 %v957, %v1510
    %v1950 = vmul.f32 %v958, %v1510
    %v1951 = vmul.f32 %v959, %v1510
    %v1952 = vmul.f32 %v960, %v1510
    %v1953 = vmul.f32 %v961, %v1510
    %v1954 = vmul.f32 %v962, %v1510
    %v1955 = vmul.f32 %v963, %v1510
    %v1956 = vmul.f32 %v964, %v1515
    %v1957 = vmul.f32 %v965, %v1515
    %v1958 = vmul.f32 %v966, %v1515
    %v1959 = vmul.f32 %v967, %v1515
    %v1960 = vmul.f32 %v968, %v1515
    %v1961 = vmul.f32 %v969, %v1515
    %v1962 = vmul.f32 %v970, %v1515
    %v1963 = vmul.f32 %v971, %v1520
    %v1964 = vmul.f32 %v972, %v1520
    %v1965 = vmul.f32 %v973, %v1520
    %v1966 = vmul.f32 %v974, %v1520
    %v1967 = vmul.f32 %v975, %v1520
    %v1968 = vmul.f32 %v976, %v1520
    %v1969 = vmul.f32 %v977, %v1520
    %v1970 = vmul.f32 %v978, %v1445
    %v1971 = vmul.f32 %v979, %v1445
    %v1972 = vmul.f32 %v980, %v1445
    %v1973 = vmul.f32 %v981, %v1445
    %v1974 = vmul.f32 %v982, %v1445
    %v1975 = vmul.f32 %v983, %v1445
    %v1976 = vmul.f32 %v984, %v1445
    %v1977 = vmul.f32 %v985, %v1450
    %v1978 = vmul.f32 %v986, %v1450
    %v1979 = vmul.f32 %v987, %v1450
    %v1980 = vmul.f32 %v988, %v1450
    %v1981 = vmul.f32 %v989, %v1450
    %v1982 = vmul.f32 %v990, %v1450
    %v1983 = vmul.f32 %v991, %v1450
    %v1984 = vmul.f32 %v992, %v1455
    %v1985 = vmul.f32 %v993, %v1455
    %v1986 = vmul.f32 %v994, %v1455
    %v1987 = vmul.f32 %v995, %v1455
    %v1988 = vmul.f32 %v996, %v1455
    %v1989 = vmul.f32 %v997, %v1455
    %v1990 = vmul.f32 %v998, %v1455
    %v1991 = vmul.f32 %v999, %v1460
    %v1992 = vmul.f32 %v1000, %v1460
    %v1993 = vmul.f32 %v1001, %v1460
    %v1994 = vmul.f32 %v1002, %v1460
    %v1995 = vmul.f32 %v1003, %v1460
    %v1996 = vmul.f32 %v1004, %v1460
    %v1997 = vmul.f32 %v1005, %v1460
    %v1998 = vmul.f32 %v1006, %v1465
    %v1999 = vmul.f32 %v1007, %v1465
    %v2000 = vmul.f32 %v1008, %v1465
    %v2001 = vmul.f32 %v1009, %v1465
    %v2002 = vmul.f32 %v1010, %v1465
    %v2003 = vmul.f32 %v1011, %v1465
    %v2004 = vmul.f32 %v1012, %v1465
    %v2005 = vmul.f32 %v1013, %v1470
    %v2006 = vmul.f32 %v1014, %v1470
    %v2007 = vmul.f32 %v1015, %v1470
    %v2008 = vmul.f32 %v1016, %v1470
    %v2009 = vmul.f32 %v1017, %v1470
    %v2010 = vmul.f32 %v1018, %v1470
    %v2011 = vmul.f32 %v1019, %v1470
    %v2012 = vmul.f32 %v1020, %v1475
    %v2013 = vmul.f32 %v1021, %v1475
    %v2014 = vmul.f32 %v1022, %v1475
    %v2015 = vmul.f32 %v1023, %v1475
    %v2016 = vmul.f32 %v1024, %v1475
    %v2017 = vmul.f32 %v1025, %v1475
    %v2018 = vmul.f32 %v1026, %v1475
    %v2019 = vmul.f32 %v1027, %v1480
    %v2020 = vmul.f32 %v1028, %v1480
    %v2021 = vmul.f32 %v1029, %v1480
    %v2022 = vmul.f32 %v1030, %v1480
    %v2023 = vmul.f32 %v1031, %v1480
    %v2024 = vmul.f32 %v1032, %v1480
    %v2025 = vmul.f32 %v1033, %v1480
    %v2026 = vmul.f32 %v1034, %v1485
    %v2027 = vmul.f32 %v1035, %v1485
    %v2028 = vmul.f32 %v1036, %v1485
    %v2029 = vmul.f32 %v1037, %v1485
    %v2030 = vmul.f32 %v1038, %v1485
    %v2031 = vmul.f32 %v1039, %v1485
    %v2032 = vmul.f32 %v1040, %v1485
    %v2033 = vmul.f32 %v1041, %v1490
    %v2034 = vmul.f32 %v1042, %v1490
    %v2035 = vmul.f32 %v1043, %v1490
    %v2036 = vmul.f32 %v1044, %v1490
    %v2037 = vmul.f32 %v1045, %v1490
    %v2038 = vmul.f32 %v1046, %v1490
    %v2039 = vmul.f32 %v1047, %v1490
    %v2040 = vmul.f32 %v1048, %v1495
    %v2041 = vmul.f32 %v1049, %v1495
    %v2042 = vmul.f32 %v1050, %v1495
    %v2043 = vmul.f32 %v1051, %v1495
    %v2044 = vmul.f32 %v1052, %v1495
    %v2045 = vmul.f32 %v1053, %v1495
    %v2046 = vmul.f32 %v1054, %v1495
    %v2047 = vmul.f32 %v1055, %v1500
    %v2048 = vmul.f32 %v1056, %v1500
    %v2049 = vmul.f32 %v1057, %v1500
    %v2050 = vmul.f32 %v1058, %v1500
    %v2051 = vmul.f32 %v1059, %v1500
    %v2052 = vmul.f32 %v1060, %v1500
    %v2053 = vmul.f32 %v1061, %v1500
    %v2054 = vmul.f32 %v1062, %v1505
    %v2055 = vmul.f32 %v1063, %v1505
    %v2056 = vmul.f32 %v1064, %v1505
    %v2057 = vmul.f32 %v1065, %v1505
    %v2058 = vmul.f32 %v1066, %v1505
    %v2059 = vmul.f32 %v1067, %v1505
    %v2060 = vmul.f32 %v1068, %v1505
    %v2061 = vmul.f32 %v1069, %v1510
    %v2062 = vmul.f32 %v1070, %v1510
    %v2063 = vmul.f32 %v1071, %v1510
    %v2064 = vmul.f32 %v1072, %v1510
    %v2065 = vmul.f32 %v1073, %v1510
    %v2066 = vmul.f32 %v1074, %v1510
    %v2067 = vmul.f32 %v1075, %v1510
    %v2068 = vmul.f32 %v1076, %v1515
    %v2069 = vmul.f32 %v1077, %v1515
    %v2070 = vmul.f32 %v1078, %v1515
    %v2071 = vmul.f32 %v1079, %v1515
    %v2072 = vmul.f32 %v1080, %v1515
    %v2073 = vmul.f32 %v1081, %v1515
    %v2074 = vmul.f32 %v1082, %v1515
    %v2075 = vmul.f32 %v1083, %v1520
    %v2076 = vmul.f32 %v1084, %v1520
    %v2077 = vmul.f32 %v1085, %v1520
    %v2078 = vmul.f32 %v1086, %v1520
    %v2079 = vmul.f32 %v1087, %v1520
    %v2080 = vmul.f32 %v1088, %v1520
    %v2081 = vmul.f32 %v1089, %v1520
    %v2082 = vmul.f32 %v1090, %v1445
    %v2083 = vmul.f32 %v1091, %v1445
    %v2084 = vmul.f32 %v1092, %v1445
    %v2085 = vmul.f32 %v1093, %v1445
    %v2086 = vmul.f32 %v1094, %v1445
    %v2087 = vmul.f32 %v1095, %v1445
    %v2088 = vmul.f32 %v1096, %v1445
    %v2089 = vmul.f32 %v1097, %v1450
    %v2090 = vmul.f32 %v1098, %v1450
    %v2091 = vmul.f32 %v1099, %v1450
    %v2092 = vmul.f32 %v1100, %v1450
    %v2093 = vmul.f32 %v1101, %v1450
    %v2094 = vmul.f32 %v1102, %v1450
    %v2095 = vmul.f32 %v1103, %v1450
    %v2096 = vmul.f32 %v1104, %v1455
    %v2097 = vmul.f32 %v1105, %v1455
    %v2098 = vmul.f32 %v1106, %v1455
    %v2099 = vmul.f32 %v1107, %v1455
    %v2100 = vmul.f32 %v1108, %v1455
    %v2101 = vmul.f32 %v1109, %v1455
    %v2102 = vmul.f32 %v1110, %v1455
    %v2103 = vmul.f32 %v1111, %v1460
    %v2104 = vmul.f32 %v1112, %v1460
    %v2105 = vmul.f32 %v1113, %v1460
    %v2106 = vmul.f32 %v1114, %v1460
    %v2107 = vmul.f32 %v1115, %v1460
    %v2108 = vmul.f32 %v1116, %v1460
    %v2109 = vmul.f32 %v1117, %v1460
    %v2110 = vmul.f32 %v1118, %v1465
    %v2111 = vmul.f32 %v1119, %v1465
    %v2112 = vmul.f32 %v1120, %v1465
    %v2113 = vmul.f32 %v1121, %v1465
    %v2114 = vmul.f32 %v1122, %v1465
    %v2115 = vmul.f32 %v1123, %v1465
    %v2116 = vmul.f32 %v1124, %v1465
    %v2117 = vmul.f32 %v1125, %v1470
    %v2118 = vmul.f32 %v1126, %v1470
    %v2119 = vmul.f32 %v1127, %v1470
    %v2120 = vmul.f32 %v1128, %v1470
    %v2121 = vmul.f32 %v1129, %v1470
    %v2122 = vmul.f32 %v1130, %v1470
    %v2123 = vmul.f32 %v1131, %v1470
    %v2124 = vmul.f32 %v1132, %v1475
    %v2125 = vmul.f32 %v1133, %v1475
    %v2126 = vmul.f32 %v1134, %v1475
    %v2127 = vmul.f32 %v1135, %v1475
    %v2128 = vmul.f32 %v1136, %v1475
    %v2129 = vmul.f32 %v1137, %v1475
    %v2130 = vmul.f32 %v1138, %v1475
    %v2131 = vmul.f32 %v1139, %v1480
    %v2132 = vmul.f32 %v1140, %v1480
    %v2133 = vmul.f32 %v1141, %v1480
    %v2134 = vmul.f32 %v1142, %v1480
    %v2135 = vmul.f32 %v1143, %v1480
    %v2136 = vmul.f32 %v1144, %v1480
    %v2137 = vmul.f32 %v1145, %v1480
    %v2138 = vmul.f32 %v1146, %v1485
    %v2139 = vmul.f32 %v1147, %v1485
    %v2140 = vmul.f32 %v1148, %v1485
    %v2141 = vmul.f32 %v1149, %v1485
    %v2142 = vmul.f32 %v1150, %v1485
    %v2143 = vmul.f32 %v1151, %v1485
    %v2144 = vmul.f32 %v1152, %v1485
    %v2145 = vmul.f32 %v1153, %v1490
    %v2146 = vmul.f32 %v1154, %v1490
    %v2147 = vmul.f32 %v1155, %v1490
    %v2148 = vmul.f32 %v1156, %v1490
    %v2149 = vmul.f32 %v1157, %v1490
    %v2150 = vmul.f32 %v1158, %v1490
    %v2151 = vmul.f32 %v1159, %v1490
    %v2152 = vmul.f32 %v1160, %v1495
    %v2153 = vmul.f32 %v1161, %v1495
    %v2154 = vmul.f32 %v1162, %v1495
    %v2155 = vmul.f32 %v1163, %v1495
    %v2156 = vmul.f32 %v1164, %v1495
    %v2157 = vmul.f32 %v1165, %v1495
    %v2158 = vmul.f32 %v1166, %v1495
    %v2159 = vmul.f32 %v1167, %v1500
    %v2160 = vmul.f32 %v1168, %v1500
    %v2161 = vmul.f32 %v1169, %v1500
    %v2162 = vmul.f32 %v1170, %v1500
    %v2163 = vmul.f32 %v1171, %v1500
    %v2164 = vmul.f32 %v1172, %v1500
    %v2165 = vmul.f32 %v1173, %v1500
    %v2166 = vmul.f32 %v1174, %v1505
    %v2167 = vmul.f32 %v1175, %v1505
    %v2168 = vmul.f32 %v1176, %v1505
    %v2169 = vmul.f32 %v1177, %v1505
    %v2170 = vmul.f32 %v1178, %v1505
    %v2171 = vmul.f32 %v1179, %v1505
    %v2172 = vmul.f32 %v1180, %v1505
    %v2173 = vmul.f32 %v1181, %v1510
    %v2174 = vmul.f32 %v1182, %v1510
    %v2175 = vmul.f32 %v1183, %v1510
    %v2176 = vmul.f32 %v1184, %v1510
    %v2177 = vmul.f32 %v1185, %v1510
    %v2178 = vmul.f32 %v1186, %v1510
    %v2179 = vmul.f32 %v1187, %v1510
    %v2180 = vmul.f32 %v1188, %v1515
    %v2181 = vmul.f32 %v1189, %v1515
    %v2182 = vmul.f32 %v1190, %v1515
    %v2183 = vmul.f32 %v1191, %v1515
    %v2184 = vmul.f32 %v1192, %v1515
    %v2185 = vmul.f32 %v1193, %v1515
    %v2186 = vmul.f32 %v1194, %v1515
    %v2187 = vmul.f32 %v1195, %v1520
    %v2188 = vmul.f32 %v1196, %v1520
    %v2189 = vmul.f32 %v1197, %v1520
    %v2190 = vmul.f32 %v1198, %v1520
    %v2191 = vmul.f32 %v1199, %v1520
    %v2192 = vmul.f32 %v1200, %v1520
    %v2193 = vmul.f32 %v1201, %v1520
    %v2194 = vmul.f32 %v1202, %v1445
    %v2195 = vmul.f32 %v1203, %v1445
    %v2196 = vmul.f32 %v1204, %v1445
    %v2197 = vmul.f32 %v1205, %v1445
    %v2198 = vmul.f32 %v1206, %v1445
    %v2199 = vmul.f32 %v1207, %v1445
    %v2200 = vmul.f32 %v1208, %v1445
    %v2201 = vmul.f32 %v1209, %v1450
    %v2202 = vmul.f32 %v1210, %v1450
    %v2203 = vmul.f32 %v1211, %v1450
    %v2204 = vmul.f32 %v1212, %v1450
    %v2205 = vmul.f32 %v1213, %v1450
    %v2206 = vmul.f32 %v1214, %v1450
    %v2207 = vmul.f32 %v1215, %v1450
    %v2208 = vmul.f32 %v1216, %v1455
    %v2209 = vmul.f32 %v1217, %v1455
    %v2210 = vmul.f32 %v1218, %v1455
    %v2211 = vmul.f32 %v1219, %v1455
    %v2212 = vmul.f32 %v1220, %v1455
    %v2213 = vmul.f32 %v1221, %v1455
    %v2214 = vmul.f32 %v1222, %v1455
    %v2215 = vmul.f32 %v1223, %v1460
    %v2216 = vmul.f32 %v1224, %v1460
    %v2217 = vmul.f32 %v1225, %v1460
    %v2218 = vmul.f32 %v1226, %v1460
    %v2219 = vmul.f32 %v1227, %v1460
    %v2220 = vmul.f32 %v1228, %v1460
    %v2221 = vmul.f32 %v1229, %v1460
    %v2222 = vmul.f32 %v1230, %v1465
    %v2223 = vmul.f32 %v1231, %v1465
    %v2224 = vmul.f32 %v1232, %v1465
    %v2225 = vmul.f32 %v1233, %v1465
    %v2226 = vmul.f32 %v1234, %v1465
    %v2227 = vmul.f32 %v1235, %v1465
    %v2228 = vmul.f32 %v1236, %v1465
    %v2229 = vmul.f32 %v1237, %v1470
    %v2230 = vmul.f32 %v1238, %v1470
    %v2231 = vmul.f32 %v1239, %v1470
    %v2232 = vmul.f32 %v1240, %v1470
    %v2233 = vmul.f32 %v1241, %v1470
    %v2234 = vmul.f32 %v1242, %v1470
    %v2235 = vmul.f32 %v1243, %v1470
    %v2236 = vmul.f32 %v1244, %v1475
    %v2237 = vmul.f32 %v1245, %v1475
    %v2238 = vmul.f32 %v1246, %v1475
    %v2239 = vmul.f32 %v1247, %v1475
    %v2240 = vmul.f32 %v1248, %v1475
    %v2241 = vmul.f32 %v1249, %v1475
    %v2242 = vmul.f32 %v1250, %v1475
    %v2243 = vmul.f32 %v1251, %v1480
    %v2244 = vmul.f32 %v1252, %v1480
    %v2245 = vmul.f32 %v1253, %v1480
    %v2246 = vmul.f32 %v1254, %v1480
    %v2247 = vmul.f32 %v1255, %v1480
    %v2248 = vmul.f32 %v1256, %v1480
    %v2249 = vmul.f32 %v1257, %v1480
    %v2250 = vmul.f32 %v1258, %v1485
    %v2251 = vmul.f32 %v1259, %v1485
    %v2252 = vmul.f32 %v1260, %v1485
    %v2253 = vmul.f32 %v1261, %v1485
    %v2254 = vmul.f32 %v1262, %v1485
    %v2255 = vmul.f32 %v1263, %v1485
    %v2256 = vmul.f32 %v1264, %v1485
    %v2257 = vmul.f32 %v1265, %v1490
    %v2258 = vmul.f32 %v1266, %v1490
    %v2259 = vmul.f32 %v1267, %v1490
    %v2260 = vmul.f32 %v1268, %v1490
    %v2261 = vmul.f32 %v1269, %v1490
    %v2262 = vmul.f32 %v1270, %v1490
    %v2263 = vmul.f32 %v1271, %v1490
    %v2264 = vmul.f32 %v1272, %v1495
    %v2265 = vmul.f32 %v1273, %v1495
    %v2266 = vmul.f32 %v1274, %v1495
    %v2267 = vmul.f32 %v1275, %v1495
    %v2268 = vmul.f32 %v1276, %v1495
    %v2269 = vmul.f32 %v1277, %v1495
    %v2270 = vmul.f32 %v1278, %v1495
    %v2271 = vmul.f32 %v1279, %v1500
    %v2272 = vmul.f32 %v1280, %v1500
    %v2273 = vmul.f32 %v1281, %v1500
    %v2274 = vmul.f32 %v1282, %v1500
    %v2275 = vmul.f32 %v1283, %v1500
    %v2276 = vmul.f32 %v1284, %v1500
    %v2277 = vmul.f32 %v1285, %v1500
    %v2278 = vmul.f32 %v1286, %v1505
    %v2279 = vmul.f32 %v1287, %v1505
    %v2280 = vmul.f32 %v1288, %v1505
    %v2281 = vmul.f32 %v1289, %v1505
    %v2282 = vmul.f32 %v1290, %v1505
    %v2283 = vmul.f32 %v1291, %v1505
    %v2284 = vmul.f32 %v1292, %v1505
    %v2285 = vmul.f32 %v1293, %v1510
    %v2286 = vmul.f32 %v1294, %v1510
    %v2287 = vmul.f32 %v1295, %v1510
    %v2288 = vmul.f32 %v1296, %v1510
    %v2289 = vmul.f32 %v1297, %v1510
    %v2290 = vmul.f32 %v1298, %v1510
    %v2291 = vmul.f32 %v1299, %v1510
    %v2292 = vmul.f32 %v1300, %v1515
    %v2293 = vmul.f32 %v1301, %v1515
    %v2294 = vmul.f32 %v1302, %v1515
    %v2295 = vmul.f32 %v1303, %v1515
    %v2296 = vmul.f32 %v1304, %v1515
    %v2297 = vmul.f32 %v1305, %v1515
    %v2298 = vmul.f32 %v1306, %v1515
    %v2299 = vmul.f32 %v1307, %v1520
    %v2300 = vmul.f32 %v1308, %v1520
    %v2301 = vmul.f32 %v1309, %v1520
    %v2302 = vmul.f32 %v1310, %v1520
    %v2303 = vmul.f32 %v1311, %v1520
    %v2304 = vmul.f32 %v1312, %v1520
    %v2305 = vmul.f32 %v1313, %v1520
    %v2306 = vmul.f32 %v1314, %v1445
    %v2307 = vmul.f32 %v1315, %v1445
    %v2308 = vmul.f32 %v1316, %v1445
    %v2309 = vmul.f32 %v1317, %v1445
    %v2310 = vmul.f32 %v1318, %v1445
    %v2311 = vmul.f32 %v1319, %v1445
    %v2312 = vmul.f32 %v1320, %v1445
    %v2313 = vmul.f32 %v1321, %v1450
    %v2314 = vmul.f32 %v1322, %v1450
    %v2315 = vmul.f32 %v1323, %v1450
    %v2316 = vmul.f32 %v1324, %v1450
    %v2317 = vmul.f32 %v1325, %v1450
    %v2318 = vmul.f32 %v1326, %v1450
    %v2319 = vmul.f32 %v1327, %v1450
    %v2320 = vmul.f32 %v1328, %v1455
    %v2321 = vmul.f32 %v1329, %v1455
    %v2322 = vmul.f32 %v1330, %v1455
    %v2323 = vmul.f32 %v1331, %v1455
    %v2324 = vmul.f32 %v1332, %v1455
    %v2325 = vmul.f32 %v1333, %v1455
    %v2326 = vmul.f32 %v1334, %v1455
    %v2327 = vmul.f32 %v1335, %v1460
    %v2328 = vmul.f32 %v1336, %v1460
    %v2329 = vmul.f32 %v1337, %v1460
    %v2330 = vmul.f32 %v1338, %v1460
    %v2331 = vmul.f32 %v1339, %v1460
    %v2332 = vmul.f32 %v1340, %v1460
    %v2333 = vmul.f32 %v1341, %v1460
    %v2334 = vmul.f32 %v1342, %v1465
    %v2335 = vmul.f32 %v1343, %v1465
    %v2336 = vmul.f32 %v1344, %v1465
    %v2337 = vmul.f32 %v1345, %v1465
    %v2338 = vmul.f32 %v1346, %v1465
    %v2339 = vmul.f32 %v1347, %v1465
    %v2340 = vmul.f32 %v1348, %v1465
    %v2341 = vmul.f32 %v1349, %v1470
    %v2342 = vmul.f32 %v1350, %v1470
    %v2343 = vmul.f32 %v1351, %v1470
    %v2344 = vmul.f32 %v1352, %v1470
    %v2345 = vmul.f32 %v1353, %v1470
    %v2346 = vmul.f32 %v1354, %v1470
    %v2347 = vmul.f32 %v1355, %v1470
    %v2348 = vmul.f32 %v1356, %v1475
    %v2349 = vmul.f32 %v1357, %v1475
    %v2350 = vmul.f32 %v1358, %v1475
    %v2351 = vmul.f32 %v1359, %v1475
    %v2352 = vmul.f32 %v1360, %v1475
    %v2353 = vmul.f32 %v1361, %v1475
    %v2354 = vmul.f32 %v1362, %v1475
    %v2355 = vmul.f32 %v1363, %v1480
    %v2356 = vmul.f32 %v1364, %v1480
    %v2357 = vmul.f32 %v1365, %v1480
    %v2358 = vmul.f32 %v1366, %v1480
    %v2359 = vmul.f32 %v1367, %v1480
    %v2360 = vmul.f32 %v1368, %v1480
    %v2361 = vmul.f32 %v1369, %v1480
    %v2362 = vmul.f32 %v1370, %v1485
    %v2363 = vmul.f32 %v1371, %v1485
    %v2364 = vmul.f32 %v1372, %v1485
    %v2365 = vmul.f32 %v1373, %v1485
    %v2366 = vmul.f32 %v1374, %v1485
    %v2367 = vmul.f32 %v1375, %v1485
    %v2368 = vmul.f32 %v1376, %v1485
    %v2369 = vmul.f32 %v1377, %v1490
    %v2370 = vmul.f32 %v1378, %v1490
    %v2371 = vmul.f32 %v1379, %v1490
    %v2372 = vmul.f32 %v1380, %v1490
    %v2373 = vmul.f32 %v1381, %v1490
    %v2374 = vmul.f32 %v1382, %v1490
    %v2375 = vmul.f32 %v1383, %v1490
    %v2376 = vmul.f32 %v1384, %v1495
    %v2377 = vmul.f32 %v1385, %v1495
    %v2378 = vmul.f32 %v1386, %v1495
    %v2379 = vmul.f32 %v1387, %v1495
    %v2380 = vmul.f32 %v1388, %v1495
    %v2381 = vmul.f32 %v1389, %v1495
    %v2382 = vmul.f32 %v1390, %v1495
    %v2383 = vmul.f32 %v1391, %v1500
    %v2384 = vmul.f32 %v1392, %v1500
    %v2385 = vmul.f32 %v1393, %v1500
    %v2386 = vmul.f32 %v1394, %v1500
    %v2387 = vmul.f32 %v1395, %v1500
    %v2388 = vmul.f32 %v1396, %v1500
    %v2389 = vmul.f32 %v1397, %v1500
    %v2390 = vmul.f32 %v1398, %v1505
    %v2391 = vmul.f32 %v1399, %v1505
    %v2392 = vmul.f32 %v1400, %v1505
    %v2393 = vmul.f32 %v1401, %v1505
    %v2394 = vmul.f32 %v1402, %v1505
    %v2395 = vmul.f32 %v1403, %v1505
    %v2396 = vmul.f32 %v1404, %v1505
    %v2397 = vmul.f32 %v1405, %v1510
    %v2398 = vmul.f32 %v1406, %v1510
    %v2399 = vmul.f32 %v1407, %v1510
    %v2400 = vmul.f32 %v1408, %v1510
    %v2401 = vmul.f32 %v1409, %v1510
    %v2402 = vmul.f32 %v1410, %v1510
    %v2403 = vmul.f32 %v1411, %v1510
    %v2404 = vmul.f32 %v1412, %v1515
    %v2405 = vmul.f32 %v1413, %v1515
    %v2406 = vmul.f32 %v1414, %v1515
    %v2407 = vmul.f32 %v1415, %v1515
    %v2408 = vmul.f32 %v1416, %v1515
    %v2409 = vmul.f32 %v1417, %v1515
    %v2410 = vmul.f32 %v1418, %v1515
    %v2411 = vmul.f32 %v1419, %v1520
    %v2412 = vmul.f32 %v1420, %v1520
    %v2413 = vmul.f32 %v1421, %v1520
    %v2414 = vmul.f32 %v1422, %v1520
    %v2415 = vmul.f32 %v1423, %v1520
    %v2416 = vmul.f32 %v1424, %v1520
    %v2417 = vmul.f32 %v1425, %v1520
    %v2418 = vadd.f32 %v1522, %v1529
    %v2419 = vadd.f32 %v2418, %v1536
    %v2420 = vadd.f32 %v2419, %v1543
    %v2421 = vadd.f32 %v2420, %v1550
    %v2422 = vadd.f32 %v2421, %v1557
    %v2423 = vadd.f32 %v2422, %v1564
    %v2424 = vadd.f32 %v2423, %v1571
    %v2425 = vadd.f32 %v2424, %v1578
    %v2426 = vadd.f32 %v2425, %v1585
    %v2427 = vadd.f32 %v2426, %v1592
    %v2428 = vadd.f32 %v2427, %v1599
    %v2429 = vadd.f32 %v2428, %v1606
    %v2430 = vadd.f32 %v2429, %v1613
    %v2431 = vadd.f32 %v2430, %v1620
    %v2432 = vadd.f32 %v2431, %v1627
    %v2433 = vrot.slane %v2432, 4
    %v2434 = vadd.f32 %v2432, %v2433
    %v2435 = vrot.slane %v2434, 2
    %v2436 = vadd.f32 %v2434, %v2435
    %v2437 = vrot.slane %v2436, 1
    %v2438 = vadd.f32 %v2436, %v2437
    %v2439 = vadd.f32 %v1523, %v1530
    %v2440 = vadd.f32 %v2439, %v1537
    %v2441 = vadd.f32 %v2440, %v1544
    %v2442 = vadd.f32 %v2441, %v1551
    %v2443 = vadd.f32 %v2442, %v1558
    %v2444 = vadd.f32 %v2443, %v1565
    %v2445 = vadd.f32 %v2444, %v1572
    %v2446 = vadd.f32 %v2445, %v1579
    %v2447 = vadd.f32 %v2446, %v1586
    %v2448 = vadd.f32 %v2447, %v1593
    %v2449 = vadd.f32 %v2448, %v1600
    %v2450 = vadd.f32 %v2449, %v1607
    %v2451 = vadd.f32 %v2450, %v1614
    %v2452 = vadd.f32 %v2451, %v1621
    %v2453 = vadd.f32 %v2452, %v1628
    %v2454 = vrot.slane %v2453, 4
    %v2455 = vadd.f32 %v2453, %v2454
    %v2456 = vrot.slane %v2455, 2
    %v2457 = vadd.f32 %v2455, %v2456
    %v2458 = vrot.slane %v2457, 1
    %v2459 = vadd.f32 %v2457, %v2458
    %v2460 = vadd.f32 %v1524, %v1531
    %v2461 = vadd.f32 %v2460, %v1538
    %v2462 = vadd.f32 %v2461, %v1545
    %v2463 = vadd.f32 %v2462, %v1552
    %v2464 = vadd.f32 %v2463, %v1559
    %v2465 = vadd.f32 %v2464, %v1566
    %v2466 = vadd.f32 %v2465, %v1573
    %v2467 = vadd.f32 %v2466, %v1580
    %v2468 = vadd.f32 %v2467, %v1587
    %v2469 = vadd.f32 %v2468, %v1594
    %v2470 = vadd.f32 %v2469, %v1601
    %v2471 = vadd.f32 %v2470, %v1608
    %v2472 = vadd.f32 %v2471, %v1615
    %v2473 = vadd.f32 %v2472, %v1622
    %v2474 = vadd.f32 %v2473, %v1629
    %v2475 = vrot.slane %v2474, 4
    %v2476 = vadd.f32 %v2474, %v2475
    %v2477 = vrot.slane %v2476, 2
    %v2478 = vadd.f32 %v2476, %v2477
    %v2479 = vrot.slane %v2478, 1
    %v2480 = vadd.f32 %v2478, %v2479
    %v2481 = vadd.f32 %v1525, %v1532
    %v2482 = vadd.f32 %v2481, %v1539
    %v2483 = vadd.f32 %v2482, %v1546
    %v2484 = vadd.f32 %v2483, %v1553
    %v2485 = vadd.f32 %v2484, %v1560
    %v2486 = vadd.f32 %v2485, %v1567
    %v2487 = vadd.f32 %v2486, %v1574
    %v2488 = vadd.f32 %v2487, %v1581
    %v2489 = vadd.f32 %v2488, %v1588
    %v2490 = vadd.f32 %v2489, %v1595
    %v2491 = vadd.f32 %v2490, %v1602
    %v2492 = vadd.f32 %v2491, %v1609
    %v2493 = vadd.f32 %v2492, %v1616
    %v2494 = vadd.f32 %v2493, %v1623
    %v2495 = vadd.f32 %v2494, %v1630
    %v2496 = vrot.slane %v2495, 4
    %v2497 = vadd.f32 %v2495, %v2496
    %v2498 = vrot.slane %v2497, 2
    %v2499 = vadd.f32 %v2497, %v2498
    %v2500 = vrot.slane %v2499, 1
    %v2501 = vadd.f32 %v2499, %v2500
    %v2502 = vadd.f32 %v1526, %v1533
    %v2503 = vadd.f32 %v2502, %v1540
    %v2504 = vadd.f32 %v2503, %v1547
    %v2505 = vadd.f32 %v2504, %v1554
    %v2506 = vadd.f32 %v2505, %v1561
    %v2507 = vadd.f32 %v2506, %v1568
    %v2508 = vadd.f32 %v2507, %v1575
    %v2509 = vadd.f32 %v2508, %v1582
    %v2510 = vadd.f32 %v2509, %v1589
    %v2511 = vadd.f32 %v2510, %v1596
    %v2512 = vadd.f32 %v2511, %v1603
    %v2513 = vadd.f32 %v2512, %v1610
    %v2514 = vadd.f32 %v2513, %v1617
    %v2515 = vadd.f32 %v2514, %v1624
    %v2516 = vadd.f32 %v2515, %v1631
    %v2517 = vrot.slane %v2516, 4
    %v2518 = vadd.f32 %v2516, %v2517
    %v2519 = vrot.slane %v2518, 2
    %v2520 = vadd.f32 %v2518, %v2519
    %v2521 = vrot.slane %v2520, 1
    %v2522 = vadd.f32 %v2520, %v2521
    %v2523 = vadd.f32 %v1527, %v1534
    %v2524 = vadd.f32 %v2523, %v1541
    %v2525 = vadd.f32 %v2524, %v1548
    %v2526 = vadd.f32 %v2525, %v1555
    %v2527 = vadd.f32 %v2526, %v1562
    %v2528 = vadd.f32 %v2527, %v1569
    %v2529 = vadd.f32 %v2528, %v1576
    %v2530 = vadd.f32 %v2529, %v1583
    %v2531 = vadd.f32 %v2530, %v1590
    %v2532 = vadd.f32 %v2531, %v1597
    %v2533 = vadd.f32 %v2532, %v1604
    %v2534 = vadd.f32 %v2533, %v1611
    %v2535 = vadd.f32 %v2534, %v1618
    %v2536 = vadd.f32 %v2535, %v1625
    %v2537 = vadd.f32 %v2536, %v1632
    %v2538 = vrot.slane %v2537, 4
    %v2539 = vadd.f32 %v2537, %v2538
    %v2540 = vrot.slane %v2539, 2
    %v2541 = vadd.f32 %v2539, %v2540
    %v2542 = vrot.slane %v2541, 1
    %v2543 = vadd.f32 %v2541, %v2542
    %vm2544 = vcmask 130048
    %v2545 = vsel %vm2544, %v1528, 0.0
    %v2546 = vsel %vm2544, %v1535, 0.0
    %v2547 = vadd.f32 %v2545, %v2546
    %v2548 = vsel %vm2544, %v1542, 0.0
    %v2549 = vadd.f32 %v2547, %v2548
    %v2550 = vsel %vm2544, %v1549, 0.0
    %v2551 = vadd.f32 %v2549, %v2550
    %v2552 = vsel %vm2544, %v1556, 0.0
    %v2553 = vadd.f32 %v2551, %v2552
    %v2554 = vsel %vm2544, %v1563, 0.0
    %v2555 = vadd.f32 %v2553, %v2554
    %v2556 = vsel %vm2544, %v1570, 0.0
    %v2557 = vadd.f32 %v2555, %v2556
    %v2558 = vsel %vm2544, %v1577, 0.0
    %v2559 = vadd.f32 %v2557, %v2558
    %v2560 = vsel %vm2544, %v1584, 0.0
    %v2561 = vadd.f32 %v2559, %v2560
    %v2562 = vsel %vm2544, %v1591, 0.0
    %v2563 = vadd.f32 %v2561, %v2562
    %v2564 = vsel %vm2544, %v1598, 0.0
    %v2565 = vadd.f32 %v2563, %v2564
    %v2566 = vsel %vm2544, %v1605, 0.0
    %v2567 = vadd.f32 %v2565, %v2566
    %v2568 = vsel %vm2544, %v1612, 0.0
    %v2569 = vadd.f32 %v2567, %v2568
    %v2570 = vsel %vm2544, %v1619, 0.0
    %v2571 = vadd.f32 %v2569, %v2570
    %v2572 = vsel %vm2544, %v1626, 0.0
    %v2573 = vadd.f32 %v2571, %v2572
    %v2574 = vsel %vm2544, %v1633, 0.0
    %v2575 = vadd.f32 %v2573, %v2574
    %v2576 = vrot.slane %v2575, 4
    %v2577 = vadd.f32 %v2575, %v2576
    %v2578 = vrot.slane %v2577, 2
    %v2579 = vadd.f32 %v2577, %v2578
    %v2580 = vrot.slane %v2579, 1
    %v2581 = vadd.f32 %v2579, %v2580
    %v2582 = vadd.f32 %v1634, %v1641
    %v2583 = vadd.f32 %v2582, %v1648
    %v2584 = vadd.f32 %v2583, %v1655
    %v2585 = vadd.f32 %v2584, %v1662
    %v2586 = vadd.f32 %v2585, %v1669
    %v2587 = vadd.f32 %v2586, %v1676
    %v2588 = vadd.f32 %v2587, %v1683
    %v2589 = vadd.f32 %v2588, %v1690
    %v2590 = vadd.f32 %v2589, %v1697
    %v2591 = vadd.f32 %v2590, %v1704
    %v2592 = vadd.f32 %v2591, %v1711
    %v2593 = vadd.f32 %v2592, %v1718
    %v2594 = vadd.f32 %v2593, %v1725
    %v2595 = vadd.f32 %v2594, %v1732
    %v2596 = vadd.f32 %v2595, %v1739
    %v2597 = vrot.slane %v2596, 4
    %v2598 = vadd.f32 %v2596, %v2597
    %v2599 = vrot.slane %v2598, 2
    %v2600 = vadd.f32 %v2598, %v2599
    %v2601 = vrot.slane %v2600, 1
    %v2602 = vadd.f32 %v2600, %v2601
    %v2603 = vadd.f32 %v1635, %v1642
    %v2604 = vadd.f32 %v2603, %v1649
    %v2605 = vadd.f32 %v2604, %v1656
    %v2606 = vadd.f32 %v2605, %v1663
    %v2607 = vadd.f32 %v2606, %v1670
    %v2608 = vadd.f32 %v2607, %v1677
    %v2609 = vadd.f32 %v2608, %v1684
    %v2610 = vadd.f32 %v2609, %v1691
    %v2611 = vadd.f32 %v2610, %v1698
    %v2612 = vadd.f32 %v2611, %v1705
    %v2613 = vadd.f32 %v2612, %v1712
    %v2614 = vadd.f32 %v2613, %v1719
    %v2615 = vadd.f32 %v2614, %v1726
    %v2616 = vadd.f32 %v2615, %v1733
    %v2617 = vadd.f32 %v2616, %v1740
    %v2618 = vrot.slane %v2617, 4
    %v2619 = vadd.f32 %v2617, %v2618
    %v2620 = vrot.slane %v2619, 2
    %v2621 = vadd.f32 %v2619, %v2620
    %v2622 = vrot.slane %v2621, 1
    %v2623 = vadd.f32 %v2621, %v2622
    %v2624 = vadd.f32 %v1636, %v1643
    %v2625 = vadd.f32 %v2624, %v1650
    %v2626 = vadd.f32 %v2625, %v1657
    %v2627 = vadd.f32 %v2626, %v1664
    %v2628 = vadd.f32 %v2627, %v1671
    %v2629 = vadd.f32 %v2628, %v1678
    %v2630 = vadd.f32 %v2629, %v1685
    %v2631 = vadd.f32 %v2630, %v1692
    %v2632 = vadd.f32 %v2631, %v1699
    %v2633 = vadd.f32 %v2632, %v1706
    %v2634 = vadd.f32 %v2633, %v1713
    %v2635 = vadd.f32 %v2634, %v1720
    %v2636 = vadd.f32 %v2635, %v1727
    %v2637 = vadd.f32 %v2636, %v1734
    %v2638 = vadd.f32 %v2637, %v1741
    %v2639 = vrot.slane %v2638, 4
    %v2640 = vadd.f32 %v2638, %v2639
    %v2641 = vrot.slane %v2640, 2
    %v2642 = vadd.f32 %v2640, %v2641
    %v2643 = vrot.slane %v2642, 1
    %v2644 = vadd.f32 %v2642, %v2643
    %v2645 = vadd.f32 %v1637, %v1644
    %v2646 = vadd.f32 %v2645, %v1651
    %v2647 = vadd.f32 %v2646, %v1658
    %v2648 = vadd.f32 %v2647, %v1665
    %v2649 = vadd.f32 %v2648, %v1672
    %v2650 = vadd.f32 %v2649, %v1679
    %v2651 = vadd.f32 %v2650, %v1686
    %v2652 = vadd.f32 %v2651, %v1693
    %v2653 = vadd.f32 %v2652, %v1700
    %v2654 = vadd.f32 %v2653, %v1707
    %v2655 = vadd.f32 %v2654, %v1714
    %v2656 = vadd.f32 %v2655, %v1721
    %v2657 = vadd.f32 %v2656, %v1728
    %v2658 = vadd.f32 %v2657, %v1735
    %v2659 = vadd.f32 %v2658, %v1742
    %v2660 = vrot.slane %v2659, 4
    %v2661 = vadd.f32 %v2659, %v2660
    %v2662 = vrot.slane %v2661, 2
    %v2663 = vadd.f32 %v2661, %v2662
    %v2664 = vrot.slane %v2663, 1
    %v2665 = vadd.f32 %v2663, %v2664
    %v2666 = vadd.f32 %v1638, %v1645
    %v2667 = vadd.f32 %v2666, %v1652
    %v2668 = vadd.f32 %v2667, %v1659
    %v2669 = vadd.f32 %v2668, %v1666
    %v2670 = vadd.f32 %v2669, %v1673
    %v2671 = vadd.f32 %v2670, %v1680
    %v2672 = vadd.f32 %v2671, %v1687
    %v2673 = vadd.f32 %v2672, %v1694
    %v2674 = vadd.f32 %v2673, %v1701
    %v2675 = vadd.f32 %v2674, %v1708
    %v2676 = vadd.f32 %v2675, %v1715
    %v2677 = vadd.f32 %v2676, %v1722
    %v2678 = vadd.f32 %v2677, %v1729
    %v2679 = vadd.f32 %v2678, %v1736
    %v2680 = vadd.f32 %v2679, %v1743
    %v2681 = vrot.slane %v2680, 4
    %v2682 = vadd.f32 %v2680, %v2681
    %v2683 = vrot.slane %v2682, 2
    %v2684 = vadd.f32 %v2682, %v2683
    %v2685 = vrot.slane %v2684, 1
    %v2686 = vadd.f32 %v2684, %v2685
    %v2687 = vadd.f32 %v1639, %v1646
    %v2688 = vadd.f32 %v2687, %v1653
    %v2689 = vadd.f32 %v2688, %v1660
    %v2690 = vadd.f32 %v2689, %v1667
    %v2691 = vadd.f32 %v2690, %v1674
    %v2692 = vadd.f32 %v2691, %v1681
    %v2693 = vadd.f32 %v2692, %v1688
    %v2694 = vadd.f32 %v2693, %v1695
    %v2695 = vadd.f32 %v2694, %v1702
    %v2696 = vadd.f32 %v2695, %v1709
    %v2697 = vadd.f32 %v2696, %v1716
    %v2698 = vadd.f32 %v2697, %v1723
    %v2699 = vadd.f32 %v2698, %v1730
    %v2700 = vadd.f32 %v2699, %v1737
    %v2701 = vadd.f32 %v2700, %v1744
    %v2702 = vrot.slane %v2701, 4
    %v2703 = vadd.f32 %v2701, %v2702
    %v2704 = vrot.slane %v2703, 2
    %v2705 = vadd.f32 %v2703, %v2704
    %v2706 = vrot.slane %v2705, 1
    %v2707 = vadd.f32 %v2705, %v2706
    %v2708 = vsel %vm2544, %v1640, 0.0
    %v2709 = vsel %vm2544, %v1647, 0.0
    %v2710 = vadd.f32 %v2708, %v2709
    %v2711 = vsel %vm2544, %v1654, 0.0
    %v2712 = vadd.f32 %v2710, %v2711
    %v2713 = vsel %vm2544, %v1661, 0.0
    %v2714 = vadd.f32 %v2712, %v2713
    %v2715 = vsel %vm2544, %v1668, 0.0
    %v2716 = vadd.f32 %v2714, %v2715
    %v2717 = vsel %vm2544, %v1675, 0.0
    %v2718 = vadd.f32 %v2716, %v2717
    %v2719 = vsel %vm2544, %v1682, 0.0
    %v2720 = vadd.f32 %v2718, %v2719
    %v2721 = vsel %vm2544, %v1689, 0.0
    %v2722 = vadd.f32 %v2720, %v2721
    %v2723 = vsel %vm2544, %v1696, 0.0
    %v2724 = vadd.f32 %v2722, %v2723
    %v2725 = vsel %vm2544, %v1703, 0.0
    %v2726 = vadd.f32 %v2724, %v2725
    %v2727 = vsel %vm2544, %v1710, 0.0
    %v2728 = vadd.f32 %v2726, %v2727
    %v2729 = vsel %vm2544, %v1717, 0.0
    %v2730 = vadd.f32 %v2728, %v2729
    %v2731 = vsel %vm2544, %v1724, 0.0
    %v2732 = vadd.f32 %v2730, %v2731
    %v2733 = vsel %vm2544, %v1731, 0.0
    %v2734 = vadd.f32 %v2732, %v2733
    %v2735 = vsel %vm2544, %v1738, 0.0
    %v2736 = vadd.f32 %v2734, %v2735
    %v2737 = vsel %vm2544, %v1745, 0.0
    %v2738 = vadd.f32 %v2736, %v2737
    %v2739 = vrot.slane %v2738, 4
    %v2740 = vadd.f32 %v2738, %v2739
    %v2741 = vrot.slane %v2740, 2
    %v2742 = vadd.f32 %v2740, %v2741
    %v2743 = vrot.slane %v2742, 1
    %v2744 = vadd.f32 %v2742, %v2743
    %v2745 = vadd.f32 %v1746, %v1753
    %v2746 = vadd.f32 %v2745, %v1760
    %v2747 = vadd.f32 %v2746, %v1767
    %v2748 = vadd.f32 %v2747, %v1774
    %v2749 = vadd.f32 %v2748, %v1781
    %v2750 = vadd.f32 %v2749, %v1788
    %v2751 = vadd.f32 %v2750, %v1795
    %v2752 = vadd.f32 %v2751, %v1802
    %v2753 = vadd.f32 %v2752, %v1809
    %v2754 = vadd.f32 %v2753, %v1816
    %v2755 = vadd.f32 %v2754, %v1823
    %v2756 = vadd.f32 %v2755, %v1830
    %v2757 = vadd.f32 %v2756, %v1837
    %v2758 = vadd.f32 %v2757, %v1844
    %v2759 = vadd.f32 %v2758, %v1851
    %v2760 = vrot.slane %v2759, 4
    %v2761 = vadd.f32 %v2759, %v2760
    %v2762 = vrot.slane %v2761, 2
    %v2763 = vadd.f32 %v2761, %v2762
    %v2764 = vrot.slane %v2763, 1
    %v2765 = vadd.f32 %v2763, %v2764
    %v2766 = vadd.f32 %v1747, %v1754
    %v2767 = vadd.f32 %v2766, %v1761
    %v2768 = vadd.f32 %v2767, %v1768
    %v2769 = vadd.f32 %v2768, %v1775
    %v2770 = vadd.f32 %v2769, %v1782
    %v2771 = vadd.f32 %v2770, %v1789
    %v2772 = vadd.f32 %v2771, %v1796
    %v2773 = vadd.f32 %v2772, %v1803
    %v2774 = vadd.f32 %v2773, %v1810
    %v2775 = vadd.f32 %v2774, %v1817
    %v2776 = vadd.f32 %v2775, %v1824
    %v2777 = vadd.f32 %v2776, %v1831
    %v2778 = vadd.f32 %v2777, %v1838
    %v2779 = vadd.f32 %v2778, %v1845
    %v2780 = vadd.f32 %v2779, %v1852
    %v2781 = vrot.slane %v2780, 4
    %v2782 = vadd.f32 %v2780, %v2781
    %v2783 = vrot.slane %v2782, 2
    %v2784 = vadd.f32 %v2782, %v2783
    %v2785 = vrot.slane %v2784, 1
    %v2786 = vadd.f32 %v2784, %v2785
    %v2787 = vadd.f32 %v1748, %v1755
    %v2788 = vadd.f32 %v2787, %v1762
    %v2789 = vadd.f32 %v2788, %v1769
    %v2790 = vadd.f32 %v2789, %v1776
    %v2791 = vadd.f32 %v2790, %v1783
    %v2792 = vadd.f32 %v2791, %v1790
    %v2793 = vadd.f32 %v2792, %v1797
    %v2794 = vadd.f32 %v2793, %v1804
    %v2795 = vadd.f32 %v2794, %v1811
    %v2796 = vadd.f32 %v2795, %v1818
    %v2797 = vadd.f32 %v2796, %v1825
    %v2798 = vadd.f32 %v2797, %v1832
    %v2799 = vadd.f32 %v2798, %v1839
    %v2800 = vadd.f32 %v2799, %v1846
    %v2801 = vadd.f32 %v2800, %v1853
    %v2802 = vrot.slane %v2801, 4
    %v2803 = vadd.f32 %v2801, %v2802
    %v2804 = vrot.slane %v2803, 2
    %v2805 = vadd.f32 %v2803, %v2804
    %v2806 = vrot.slane %v2805, 1
    %v2807 = vadd.f32 %v2805, %v2806
    %v2808 = vadd.f32 %v1749, %v1756
    %v2809 = vadd.f32 %v2808, %v1763
    %v2810 = vadd.f32 %v2809, %v1770
    %v2811 = vadd.f32 %v2810, %v1777
    %v2812 = vadd.f32 %v2811, %v1784
    %v2813 = vadd.f32 %v2812, %v1791
    %v2814 = vadd.f32 %v2813, %v1798
    %v2815 = vadd.f32 %v2814, %v1805
    %v2816 = vadd.f32 %v2815, %v1812
    %v2817 = vadd.f32 %v2816, %v1819
    %v2818 = vadd.f32 %v2817, %v1826
    %v2819 = vadd.f32 %v2818, %v1833
    %v2820 = vadd.f32 %v2819, %v1840
    %v2821 = vadd.f32 %v2820, %v1847
    %v2822 = vadd.f32 %v2821, %v1854
    %v2823 = vrot.slane %v2822, 4
    %v2824 = vadd.f32 %v2822, %v2823
    %v2825 = vrot.slane %v2824, 2
    %v2826 = vadd.f32 %v2824, %v2825
    %v2827 = vrot.slane %v2826, 1
    %v2828 = vadd.f32 %v2826, %v2827
    %v2829 = vadd.f32 %v1750, %v1757
    %v2830 = vadd.f32 %v2829, %v1764
    %v2831 = vadd.f32 %v2830, %v1771
    %v2832 = vadd.f32 %v2831, %v1778
    %v2833 = vadd.f32 %v2832, %v1785
    %v2834 = vadd.f32 %v2833, %v1792
    %v2835 = vadd.f32 %v2834, %v1799
    %v2836 = vadd.f32 %v2835, %v1806
    %v2837 = vadd.f32 %v2836, %v1813
    %v2838 = vadd.f32 %v2837, %v1820
    %v2839 = vadd.f32 %v2838, %v1827
    %v2840 = vadd.f32 %v2839, %v1834
    %v2841 = vadd.f32 %v2840, %v1841
    %v2842 = vadd.f32 %v2841, %v1848
    %v2843 = vadd.f32 %v2842, %v1855
    %v2844 = vrot.slane %v2843, 4
    %v2845 = vadd.f32 %v2843, %v2844
    %v2846 = vrot.slane %v2845, 2
    %v2847 = vadd.f32 %v2845, %v2846
    %v2848 = vrot.slane %v2847, 1
    %v2849 = vadd.f32 %v2847, %v2848
    %v2850 = vadd.f32 %v1751, %v1758
    %v2851 = vadd.f32 %v2850, %v1765
    %v2852 = vadd.f32 %v2851, %v1772
    %v2853 = vadd.f32 %v2852, %v1779
    %v2854 = vadd.f32 %v2853, %v1786
    %v2855 = vadd.f32 %v2854, %v1793
    %v2856 = vadd.f32 %v2855, %v1800
    %v2857 = vadd.f32 %v2856, %v1807
    %v2858 = vadd.f32 %v2857, %v1814
    %v2859 = vadd.f32 %v2858, %v1821
    %v2860 = vadd.f32 %v2859, %v1828
    %v2861 = vadd.f32 %v2860, %v1835
    %v2862 = vadd.f32 %v2861, %v1842
    %v2863 = vadd.f32 %v2862, %v1849
    %v2864 = vadd.f32 %v2863, %v1856
    %v2865 = vrot.slane %v2864, 4
    %v2866 = vadd.f32 %v2864, %v2865
    %v2867 = vrot.slane %v2866, 2
    %v2868 = vadd.f32 %v2866, %v2867
    %v2869 = vrot.slane %v2868, 1
    %v2870 = vadd.f32 %v2868, %v2869
    %v2871 = vsel %vm2544, %v1752, 0.0
    %v2872 = vsel %vm2544, %v1759, 0.0
    %v2873 = vadd.f32 %v2871, %v2872
    %v2874 = vsel %vm2544, %v1766, 0.0
    %v2875 = vadd.f32 %v2873, %v2874
    %v2876 = vsel %vm2544, %v1773, 0.0
    %v2877 = vadd.f32 %v2875, %v2876
    %v2878 = vsel %vm2544, %v1780, 0.0
    %v2879 = vadd.f32 %v2877, %v2878
    %v2880 = vsel %vm2544, %v1787, 0.0
    %v2881 = vadd.f32 %v2879, %v2880
    %v2882 = vsel %vm2544, %v1794, 0.0
    %v2883 = vadd.f32 %v2881, %v2882
    %v2884 = vsel %vm2544, %v1801, 0.0
    %v2885 = vadd.f32 %v2883, %v2884
    %v2886 = vsel %vm2544, %v1808, 0.0
    %v2887 = vadd.f32 %v2885, %v2886
    %v2888 = vsel %vm2544, %v1815, 0.0
    %v2889 = vadd.f32 %v2887, %v2888
    %v2890 = vsel %vm2544, %v1822, 0.0
    %v2891 = vadd.f32 %v2889, %v2890
    %v2892 = vsel %vm2544, %v1829, 0.0
    %v2893 = vadd.f32 %v2891, %v2892
    %v2894 = vsel %vm2544, %v1836, 0.0
    %v2895 = vadd.f32 %v2893, %v2894
    %v2896 = vsel %vm2544, %v1843, 0.0
    %v2897 = vadd.f32 %v2895, %v2896
    %v2898 = vsel %vm2544, %v1850, 0.0
    %v2899 = vadd.f32 %v2897, %v2898
    %v2900 = vsel %vm2544, %v1857, 0.0
    %v2901 = vadd.f32 %v2899, %v2900
    %v2902 = vrot.slane %v2901, 4
    %v2903 = vadd.f32 %v2901, %v2902
    %v2904 = vrot.slane %v2903, 2
    %v2905 = vadd.f32 %v2903, %v2904
    %v2906 = vrot.slane %v2905, 1
    %v2907 = vadd.f32 %v2905, %v2906
    %v2908 = vadd.f32 %v1858, %v1865
    %v2909 = vadd.f32 %v2908, %v1872
    %v2910 = vadd.f32 %v2909, %v1879
    %v2911 = vadd.f32 %v2910, %v1886
    %v2912 = vadd.f32 %v2911, %v1893
    %v2913 = vadd.f32 %v2912, %v1900
    %v2914 = vadd.f32 %v2913, %v1907
    %v2915 = vadd.f32 %v2914, %v1914
    %v2916 = vadd.f32 %v2915, %v1921
    %v2917 = vadd.f32 %v2916, %v1928
    %v2918 = vadd.f32 %v2917, %v1935
    %v2919 = vadd.f32 %v2918, %v1942
    %v2920 = vadd.f32 %v2919, %v1949
    %v2921 = vadd.f32 %v2920, %v1956
    %v2922 = vadd.f32 %v2921, %v1963
    %v2923 = vrot.slane %v2922, 4
    %v2924 = vadd.f32 %v2922, %v2923
    %v2925 = vrot.slane %v2924, 2
    %v2926 = vadd.f32 %v2924, %v2925
    %v2927 = vrot.slane %v2926, 1
    %v2928 = vadd.f32 %v2926, %v2927
    %v2929 = vadd.f32 %v1859, %v1866
    %v2930 = vadd.f32 %v2929, %v1873
    %v2931 = vadd.f32 %v2930, %v1880
    %v2932 = vadd.f32 %v2931, %v1887
    %v2933 = vadd.f32 %v2932, %v1894
    %v2934 = vadd.f32 %v2933, %v1901
    %v2935 = vadd.f32 %v2934, %v1908
    %v2936 = vadd.f32 %v2935, %v1915
    %v2937 = vadd.f32 %v2936, %v1922
    %v2938 = vadd.f32 %v2937, %v1929
    %v2939 = vadd.f32 %v2938, %v1936
    %v2940 = vadd.f32 %v2939, %v1943
    %v2941 = vadd.f32 %v2940, %v1950
    %v2942 = vadd.f32 %v2941, %v1957
    %v2943 = vadd.f32 %v2942, %v1964
    %v2944 = vrot.slane %v2943, 4
    %v2945 = vadd.f32 %v2943, %v2944
    %v2946 = vrot.slane %v2945, 2
    %v2947 = vadd.f32 %v2945, %v2946
    %v2948 = vrot.slane %v2947, 1
    %v2949 = vadd.f32 %v2947, %v2948
    %v2950 = vadd.f32 %v1860, %v1867
    %v2951 = vadd.f32 %v2950, %v1874
    %v2952 = vadd.f32 %v2951, %v1881
    %v2953 = vadd.f32 %v2952, %v1888
    %v2954 = vadd.f32 %v2953, %v1895
    %v2955 = vadd.f32 %v2954, %v1902
    %v2956 = vadd.f32 %v2955, %v1909
    %v2957 = vadd.f32 %v2956, %v1916
    %v2958 = vadd.f32 %v2957, %v1923
    %v2959 = vadd.f32 %v2958, %v1930
    %v2960 = vadd.f32 %v2959, %v1937
    %v2961 = vadd.f32 %v2960, %v1944
    %v2962 = vadd.f32 %v2961, %v1951
    %v2963 = vadd.f32 %v2962, %v1958
    %v2964 = vadd.f32 %v2963, %v1965
    %v2965 = vrot.slane %v2964, 4
    %v2966 = vadd.f32 %v2964, %v2965
    %v2967 = vrot.slane %v2966, 2
    %v2968 = vadd.f32 %v2966, %v2967
    %v2969 = vrot.slane %v2968, 1
    %v2970 = vadd.f32 %v2968, %v2969
    %v2971 = vadd.f32 %v1861, %v1868
    %v2972 = vadd.f32 %v2971, %v1875
    %v2973 = vadd.f32 %v2972, %v1882
    %v2974 = vadd.f32 %v2973, %v1889
    %v2975 = vadd.f32 %v2974, %v1896
    %v2976 = vadd.f32 %v2975, %v1903
    %v2977 = vadd.f32 %v2976, %v1910
    %v2978 = vadd.f32 %v2977, %v1917
    %v2979 = vadd.f32 %v2978, %v1924
    %v2980 = vadd.f32 %v2979, %v1931
    %v2981 = vadd.f32 %v2980, %v1938
    %v2982 = vadd.f32 %v2981, %v1945
    %v2983 = vadd.f32 %v2982, %v1952
    %v2984 = vadd.f32 %v2983, %v1959
    %v2985 = vadd.f32 %v2984, %v1966
    %v2986 = vrot.slane %v2985, 4
    %v2987 = vadd.f32 %v2985, %v2986
    %v2988 = vrot.slane %v2987, 2
    %v2989 = vadd.f32 %v2987, %v2988
    %v2990 = vrot.slane %v2989, 1
    %v2991 = vadd.f32 %v2989, %v2990
    %v2992 = vadd.f32 %v1862, %v1869
    %v2993 = vadd.f32 %v2992, %v1876
    %v2994 = vadd.f32 %v2993, %v1883
    %v2995 = vadd.f32 %v2994, %v1890
    %v2996 = vadd.f32 %v2995, %v1897
    %v2997 = vadd.f32 %v2996, %v1904
    %v2998 = vadd.f32 %v2997, %v1911
    %v2999 = vadd.f32 %v2998, %v1918
    %v3000 = vadd.f32 %v2999, %v1925
    %v3001 = vadd.f32 %v3000, %v1932
    %v3002 = vadd.f32 %v3001, %v1939
    %v3003 = vadd.f32 %v3002, %v1946
    %v3004 = vadd.f32 %v3003, %v1953
    %v3005 = vadd.f32 %v3004, %v1960
    %v3006 = vadd.f32 %v3005, %v1967
    %v3007 = vrot.slane %v3006, 4
    %v3008 = vadd.f32 %v3006, %v3007
    %v3009 = vrot.slane %v3008, 2
    %v3010 = vadd.f32 %v3008, %v3009
    %v3011 = vrot.slane %v3010, 1
    %v3012 = vadd.f32 %v3010, %v3011
    %v3013 = vadd.f32 %v1863, %v1870
    %v3014 = vadd.f32 %v3013, %v1877
    %v3015 = vadd.f32 %v3014, %v1884
    %v3016 = vadd.f32 %v3015, %v1891
    %v3017 = vadd.f32 %v3016, %v1898
    %v3018 = vadd.f32 %v3017, %v1905
    %v3019 = vadd.f32 %v3018, %v1912
    %v3020 = vadd.f32 %v3019, %v1919
    %v3021 = vadd.f32 %v3020, %v1926
    %v3022 = vadd.f32 %v3021, %v1933
    %v3023 = vadd.f32 %v3022, %v1940
    %v3024 = vadd.f32 %v3023, %v1947
    %v3025 = vadd.f32 %v3024, %v1954
    %v3026 = vadd.f32 %v3025, %v1961
    %v3027 = vadd.f32 %v3026, %v1968
    %v3028 = vrot.slane %v3027, 4
    %v3029 = vadd.f32 %v3027, %v3028
    %v3030 = vrot.slane %v3029, 2
    %v3031 = vadd.f32 %v3029, %v3030
    %v3032 = vrot.slane %v3031, 1
    %v3033 = vadd.f32 %v3031, %v3032
    %v3034 = vsel %vm2544, %v1864, 0.0
    %v3035 = vsel %vm2544, %v1871, 0.0
    %v3036 = vadd.f32 %v3034, %v3035
    %v3037 = vsel %vm2544, %v1878, 0.0
    %v3038 = vadd.f32 %v3036, %v3037
    %v3039 = vsel %vm2544, %v1885, 0.0
    %v3040 = vadd.f32 %v3038, %v3039
    %v3041 = vsel %vm2544, %v1892, 0.0
    %v3042 = vadd.f32 %v3040, %v3041
    %v3043 = vsel %vm2544, %v1899, 0.0
    %v3044 = vadd.f32 %v3042, %v3043
    %v3045 = vsel %vm2544, %v1906, 0.0
    %v3046 = vadd.f32 %v3044, %v3045
    %v3047 = vsel %vm2544, %v1913, 0.0
    %v3048 = vadd.f32 %v3046, %v3047
    %v3049 = vsel %vm2544, %v1920, 0.0
    %v3050 = vadd.f32 %v3048, %v3049
    %v3051 = vsel %vm2544, %v1927, 0.0
    %v3052 = vadd.f32 %v3050, %v3051
    %v3053 = vsel %vm2544, %v1934, 0.0
    %v3054 = vadd.f32 %v3052, %v3053
    %v3055 = vsel %vm2544, %v1941, 0.0
    %v3056 = vadd.f32 %v3054, %v3055
    %v3057 = vsel %vm2544, %v1948, 0.0
    %v3058 = vadd.f32 %v3056, %v3057
    %v3059 = vsel %vm2544, %v1955, 0.0
    %v3060 = vadd.f32 %v3058, %v3059
    %v3061 = vsel %vm2544, %v1962, 0.0
    %v3062 = vadd.f32 %v3060, %v3061
    %v3063 = vsel %vm2544, %v1969, 0.0
    %v3064 = vadd.f32 %v3062, %v3063
    %v3065 = vrot.slane %v3064, 4
    %v3066 = vadd.f32 %v3064, %v3065
    %v3067 = vrot.slane %v3066, 2
    %v3068 = vadd.f32 %v3066, %v3067
    %v3069 = vrot.slane %v3068, 1
    %v3070 = vadd.f32 %v3068, %v3069
    %v3071 = vadd.f32 %v1970, %v1977
    %v3072 = vadd.f32 %v3071, %v1984
    %v3073 = vadd.f32 %v3072, %v1991
    %v3074 = vadd.f32 %v3073, %v1998
    %v3075 = vadd.f32 %v3074, %v2005
    %v3076 = vadd.f32 %v3075, %v2012
    %v3077 = vadd.f32 %v3076, %v2019
    %v3078 = vadd.f32 %v3077, %v2026
    %v3079 = vadd.f32 %v3078, %v2033
    %v3080 = vadd.f32 %v3079, %v2040
    %v3081 = vadd.f32 %v3080, %v2047
    %v3082 = vadd.f32 %v3081, %v2054
    %v3083 = vadd.f32 %v3082, %v2061
    %v3084 = vadd.f32 %v3083, %v2068
    %v3085 = vadd.f32 %v3084, %v2075
    %v3086 = vrot.slane %v3085, 4
    %v3087 = vadd.f32 %v3085, %v3086
    %v3088 = vrot.slane %v3087, 2
    %v3089 = vadd.f32 %v3087, %v3088
    %v3090 = vrot.slane %v3089, 1
    %v3091 = vadd.f32 %v3089, %v3090
    %v3092 = vadd.f32 %v1971, %v1978
    %v3093 = vadd.f32 %v3092, %v1985
    %v3094 = vadd.f32 %v3093, %v1992
    %v3095 = vadd.f32 %v3094, %v1999
    %v3096 = vadd.f32 %v3095, %v2006
    %v3097 = vadd.f32 %v3096, %v2013
    %v3098 = vadd.f32 %v3097, %v2020
    %v3099 = vadd.f32 %v3098, %v2027
    %v3100 = vadd.f32 %v3099, %v2034
    %v3101 = vadd.f32 %v3100, %v2041
    %v3102 = vadd.f32 %v3101, %v2048
    %v3103 = vadd.f32 %v3102, %v2055
    %v3104 = vadd.f32 %v3103, %v2062
    %v3105 = vadd.f32 %v3104, %v2069
    %v3106 = vadd.f32 %v3105, %v2076
    %v3107 = vrot.slane %v3106, 4
    %v3108 = vadd.f32 %v3106, %v3107
    %v3109 = vrot.slane %v3108, 2
    %v3110 = vadd.f32 %v3108, %v3109
    %v3111 = vrot.slane %v3110, 1
    %v3112 = vadd.f32 %v3110, %v3111
    %v3113 = vadd.f32 %v1972, %v1979
    %v3114 = vadd.f32 %v3113, %v1986
    %v3115 = vadd.f32 %v3114, %v1993
    %v3116 = vadd.f32 %v3115, %v2000
    %v3117 = vadd.f32 %v3116, %v2007
    %v3118 = vadd.f32 %v3117, %v2014
    %v3119 = vadd.f32 %v3118, %v2021
    %v3120 = vadd.f32 %v3119, %v2028
    %v3121 = vadd.f32 %v3120, %v2035
    %v3122 = vadd.f32 %v3121, %v2042
    %v3123 = vadd.f32 %v3122, %v2049
    %v3124 = vadd.f32 %v3123, %v2056
    %v3125 = vadd.f32 %v3124, %v2063
    %v3126 = vadd.f32 %v3125, %v2070
    %v3127 = vadd.f32 %v3126, %v2077
    %v3128 = vrot.slane %v3127, 4
    %v3129 = vadd.f32 %v3127, %v3128
    %v3130 = vrot.slane %v3129, 2
    %v3131 = vadd.f32 %v3129, %v3130
    %v3132 = vrot.slane %v3131, 1
    %v3133 = vadd.f32 %v3131, %v3132
    %v3134 = vadd.f32 %v1973, %v1980
    %v3135 = vadd.f32 %v3134, %v1987
    %v3136 = vadd.f32 %v3135, %v1994
    %v3137 = vadd.f32 %v3136, %v2001
    %v3138 = vadd.f32 %v3137, %v2008
    %v3139 = vadd.f32 %v3138, %v2015
    %v3140 = vadd.f32 %v3139, %v2022
    %v3141 = vadd.f32 %v3140, %v2029
    %v3142 = vadd.f32 %v3141, %v2036
    %v3143 = vadd.f32 %v3142, %v2043
    %v3144 = vadd.f32 %v3143, %v2050
    %v3145 = vadd.f32 %v3144, %v2057
    %v3146 = vadd.f32 %v3145, %v2064
    %v3147 = vadd.f32 %v3146, %v2071
    %v3148 = vadd.f32 %v3147, %v2078
    %v3149 = vrot.slane %v3148, 4
    %v3150 = vadd.f32 %v3148, %v3149
    %v3151 = vrot.slane %v3150, 2
    %v3152 = vadd.f32 %v3150, %v3151
    %v3153 = vrot.slane %v3152, 1
    %v3154 = vadd.f32 %v3152, %v3153
    %v3155 = vadd.f32 %v1974, %v1981
    %v3156 = vadd.f32 %v3155, %v1988
    %v3157 = vadd.f32 %v3156, %v1995
    %v3158 = vadd.f32 %v3157, %v2002
    %v3159 = vadd.f32 %v3158, %v2009
    %v3160 = vadd.f32 %v3159, %v2016
    %v3161 = vadd.f32 %v3160, %v2023
    %v3162 = vadd.f32 %v3161, %v2030
    %v3163 = vadd.f32 %v3162, %v2037
    %v3164 = vadd.f32 %v3163, %v2044
    %v3165 = vadd.f32 %v3164, %v2051
    %v3166 = vadd.f32 %v3165, %v2058
    %v3167 = vadd.f32 %v3166, %v2065
    %v3168 = vadd.f32 %v3167, %v2072
    %v3169 = vadd.f32 %v3168, %v2079
    %v3170 = vrot.slane %v3169, 4
    %v3171 = vadd.f32 %v3169, %v3170
    %v3172 = vrot.slane %v3171, 2
    %v3173 = vadd.f32 %v3171, %v3172
    %v3174 = vrot.slane %v3173, 1
    %v3175 = vadd.f32 %v3173, %v3174
    %v3176 = vadd.f32 %v1975, %v1982
    %v3177 = vadd.f32 %v3176, %v1989
    %v3178 = vadd.f32 %v3177, %v1996
    %v3179 = vadd.f32 %v3178, %v2003
    %v3180 = vadd.f32 %v3179, %v2010
    %v3181 = vadd.f32 %v3180, %v2017
    %v3182 = vadd.f32 %v3181, %v2024
    %v3183 = vadd.f32 %v3182, %v2031
    %v3184 = vadd.f32 %v3183, %v2038
    %v3185 = vadd.f32 %v3184, %v2045
    %v3186 = vadd.f32 %v3185, %v2052
    %v3187 = vadd.f32 %v3186, %v2059
    %v3188 = vadd.f32 %v3187, %v2066
    %v3189 = vadd.f32 %v3188, %v2073
    %v3190 = vadd.f32 %v3189, %v2080
    %v3191 = vrot.slane %v3190, 4
    %v3192 = vadd.f32 %v3190, %v3191
    %v3193 = vrot.slane %v3192, 2
    %v3194 = vadd.f32 %v3192, %v3193
    %v3195 = vrot.slane %v3194, 1
    %v3196 = vadd.f32 %v3194, %v3195
    %v3197 = vsel %vm2544, %v1976, 0.0
    %v3198 = vsel %vm2544, %v1983, 0.0
    %v3199 = vadd.f32 %v3197, %v3198
    %v3200 = vsel %vm2544, %v1990, 0.0
    %v3201 = vadd.f32 %v3199, %v3200
    %v3202 = vsel %vm2544, %v1997, 0.0
    %v3203 = vadd.f32 %v3201, %v3202
    %v3204 = vsel %vm2544, %v2004, 0.0
    %v3205 = vadd.f32 %v3203, %v3204
    %v3206 = vsel %vm2544, %v2011, 0.0
    %v3207 = vadd.f32 %v3205, %v3206
    %v3208 = vsel %vm2544, %v2018, 0.0
    %v3209 = vadd.f32 %v3207, %v3208
    %v3210 = vsel %vm2544, %v2025, 0.0
    %v3211 = vadd.f32 %v3209, %v3210
    %v3212 = vsel %vm2544, %v2032, 0.0
    %v3213 = vadd.f32 %v3211, %v3212
    %v3214 = vsel %vm2544, %v2039, 0.0
    %v3215 = vadd.f32 %v3213, %v3214
    %v3216 = vsel %vm2544, %v2046, 0.0
    %v3217 = vadd.f32 %v3215, %v3216
    %v3218 = vsel %vm2544, %v2053, 0.0
    %v3219 = vadd.f32 %v3217, %v3218
    %v3220 = vsel %vm2544, %v2060, 0.0
    %v3221 = vadd.f32 %v3219, %v3220
    %v3222 = vsel %vm2544, %v2067, 0.0
    %v3223 = vadd.f32 %v3221, %v3222
    %v3224 = vsel %vm2544, %v2074, 0.0
    %v3225 = vadd.f32 %v3223, %v3224
    %v3226 = vsel %vm2544, %v2081, 0.0
    %v3227 = vadd.f32 %v3225, %v3226
    %v3228 = vrot.slane %v3227, 4
    %v3229 = vadd.f32 %v3227, %v3228
    %v3230 = vrot.slane %v3229, 2
    %v3231 = vadd.f32 %v3229, %v3230
    %v3232 = vrot.slane %v3231, 1
    %v3233 = vadd.f32 %v3231, %v3232
    %v3234 = vadd.f32 %v2082, %v2089
    %v3235 = vadd.f32 %v3234, %v2096
    %v3236 = vadd.f32 %v3235, %v2103
    %v3237 = vadd.f32 %v3236, %v2110
    %v3238 = vadd.f32 %v3237, %v2117
    %v3239 = vadd.f32 %v3238, %v2124
    %v3240 = vadd.f32 %v3239, %v2131
    %v3241 = vadd.f32 %v3240, %v2138
    %v3242 = vadd.f32 %v3241, %v2145
    %v3243 = vadd.f32 %v3242, %v2152
    %v3244 = vadd.f32 %v3243, %v2159
    %v3245 = vadd.f32 %v3244, %v2166
    %v3246 = vadd.f32 %v3245, %v2173
    %v3247 = vadd.f32 %v3246, %v2180
    %v3248 = vadd.f32 %v3247, %v2187
    %v3249 = vrot.slane %v3248, 4
    %v3250 = vadd.f32 %v3248, %v3249
    %v3251 = vrot.slane %v3250, 2
    %v3252 = vadd.f32 %v3250, %v3251
    %v3253 = vrot.slane %v3252, 1
    %v3254 = vadd.f32 %v3252, %v3253
    %v3255 = vadd.f32 %v2083, %v2090
    %v3256 = vadd.f32 %v3255, %v2097
    %v3257 = vadd.f32 %v3256, %v2104
    %v3258 = vadd.f32 %v3257, %v2111
    %v3259 = vadd.f32 %v3258, %v2118
    %v3260 = vadd.f32 %v3259, %v2125
    %v3261 = vadd.f32 %v3260, %v2132
    %v3262 = vadd.f32 %v3261, %v2139
    %v3263 = vadd.f32 %v3262, %v2146
    %v3264 = vadd.f32 %v3263, %v2153
    %v3265 = vadd.f32 %v3264, %v2160
    %v3266 = vadd.f32 %v3265, %v2167
    %v3267 = vadd.f32 %v3266, %v2174
    %v3268 = vadd.f32 %v3267, %v2181
    %v3269 = vadd.f32 %v3268, %v2188
    %v3270 = vrot.slane %v3269, 4
    %v3271 = vadd.f32 %v3269, %v3270
    %v3272 = vrot.slane %v3271, 2
    %v3273 = vadd.f32 %v3271, %v3272
    %v3274 = vrot.slane %v3273, 1
    %v3275 = vadd.f32 %v3273, %v3274
    %v3276 = vadd.f32 %v2084, %v2091
    %v3277 = vadd.f32 %v3276, %v2098
    %v3278 = vadd.f32 %v3277, %v2105
    %v3279 = vadd.f32 %v3278, %v2112
    %v3280 = vadd.f32 %v3279, %v2119
    %v3281 = vadd.f32 %v3280, %v2126
    %v3282 = vadd.f32 %v3281, %v2133
    %v3283 = vadd.f32 %v3282, %v2140
    %v3284 = vadd.f32 %v3283, %v2147
    %v3285 = vadd.f32 %v3284, %v2154
    %v3286 = vadd.f32 %v3285, %v2161
    %v3287 = vadd.f32 %v3286, %v2168
    %v3288 = vadd.f32 %v3287, %v2175
    %v3289 = vadd.f32 %v3288, %v2182
    %v3290 = vadd.f32 %v3289, %v2189
    %v3291 = vrot.slane %v3290, 4
    %v3292 = vadd.f32 %v3290, %v3291
    %v3293 = vrot.slane %v3292, 2
    %v3294 = vadd.f32 %v3292, %v3293
    %v3295 = vrot.slane %v3294, 1
    %v3296 = vadd.f32 %v3294, %v3295
    %v3297 = vadd.f32 %v2085, %v2092
    %v3298 = vadd.f32 %v3297, %v2099
    %v3299 = vadd.f32 %v3298, %v2106
    %v3300 = vadd.f32 %v3299, %v2113
    %v3301 = vadd.f32 %v3300, %v2120
    %v3302 = vadd.f32 %v3301, %v2127
    %v3303 = vadd.f32 %v3302, %v2134
    %v3304 = vadd.f32 %v3303, %v2141
    %v3305 = vadd.f32 %v3304, %v2148
    %v3306 = vadd.f32 %v3305, %v2155
    %v3307 = vadd.f32 %v3306, %v2162
    %v3308 = vadd.f32 %v3307, %v2169
    %v3309 = vadd.f32 %v3308, %v2176
    %v3310 = vadd.f32 %v3309, %v2183
    %v3311 = vadd.f32 %v3310, %v2190
    %v3312 = vrot.slane %v3311, 4
    %v3313 = vadd.f32 %v3311, %v3312
    %v3314 = vrot.slane %v3313, 2
    %v3315 = vadd.f32 %v3313, %v3314
    %v3316 = vrot.slane %v3315, 1
    %v3317 = vadd.f32 %v3315, %v3316
    %v3318 = vadd.f32 %v2086, %v2093
    %v3319 = vadd.f32 %v3318, %v2100
    %v3320 = vadd.f32 %v3319, %v2107
    %v3321 = vadd.f32 %v3320, %v2114
    %v3322 = vadd.f32 %v3321, %v2121
    %v3323 = vadd.f32 %v3322, %v2128
    %v3324 = vadd.f32 %v3323, %v2135
    %v3325 = vadd.f32 %v3324, %v2142
    %v3326 = vadd.f32 %v3325, %v2149
    %v3327 = vadd.f32 %v3326, %v2156
    %v3328 = vadd.f32 %v3327, %v2163
    %v3329 = vadd.f32 %v3328, %v2170
    %v3330 = vadd.f32 %v3329, %v2177
    %v3331 = vadd.f32 %v3330, %v2184
    %v3332 = vadd.f32 %v3331, %v2191
    %v3333 = vrot.slane %v3332, 4
    %v3334 = vadd.f32 %v3332, %v3333
    %v3335 = vrot.slane %v3334, 2
    %v3336 = vadd.f32 %v3334, %v3335
    %v3337 = vrot.slane %v3336, 1
    %v3338 = vadd.f32 %v3336, %v3337
    %v3339 = vadd.f32 %v2087, %v2094
    %v3340 = vadd.f32 %v3339, %v2101
    %v3341 = vadd.f32 %v3340, %v2108
    %v3342 = vadd.f32 %v3341, %v2115
    %v3343 = vadd.f32 %v3342, %v2122
    %v3344 = vadd.f32 %v3343, %v2129
    %v3345 = vadd.f32 %v3344, %v2136
    %v3346 = vadd.f32 %v3345, %v2143
    %v3347 = vadd.f32 %v3346, %v2150
    %v3348 = vadd.f32 %v3347, %v2157
    %v3349 = vadd.f32 %v3348, %v2164
    %v3350 = vadd.f32 %v3349, %v2171
    %v3351 = vadd.f32 %v3350, %v2178
    %v3352 = vadd.f32 %v3351, %v2185
    %v3353 = vadd.f32 %v3352, %v2192
    %v3354 = vrot.slane %v3353, 4
    %v3355 = vadd.f32 %v3353, %v3354
    %v3356 = vrot.slane %v3355, 2
    %v3357 = vadd.f32 %v3355, %v3356
    %v3358 = vrot.slane %v3357, 1
    %v3359 = vadd.f32 %v3357, %v3358
    %v3360 = vsel %vm2544, %v2088, 0.0
    %v3361 = vsel %vm2544, %v2095, 0.0
    %v3362 = vadd.f32 %v3360, %v3361
    %v3363 = vsel %vm2544, %v2102, 0.0
    %v3364 = vadd.f32 %v3362, %v3363
    %v3365 = vsel %vm2544, %v2109, 0.0
    %v3366 = vadd.f32 %v3364, %v3365
    %v3367 = vsel %vm2544, %v2116, 0.0
    %v3368 = vadd.f32 %v3366, %v3367
    %v3369 = vsel %vm2544, %v2123, 0.0
    %v3370 = vadd.f32 %v3368, %v3369
    %v3371 = vsel %vm2544, %v2130, 0.0
    %v3372 = vadd.f32 %v3370, %v3371
    %v3373 = vsel %vm2544, %v2137, 0.0
    %v3374 = vadd.f32 %v3372, %v3373
    %v3375 = vsel %vm2544, %v2144, 0.0
    %v3376 = vadd.f32 %v3374, %v3375
    %v3377 = vsel %vm2544, %v2151, 0.0
    %v3378 = vadd.f32 %v3376, %v3377
    %v3379 = vsel %vm2544, %v2158, 0.0
    %v3380 = vadd.f32 %v3378, %v3379
    %v3381 = vsel %vm2544, %v2165, 0.0
    %v3382 = vadd.f32 %v3380, %v3381
    %v3383 = vsel %vm2544, %v2172, 0.0
    %v3384 = vadd.f32 %v3382, %v3383
    %v3385 = vsel %vm2544, %v2179, 0.0
    %v3386 = vadd.f32 %v3384, %v3385
    %v3387 = vsel %vm2544, %v2186, 0.0
    %v3388 = vadd.f32 %v3386, %v3387
    %v3389 = vsel %vm2544, %v2193, 0.0
    %v3390 = vadd.f32 %v3388, %v3389
    %v3391 = vrot.slane %v3390, 4
    %v3392 = vadd.f32 %v3390, %v3391
    %v3393 = vrot.slane %v3392, 2
    %v3394 = vadd.f32 %v3392, %v3393
    %v3395 = vrot.slane %v3394, 1
    %v3396 = vadd.f32 %v3394, %v3395
    %v3397 = vadd.f32 %v2194, %v2201
    %v3398 = vadd.f32 %v3397, %v2208
    %v3399 = vadd.f32 %v3398, %v2215
    %v3400 = vadd.f32 %v3399, %v2222
    %v3401 = vadd.f32 %v3400, %v2229
    %v3402 = vadd.f32 %v3401, %v2236
    %v3403 = vadd.f32 %v3402, %v2243
    %v3404 = vadd.f32 %v3403, %v2250
    %v3405 = vadd.f32 %v3404, %v2257
    %v3406 = vadd.f32 %v3405, %v2264
    %v3407 = vadd.f32 %v3406, %v2271
    %v3408 = vadd.f32 %v3407, %v2278
    %v3409 = vadd.f32 %v3408, %v2285
    %v3410 = vadd.f32 %v3409, %v2292
    %v3411 = vadd.f32 %v3410, %v2299
    %v3412 = vrot.slane %v3411, 4
    %v3413 = vadd.f32 %v3411, %v3412
    %v3414 = vrot.slane %v3413, 2
    %v3415 = vadd.f32 %v3413, %v3414
    %v3416 = vrot.slane %v3415, 1
    %v3417 = vadd.f32 %v3415, %v3416
    %v3418 = vadd.f32 %v2195, %v2202
    %v3419 = vadd.f32 %v3418, %v2209
    %v3420 = vadd.f32 %v3419, %v2216
    %v3421 = vadd.f32 %v3420, %v2223
    %v3422 = vadd.f32 %v3421, %v2230
    %v3423 = vadd.f32 %v3422, %v2237
    %v3424 = vadd.f32 %v3423, %v2244
    %v3425 = vadd.f32 %v3424, %v2251
    %v3426 = vadd.f32 %v3425, %v2258
    %v3427 = vadd.f32 %v3426, %v2265
    %v3428 = vadd.f32 %v3427, %v2272
    %v3429 = vadd.f32 %v3428, %v2279
    %v3430 = vadd.f32 %v3429, %v2286
    %v3431 = vadd.f32 %v3430, %v2293
    %v3432 = vadd.f32 %v3431, %v2300
    %v3433 = vrot.slane %v3432, 4
    %v3434 = vadd.f32 %v3432, %v3433
    %v3435 = vrot.slane %v3434, 2
    %v3436 = vadd.f32 %v3434, %v3435
    %v3437 = vrot.slane %v3436, 1
    %v3438 = vadd.f32 %v3436, %v3437
    %v3439 = vadd.f32 %v2196, %v2203
    %v3440 = vadd.f32 %v3439, %v2210
    %v3441 = vadd.f32 %v3440, %v2217
    %v3442 = vadd.f32 %v3441, %v2224
    %v3443 = vadd.f32 %v3442, %v2231
    %v3444 = vadd.f32 %v3443, %v2238
    %v3445 = vadd.f32 %v3444, %v2245
    %v3446 = vadd.f32 %v3445, %v2252
    %v3447 = vadd.f32 %v3446, %v2259
    %v3448 = vadd.f32 %v3447, %v2266
    %v3449 = vadd.f32 %v3448, %v2273
    %v3450 = vadd.f32 %v3449, %v2280
    %v3451 = vadd.f32 %v3450, %v2287
    %v3452 = vadd.f32 %v3451, %v2294
    %v3453 = vadd.f32 %v3452, %v2301
    %v3454 = vrot.slane %v3453, 4
    %v3455 = vadd.f32 %v3453, %v3454
    %v3456 = vrot.slane %v3455, 2
    %v3457 = vadd.f32 %v3455, %v3456
    %v3458 = vrot.slane %v3457, 1
    %v3459 = vadd.f32 %v3457, %v3458
    %v3460 = vadd.f32 %v2197, %v2204
    %v3461 = vadd.f32 %v3460, %v2211
    %v3462 = vadd.f32 %v3461, %v2218
    %v3463 = vadd.f32 %v3462, %v2225
    %v3464 = vadd.f32 %v3463, %v2232
    %v3465 = vadd.f32 %v3464, %v2239
    %v3466 = vadd.f32 %v3465, %v2246
    %v3467 = vadd.f32 %v3466, %v2253
    %v3468 = vadd.f32 %v3467, %v2260
    %v3469 = vadd.f32 %v3468, %v2267
    %v3470 = vadd.f32 %v3469, %v2274
    %v3471 = vadd.f32 %v3470, %v2281
    %v3472 = vadd.f32 %v3471, %v2288
    %v3473 = vadd.f32 %v3472, %v2295
    %v3474 = vadd.f32 %v3473, %v2302
    %v3475 = vrot.slane %v3474, 4
    %v3476 = vadd.f32 %v3474, %v3475
    %v3477 = vrot.slane %v3476, 2
    %v3478 = vadd.f32 %v3476, %v3477
    %v3479 = vrot.slane %v3478, 1
    %v3480 = vadd.f32 %v3478, %v3479
    %v3481 = vadd.f32 %v2198, %v2205
    %v3482 = vadd.f32 %v3481, %v2212
    %v3483 = vadd.f32 %v3482, %v2219
    %v3484 = vadd.f32 %v3483, %v2226
    %v3485 = vadd.f32 %v3484, %v2233
    %v3486 = vadd.f32 %v3485, %v2240
    %v3487 = vadd.f32 %v3486, %v2247
    %v3488 = vadd.f32 %v3487, %v2254
    %v3489 = vadd.f32 %v3488, %v2261
    %v3490 = vadd.f32 %v3489, %v2268
    %v3491 = vadd.f32 %v3490, %v2275
    %v3492 = vadd.f32 %v3491, %v2282
    %v3493 = vadd.f32 %v3492, %v2289
    %v3494 = vadd.f32 %v3493, %v2296
    %v3495 = vadd.f32 %v3494, %v2303
    %v3496 = vrot.slane %v3495, 4
    %v3497 = vadd.f32 %v3495, %v3496
    %v3498 = vrot.slane %v3497, 2
    %v3499 = vadd.f32 %v3497, %v3498
    %v3500 = vrot.slane %v3499, 1
    %v3501 = vadd.f32 %v3499, %v3500
    %v3502 = vadd.f32 %v2199, %v2206
    %v3503 = vadd.f32 %v3502, %v2213
    %v3504 = vadd.f32 %v3503, %v2220
    %v3505 = vadd.f32 %v3504, %v2227
    %v3506 = vadd.f32 %v3505, %v2234
    %v3507 = vadd.f32 %v3506, %v2241
    %v3508 = vadd.f32 %v3507, %v2248
    %v3509 = vadd.f32 %v3508, %v2255
    %v3510 = vadd.f32 %v3509, %v2262
    %v3511 = vadd.f32 %v3510, %v2269
    %v3512 = vadd.f32 %v3511, %v2276
    %v3513 = vadd.f32 %v3512, %v2283
    %v3514 = vadd.f32 %v3513, %v2290
    %v3515 = vadd.f32 %v3514, %v2297
    %v3516 = vadd.f32 %v3515, %v2304
    %v3517 = vrot.slane %v3516, 4
    %v3518 = vadd.f32 %v3516, %v3517
    %v3519 = vrot.slane %v3518, 2
    %v3520 = vadd.f32 %v3518, %v3519
    %v3521 = vrot.slane %v3520, 1
    %v3522 = vadd.f32 %v3520, %v3521
    %v3523 = vsel %vm2544, %v2200, 0.0
    %v3524 = vsel %vm2544, %v2207, 0.0
    %v3525 = vadd.f32 %v3523, %v3524
    %v3526 = vsel %vm2544, %v2214, 0.0
    %v3527 = vadd.f32 %v3525, %v3526
    %v3528 = vsel %vm2544, %v2221, 0.0
    %v3529 = vadd.f32 %v3527, %v3528
    %v3530 = vsel %vm2544, %v2228, 0.0
    %v3531 = vadd.f32 %v3529, %v3530
    %v3532 = vsel %vm2544, %v2235, 0.0
    %v3533 = vadd.f32 %v3531, %v3532
    %v3534 = vsel %vm2544, %v2242, 0.0
    %v3535 = vadd.f32 %v3533, %v3534
    %v3536 = vsel %vm2544, %v2249, 0.0
    %v3537 = vadd.f32 %v3535, %v3536
    %v3538 = vsel %vm2544, %v2256, 0.0
    %v3539 = vadd.f32 %v3537, %v3538
    %v3540 = vsel %vm2544, %v2263, 0.0
    %v3541 = vadd.f32 %v3539, %v3540
    %v3542 = vsel %vm2544, %v2270, 0.0
    %v3543 = vadd.f32 %v3541, %v3542
    %v3544 = vsel %vm2544, %v2277, 0.0
    %v3545 = vadd.f32 %v3543, %v3544
    %v3546 = vsel %vm2544, %v2284, 0.0
    %v3547 = vadd.f32 %v3545, %v3546
    %v3548 = vsel %vm2544, %v2291, 0.0
    %v3549 = vadd.f32 %v3547, %v3548
    %v3550 = vsel %vm2544, %v2298, 0.0
    %v3551 = vadd.f32 %v3549, %v3550
    %v3552 = vsel %vm2544, %v2305, 0.0
    %v3553 = vadd.f32 %v3551, %v3552
    %v3554 = vrot.slane %v3553, 4
    %v3555 = vadd.f32 %v3553, %v3554
    %v3556 = vrot.slane %v3555, 2
    %v3557 = vadd.f32 %v3555, %v3556
    %v3558 = vrot.slane %v3557, 1
    %v3559 = vadd.f32 %v3557, %v3558
    %v3560 = vadd.f32 %v2306, %v2313
    %v3561 = vadd.f32 %v3560, %v2320
    %v3562 = vadd.f32 %v3561, %v2327
    %v3563 = vadd.f32 %v3562, %v2334
    %v3564 = vadd.f32 %v3563, %v2341
    %v3565 = vadd.f32 %v3564, %v2348
    %v3566 = vadd.f32 %v3565, %v2355
    %v3567 = vadd.f32 %v3566, %v2362
    %v3568 = vadd.f32 %v3567, %v2369
    %v3569 = vadd.f32 %v3568, %v2376
    %v3570 = vadd.f32 %v3569, %v2383
    %v3571 = vadd.f32 %v3570, %v2390
    %v3572 = vadd.f32 %v3571, %v2397
    %v3573 = vadd.f32 %v3572, %v2404
    %v3574 = vadd.f32 %v3573, %v2411
    %v3575 = vrot.slane %v3574, 4
    %v3576 = vadd.f32 %v3574, %v3575
    %v3577 = vrot.slane %v3576, 2
    %v3578 = vadd.f32 %v3576, %v3577
    %v3579 = vrot.slane %v3578, 1
    %v3580 = vadd.f32 %v3578, %v3579
    %v3581 = vadd.f32 %v2307, %v2314
    %v3582 = vadd.f32 %v3581, %v2321
    %v3583 = vadd.f32 %v3582, %v2328
    %v3584 = vadd.f32 %v3583, %v2335
    %v3585 = vadd.f32 %v3584, %v2342
    %v3586 = vadd.f32 %v3585, %v2349
    %v3587 = vadd.f32 %v3586, %v2356
    %v3588 = vadd.f32 %v3587, %v2363
    %v3589 = vadd.f32 %v3588, %v2370
    %v3590 = vadd.f32 %v3589, %v2377
    %v3591 = vadd.f32 %v3590, %v2384
    %v3592 = vadd.f32 %v3591, %v2391
    %v3593 = vadd.f32 %v3592, %v2398
    %v3594 = vadd.f32 %v3593, %v2405
    %v3595 = vadd.f32 %v3594, %v2412
    %v3596 = vrot.slane %v3595, 4
    %v3597 = vadd.f32 %v3595, %v3596
    %v3598 = vrot.slane %v3597, 2
    %v3599 = vadd.f32 %v3597, %v3598
    %v3600 = vrot.slane %v3599, 1
    %v3601 = vadd.f32 %v3599, %v3600
    %v3602 = vadd.f32 %v2308, %v2315
    %v3603 = vadd.f32 %v3602, %v2322
    %v3604 = vadd.f32 %v3603, %v2329
    %v3605 = vadd.f32 %v3604, %v2336
    %v3606 = vadd.f32 %v3605, %v2343
    %v3607 = vadd.f32 %v3606, %v2350
    %v3608 = vadd.f32 %v3607, %v2357
    %v3609 = vadd.f32 %v3608, %v2364
    %v3610 = vadd.f32 %v3609, %v2371
    %v3611 = vadd.f32 %v3610, %v2378
    %v3612 = vadd.f32 %v3611, %v2385
    %v3613 = vadd.f32 %v3612, %v2392
    %v3614 = vadd.f32 %v3613, %v2399
    %v3615 = vadd.f32 %v3614, %v2406
    %v3616 = vadd.f32 %v3615, %v2413
    %v3617 = vrot.slane %v3616, 4
    %v3618 = vadd.f32 %v3616, %v3617
    %v3619 = vrot.slane %v3618, 2
    %v3620 = vadd.f32 %v3618, %v3619
    %v3621 = vrot.slane %v3620, 1
    %v3622 = vadd.f32 %v3620, %v3621
    %v3623 = vadd.f32 %v2309, %v2316
    %v3624 = vadd.f32 %v3623, %v2323
    %v3625 = vadd.f32 %v3624, %v2330
    %v3626 = vadd.f32 %v3625, %v2337
    %v3627 = vadd.f32 %v3626, %v2344
    %v3628 = vadd.f32 %v3627, %v2351
    %v3629 = vadd.f32 %v3628, %v2358
    %v3630 = vadd.f32 %v3629, %v2365
    %v3631 = vadd.f32 %v3630, %v2372
    %v3632 = vadd.f32 %v3631, %v2379
    %v3633 = vadd.f32 %v3632, %v2386
    %v3634 = vadd.f32 %v3633, %v2393
    %v3635 = vadd.f32 %v3634, %v2400
    %v3636 = vadd.f32 %v3635, %v2407
    %v3637 = vadd.f32 %v3636, %v2414
    %v3638 = vrot.slane %v3637, 4
    %v3639 = vadd.f32 %v3637, %v3638
    %v3640 = vrot.slane %v3639, 2
    %v3641 = vadd.f32 %v3639, %v3640
    %v3642 = vrot.slane %v3641, 1
    %v3643 = vadd.f32 %v3641, %v3642
    %v3644 = vadd.f32 %v2310, %v2317
    %v3645 = vadd.f32 %v3644, %v2324
    %v3646 = vadd.f32 %v3645, %v2331
    %v3647 = vadd.f32 %v3646, %v2338
    %v3648 = vadd.f32 %v3647, %v2345
    %v3649 = vadd.f32 %v3648, %v2352
    %v3650 = vadd.f32 %v3649, %v2359
    %v3651 = vadd.f32 %v3650, %v2366
    %v3652 = vadd.f32 %v3651, %v2373
    %v3653 = vadd.f32 %v3652, %v2380
    %v3654 = vadd.f32 %v3653, %v2387
    %v3655 = vadd.f32 %v3654, %v2394
    %v3656 = vadd.f32 %v3655, %v2401
    %v3657 = vadd.f32 %v3656, %v2408
    %v3658 = vadd.f32 %v3657, %v2415
    %v3659 = vrot.slane %v3658, 4
    %v3660 = vadd.f32 %v3658, %v3659
    %v3661 = vrot.slane %v3660, 2
    %v3662 = vadd.f32 %v3660, %v3661
    %v3663 = vrot.slane %v3662, 1
    %v3664 = vadd.f32 %v3662, %v3663
    %v3665 = vadd.f32 %v2311, %v2318
    %v3666 = vadd.f32 %v3665, %v2325
    %v3667 = vadd.f32 %v3666, %v2332
    %v3668 = vadd.f32 %v3667, %v2339
    %v3669 = vadd.f32 %v3668, %v2346
    %v3670 = vadd.f32 %v3669, %v2353
    %v3671 = vadd.f32 %v3670, %v2360
    %v3672 = vadd.f32 %v3671, %v2367
    %v3673 = vadd.f32 %v3672, %v2374
    %v3674 = vadd.f32 %v3673, %v2381
    %v3675 = vadd.f32 %v3674, %v2388
    %v3676 = vadd.f32 %v3675, %v2395
    %v3677 = vadd.f32 %v3676, %v2402
    %v3678 = vadd.f32 %v3677, %v2409
    %v3679 = vadd.f32 %v3678, %v2416
    %v3680 = vrot.slane %v3679, 4
    %v3681 = vadd.f32 %v3679, %v3680
    %v3682 = vrot.slane %v3681, 2
    %v3683 = vadd.f32 %v3681, %v3682
    %v3684 = vrot.slane %v3683, 1
    %v3685 = vadd.f32 %v3683, %v3684
    %v3686 = vsel %vm2544, %v2312, 0.0
    %v3687 = vsel %vm2544, %v2319, 0.0
    %v3688 = vadd.f32 %v3686, %v3687
    %v3689 = vsel %vm2544, %v2326, 0.0
    %v3690 = vadd.f32 %v3688, %v3689
    %v3691 = vsel %vm2544, %v2333, 0.0
    %v3692 = vadd.f32 %v3690, %v3691
    %v3693 = vsel %vm2544, %v2340, 0.0
    %v3694 = vadd.f32 %v3692, %v3693
    %v3695 = vsel %vm2544, %v2347, 0.0
    %v3696 = vadd.f32 %v3694, %v3695
    %v3697 = vsel %vm2544, %v2354, 0.0
    %v3698 = vadd.f32 %v3696, %v3697
    %v3699 = vsel %vm2544, %v2361, 0.0
    %v3700 = vadd.f32 %v3698, %v3699
    %v3701 = vsel %vm2544, %v2368, 0.0
    %v3702 = vadd.f32 %v3700, %v3701
    %v3703 = vsel %vm2544, %v2375, 0.0
    %v3704 = vadd.f32 %v3702, %v3703
    %v3705 = vsel %vm2544, %v2382, 0.0
    %v3706 = vadd.f32 %v3704, %v3705
    %v3707 = vsel %vm2544, %v2389, 0.0
    %v3708 = vadd.f32 %v3706, %v3707
    %v3709 = vsel %vm2544, %v2396, 0.0
    %v3710 = vadd.f32 %v3708, %v3709
    %v3711 = vsel %vm2544, %v2403, 0.0
    %v3712 = vadd.f32 %v3710, %v3711
    %v3713 = vsel %vm2544, %v2410, 0.0
    %v3714 = vadd.f32 %v3712, %v3713
    %v3715 = vsel %vm2544, %v2417, 0.0
    %v3716 = vadd.f32 %v3714, %v3715
    %v3717 = vrot.slane %v3716, 4
    %v3718 = vadd.f32 %v3716, %v3717
    %v3719 = vrot.slane %v3718, 2
    %v3720 = vadd.f32 %v3718, %v3719
    %v3721 = vrot.slane %v3720, 1
    %v3722 = vadd.f32 %v3720, %v3721
    %v3723 = vld [vmem:[%s2] sm:$0xff]
    %v3724 = vld [vmem:[%s2 + $0x8] sm:$0xff]
    %v3725 = vld [vmem:[%s2 + $0x10] sm:$0xff]
    %v3726 = vld [vmem:[%s2 + $0x18] sm:$0xff]
    %v3727 = vld [vmem:[%s2 + $0x20] sm:$0xff]
    %v3728 = vld [vmem:[%s2 + $0x28] sm:$0xff]
    %v3729 = vld [vmem:[%s2 + $0x30] sm:$0xff]
    %v3730 = vld [vmem:[%s2 + $0x38] sm:$0xff]
    %v3731 = vld [vmem:[%s2 + $0x40] sm:$0xff]
    %v3732 = vld [vmem:[%s2 + $0x48] sm:$0xff]
    %v3733 = vld [vmem:[%s2 + $0x50] sm:$0xff]
    %v3734 = vld [vmem:[%s2 + $0x58] sm:$0xff]
    %v3735 = vld [vmem:[%s2 + $0x60] sm:$0xff]
    %v3736 = vld [vmem:[%s2 + $0x68] sm:$0xff]
    %v3737 = vld [vmem:[%s2 + $0x70] sm:$0xff]
    %v3738 = vld [vmem:[%s2 + $0x78] sm:$0xff]
    %v3739 = vld [vmem:[%s2 + $0x80] sm:$0xff]
    %v3740 = vld [vmem:[%s2 + $0x88] sm:$0xff]
    %v3741 = vld [vmem:[%s2 + $0x90] sm:$0xff]
    %v3742 = vld [vmem:[%s2 + $0x98] sm:$0xff]
    %v3743 = vld [vmem:[%s2 + $0xa0] sm:$0xff]
    %v3744 = vld [vmem:[%s2 + $0xa8] sm:$0xff]
    %v3745 = vld [vmem:[%s2 + $0xb0] sm:$0xff]
    %v3746 = vld [vmem:[%s2 + $0xb8] sm:$0xff]
    %v3747 = vld [vmem:[%s2 + $0xc0] sm:$0xff]
    %v3748 = vld [vmem:[%s2 + $0xc8] sm:$0xff]
    %v3749 = vld [vmem:[%s2 + $0xd0] sm:$0xff]
    %v3750 = vld [vmem:[%s2 + $0xd8] sm:$0xff]
    %v3751 = vld [vmem:[%s2 + $0xe0] sm:$0xff]
    %v3752 = vld [vmem:[%s2 + $0xe8] sm:$0xff]
    %v3753 = vld [vmem:[%s2 + $0xf0] sm:$0xff]
    %v3754 = vld [vmem:[%s2 + $0xf8] sm:$0xff]
    %v3755 = vld [vmem:[%s2 + $0x100] sm:$0xff]
    %v3756 = vld [vmem:[%s2 + $0x108] sm:$0xff]
    %v3757 = vld [vmem:[%s2 + $0x110] sm:$0xff]
    %v3758 = vld [vmem:[%s2 + $0x118] sm:$0xff]
    %v3759 = vld [vmem:[%s2 + $0x120] sm:$0xff]
    %v3760 = vld [vmem:[%s2 + $0x128] sm:$0xff]
    %v3761 = vld [vmem:[%s2 + $0x130] sm:$0xff]
    %v3762 = vld [vmem:[%s2 + $0x138] sm:$0xff]
    %v3763 = vld [vmem:[%s2 + $0x140] sm:$0xff]
    %v3764 = vld [vmem:[%s2 + $0x148] sm:$0xff]
    %v3765 = vld [vmem:[%s2 + $0x150] sm:$0xff]
    %v3766 = vld [vmem:[%s2 + $0x158] sm:$0xff]
    %v3767 = vld [vmem:[%s2 + $0x160] sm:$0xff]
    %v3768 = vld [vmem:[%s2 + $0x168] sm:$0xff]
    %v3769 = vld [vmem:[%s2 + $0x170] sm:$0xff]
    %v3770 = vld [vmem:[%s2 + $0x178] sm:$0xff]
    %v3771 = vld [vmem:[%s2 + $0x180] sm:$0xff]
    %v3772 = vld [vmem:[%s2 + $0x188] sm:$0xff]
    %v3773 = vld [vmem:[%s2 + $0x190] sm:$0xff]
    %v3774 = vld [vmem:[%s2 + $0x198] sm:$0xff]
    %v3775 = vld [vmem:[%s2 + $0x1a0] sm:$0xff]
    %v3776 = vld [vmem:[%s2 + $0x1a8] sm:$0xff]
    %v3777 = vld [vmem:[%s2 + $0x1b0] sm:$0xff]
    %v3778 = vld [vmem:[%s2 + $0x1b8] sm:$0xff]
    %v3779 = vld [vmem:[%s2 + $0x1c0] sm:$0xff]
    %v3780 = vld [vmem:[%s2 + $0x1c8] sm:$0xff]
    %v3781 = vld [vmem:[%s2 + $0x1d0] sm:$0xff]
    %v3782 = vld [vmem:[%s2 + $0x1d8] sm:$0xff]
    %v3783 = vld [vmem:[%s2 + $0x1e0] sm:$0xff]
    %v3784 = vld [vmem:[%s2 + $0x1e8] sm:$0xff]
    %v3785 = vld [vmem:[%s2 + $0x1f0] sm:$0xff]
    %v3786 = vld [vmem:[%s2 + $0x1f8] sm:$0xff]
    %v3787 = vld [vmem:[%s2 + $0x200] sm:$0xff]
    %v3788 = vld [vmem:[%s2 + $0x208] sm:$0xff]
    %v3789 = vld [vmem:[%s2 + $0x210] sm:$0xff]
    %v3790 = vld [vmem:[%s2 + $0x218] sm:$0xff]
    %v3791 = vld [vmem:[%s2 + $0x220] sm:$0xff]
    %v3792 = vld [vmem:[%s2 + $0x228] sm:$0xff]
    %v3793 = vld [vmem:[%s2 + $0x230] sm:$0xff]
    %v3794 = vld [vmem:[%s2 + $0x238] sm:$0xff]
    %v3795 = vld [vmem:[%s2 + $0x240] sm:$0xff]
    %v3796 = vld [vmem:[%s2 + $0x248] sm:$0xff]
    %v3797 = vld [vmem:[%s2 + $0x250] sm:$0xff]
    %v3798 = vld [vmem:[%s2 + $0x258] sm:$0xff]
    %v3799 = vld [vmem:[%s2 + $0x260] sm:$0xff]
    %v3800 = vld [vmem:[%s2 + $0x268] sm:$0xff]
    %v3801 = vld [vmem:[%s2 + $0x270] sm:$0xff]
    %v3802 = vld [vmem:[%s2 + $0x278] sm:$0xff]
    %v3803 = vld [vmem:[%s2 + $0x280] sm:$0xff]
    %v3804 = vld [vmem:[%s2 + $0x288] sm:$0xff]
    %v3805 = vld [vmem:[%s2 + $0x290] sm:$0xff]
    %v3806 = vld [vmem:[%s2 + $0x298] sm:$0xff]
    %v3807 = vld [vmem:[%s2 + $0x2a0] sm:$0xff]
    %v3808 = vld [vmem:[%s2 + $0x2a8] sm:$0xff]
    %v3809 = vld [vmem:[%s2 + $0x2b0] sm:$0xff]
    %v3810 = vld [vmem:[%s2 + $0x2b8] sm:$0xff]
    %v3811 = vld [vmem:[%s2 + $0x2c0] sm:$0xff]
    %v3812 = vld [vmem:[%s2 + $0x2c8] sm:$0xff]
    %v3813 = vld [vmem:[%s2 + $0x2d0] sm:$0xff]
    %v3814 = vld [vmem:[%s2 + $0x2d8] sm:$0xff]
    %v3815 = vld [vmem:[%s2 + $0x2e0] sm:$0xff]
    %v3816 = vld [vmem:[%s2 + $0x2e8] sm:$0xff]
    %v3817 = vld [vmem:[%s2 + $0x2f0] sm:$0xff]
    %v3818 = vld [vmem:[%s2 + $0x2f8] sm:$0xff]
    %v3819 = vld [vmem:[%s2 + $0x300] sm:$0xff]
    %v3820 = vld [vmem:[%s2 + $0x308] sm:$0xff]
    %v3821 = vld [vmem:[%s3] sm:$0x1]
    %v3823 = vlaneseq
    %v3824 = vshrl.u32 %v3823, 7
    %v3825 = vsub.s32 0, %v3824
    %v3826 = vrot.slane %v3821, %v3825
    %vm3884 = vcmask 1041409
    %v3885 = vsel %vm3884, %v2602, %v2438
    %vm3886 = vcmask 1042434
    %v3887 = vsel %vm3886, %v2765, %v3885
    %vm3888 = vcmask 1043459
    %v3889 = vsel %vm3888, %v2928, %v3887
    %vm3890 = vcmask 1044484
    %v3891 = vsel %vm3890, %v3091, %v3889
    %vm3892 = vcmask 1045509
    %v3893 = vsel %vm3892, %v3254, %v3891
    %vm3894 = vcmask 1046534
    %v3895 = vsel %vm3894, %v3417, %v3893
    %vm3896 = vcmask 1047559
    %v3897 = vsel %vm3896, %v3580, %v3895
    %v3898 = vsel %vm3884, %v2623, %v2459
    %v3899 = vsel %vm3886, %v2786, %v3898
    %v3900 = vsel %vm3888, %v2949, %v3899
    %v3901 = vsel %vm3890, %v3112, %v3900
    %v3902 = vsel %vm3892, %v3275, %v3901
    %v3903 = vsel %vm3894, %v3438, %v3902
    %v3904 = vsel %vm3896, %v3601, %v3903
    %v3905 = vsel %vm3884, %v2644, %v2480
    %v3906 = vsel %vm3886, %v2807, %v3905
    %v3907 = vsel %vm3888, %v2970, %v3906
    %v3908 = vsel %vm3890, %v3133, %v3907
    %v3909 = vsel %vm3892, %v3296, %v3908
    %v3910 = vsel %vm3894, %v3459, %v3909
    %v3911 = vsel %vm3896, %v3622, %v3910
    %v3912 = vsel %vm3884, %v2665, %v2501
    %v3913 = vsel %vm3886, %v2828, %v3912
    %v3914 = vsel %vm3888, %v2991, %v3913
    %v3915 = vsel %vm3890, %v3154, %v3914
    %v3916 = vsel %vm3892, %v3317, %v3915
    %v3917 = vsel %vm3894, %v3480, %v3916
    %v3918 = vsel %vm3896, %v3643, %v3917
    %v3919 = vsel %vm3884, %v2686, %v2522
    %v3920 = vsel %vm3886, %v2849, %v3919
    %v3921 = vsel %vm3888, %v3012, %v3920
    %v3922 = vsel %vm3890, %v3175, %v3921
    %v3923 = vsel %vm3892, %v3338, %v3922
    %v3924 = vsel %vm3894, %v3501, %v3923
    %v3925 = vsel %vm3896, %v3664, %v3924
    %v3926 = vsel %vm3884, %v2707, %v2543
    %v3927 = vsel %vm3886, %v2870, %v3926
    %v3928 = vsel %vm3888, %v3033, %v3927
    %v3929 = vsel %vm3890, %v3196, %v3928
    %v3930 = vsel %vm3892, %v3359, %v3929
    %v3931 = vsel %vm3894, %v3522, %v3930
    %v3932 = vsel %vm3896, %v3685, %v3931
    %v3933 = vsel %vm3884, %v2744, %v2581
    %v3934 = vsel %vm3886, %v2907, %v3933
    %v3935 = vsel %vm3888, %v3070, %v3934
    %v3936 = vsel %vm3890, %v3233, %v3935
    %v3937 = vsel %vm3892, %v3396, %v3936
    %v3938 = vsel %vm3894, %v3559, %v3937
    %v3939 = vsel %vm3896, %v3722, %v3938
    %v3946 = vsel %vm2544, %v3939, 0
    %3948 = vmatprep.subr.mxu0 0.0
    %3949 = vmatpush1.msra.mxu0 %v3723
    %3950 = vmatprep.subr.mxu0 0.0
    %3951 = vmatpush1.msra.mxu0 %v3724
    %3952 = vmatprep.subr.mxu0 0.0
    %3953 = vmatpush1.msra.mxu0 %v3725
    %3954 = vmatprep.subr.mxu0 0.0
    %3955 = vmatpush1.msra.mxu0 %v3726
    %3956 = vmatprep.subr.mxu0 0.0
    %3957 = vmatpush1.msra.mxu0 %v3727
    %3958 = vmatprep.subr.mxu0 0.0
    %3959 = vmatpush1.msra.mxu0 %v3728
    %3960 = vmatprep.subr.mxu0 0.0
    %3961 = vmatpush1.msra.mxu0 %v3729
    %3962 = vmatprep.subr.mxu0 0.0
    %3963 = vmatpush1.msra.mxu0 %v3730
    %3964 = vmatprep.subr.mxu0 0.0
    %3965 = vmatpush1.msra.mxu0 %v3731
    %3966 = vmatprep.subr.mxu0 0.0
    %3967 = vmatpush1.msra.mxu0 %v3732
    %3968 = vmatprep.subr.mxu0 0.0
    %3969 = vmatpush1.msra.mxu0 %v3733
    %3970 = vmatprep.subr.mxu0 0.0
    %3971 = vmatpush1.msra.mxu0 %v3734
    %3972 = vmatprep.subr.mxu0 0.0
    %3973 = vmatpush1.msra.mxu0 %v3735
    %3974 = vmatprep.subr.mxu0 0.0
    %3975 = vmatpush1.msra.mxu0 %v3736
    %3976 = vmatprep.subr.mxu0 0.0
    %3977 = vmatpush1.msra.mxu0 %v3737
    %3978 = vmatprep.subr.mxu0 0.0
    %3979 = vmatpush1.msra.mxu0 %v3738
    %3980 = vmatprep.subr.mxu0 0.0
    %3981 = vmatpush1.msra.mxu0 %v3739
    %3982 = vmatprep.subr.mxu0 0.0
    %3983 = vmatpush1.msra.mxu0 %v3740
    %3984 = vmatprep.subr.mxu0 0.0
    %3985 = vmatpush1.msra.mxu0 %v3741
    %3986 = vmatprep.subr.mxu0 0.0
    %3987 = vmatpush1.msra.mxu0 %v3742
    %3988 = vmatprep.subr.mxu0 0.0
    %3989 = vmatpush1.msra.mxu0 %v3743
    %3990 = vmatprep.subr.mxu0 0.0
    %3991 = vmatpush1.msra.mxu0 %v3744
    %3992 = vmatprep.subr.mxu0 0.0
    %3993 = vmatpush1.msra.mxu0 %v3745
    %3994 = vmatprep.subr.mxu0 0.0
    %3995 = vmatpush1.msra.mxu0 %v3746
    %3996 = vmatprep.subr.mxu0 0.0
    %3997 = vmatpush1.msra.mxu0 %v3747
    %3998 = vmatprep.subr.mxu0 0.0
    %3999 = vmatpush1.msra.mxu0 %v3748
    %4000 = vmatprep.subr.mxu0 0.0
    %4001 = vmatpush1.msra.mxu0 %v3749
    %4002 = vmatprep.subr.mxu0 0.0
    %4003 = vmatpush1.msra.mxu0 %v3750
    %4004 = vmatprep.subr.mxu0 0.0
    %4005 = vmatpush1.msra.mxu0 %v3751
    %4006 = vmatprep.subr.mxu0 0.0
    %4007 = vmatpush1.msra.mxu0 %v3752
    %4008 = vmatprep.subr.mxu0 0.0
    %4009 = vmatpush1.msra.mxu0 %v3753
    %4010 = vmatprep.subr.mxu0 0.0
    %4011 = vmatpush1.msra.mxu0 %v3754
    %4012 = vmatprep.mubr.f32.mxu0 %v3904
    %4013 = vmatmul.mubr.f32.gmra.mrb[0].mxu0 %v3897
    %v4014 = vpop.f32.mrb[0].mxu0
    %v4015 = vadd.f32 %v3826, %v4014
    %v4016 = vpop.f32.mrb[0].mxu0
    %4017 = vdwg.mxu0
    %4018 = vmatprep.subr.mxu0 0.0
    %4019 = vmatpush1.msra.mxu0 %v3755
    %4020 = vmatprep.subr.mxu0 0.0
    %4021 = vmatpush1.msra.mxu0 %v3756
    %4022 = vmatprep.subr.mxu0 0.0
    %4023 = vmatpush1.msra.mxu0 %v3757
    %4024 = vmatprep.subr.mxu0 0.0
    %4025 = vmatpush1.msra.mxu0 %v3758
    %4026 = vmatprep.subr.mxu0 0.0
    %4027 = vmatpush1.msra.mxu0 %v3759
    %4028 = vmatprep.subr.mxu0 0.0
    %4029 = vmatpush1.msra.mxu0 %v3760
    %4030 = vmatprep.subr.mxu0 0.0
    %4031 = vmatpush1.msra.mxu0 %v3761
    %4032 = vmatprep.subr.mxu0 0.0
    %4033 = vmatpush1.msra.mxu0 %v3762
    %4034 = vmatprep.subr.mxu0 0.0
    %4035 = vmatpush1.msra.mxu0 %v3763
    %4036 = vmatprep.subr.mxu0 0.0
    %4037 = vmatpush1.msra.mxu0 %v3764
    %4038 = vmatprep.subr.mxu0 0.0
    %4039 = vmatpush1.msra.mxu0 %v3765
    %4040 = vmatprep.subr.mxu0 0.0
    %4041 = vmatpush1.msra.mxu0 %v3766
    %4042 = vmatprep.subr.mxu0 0.0
    %4043 = vmatpush1.msra.mxu0 %v3767
    %4044 = vmatprep.subr.mxu0 0.0
    %4045 = vmatpush1.msra.mxu0 %v3768
    %4046 = vmatprep.subr.mxu0 0.0
    %4047 = vmatpush1.msra.mxu0 %v3769
    %4048 = vmatprep.subr.mxu0 0.0
    %4049 = vmatpush1.msra.mxu0 %v3770
    %4050 = vmatprep.subr.mxu0 0.0
    %4051 = vmatpush1.msra.mxu0 %v3771
    %4052 = vmatprep.subr.mxu0 0.0
    %4053 = vmatpush1.msra.mxu0 %v3772
    %4054 = vmatprep.subr.mxu0 0.0
    %4055 = vmatpush1.msra.mxu0 %v3773
    %4056 = vmatprep.subr.mxu0 0.0
    %4057 = vmatpush1.msra.mxu0 %v3774
    %4058 = vmatprep.subr.mxu0 0.0
    %4059 = vmatpush1.msra.mxu0 %v3775
    %4060 = vmatprep.subr.mxu0 0.0
    %4061 = vmatpush1.msra.mxu0 %v3776
    %4062 = vmatprep.subr.mxu0 0.0
    %4063 = vmatpush1.msra.mxu0 %v3777
    %4064 = vmatprep.subr.mxu0 0.0
    %4065 = vmatpush1.msra.mxu0 %v3778
    %4066 = vmatprep.subr.mxu0 0.0
    %4067 = vmatpush1.msra.mxu0 %v3779
    %4068 = vmatprep.subr.mxu0 0.0
    %4069 = vmatpush1.msra.mxu0 %v3780
    %4070 = vmatprep.subr.mxu0 0.0
    %4071 = vmatpush1.msra.mxu0 %v3781
    %4072 = vmatprep.subr.mxu0 0.0
    %4073 = vmatpush1.msra.mxu0 %v3782
    %4074 = vmatprep.subr.mxu0 0.0
    %4075 = vmatpush1.msra.mxu0 %v3783
    %4076 = vmatprep.subr.mxu0 0.0
    %4077 = vmatpush1.msra.mxu0 %v3784
    %4078 = vmatprep.subr.mxu0 0.0
    %4079 = vmatpush1.msra.mxu0 %v3785
    %4080 = vmatprep.subr.mxu0 0.0
    %4081 = vmatpush1.msra.mxu0 %v3786
    %4082 = vmatprep.mubr.f32.mxu0 %v3918
    %4083 = vmatmul.mubr.f32.gmra.mrb[0].mxu0 %v3911
    %v4084 = vpop.f32.mrb[0].mxu0
    %v4085 = vadd.f32 %v4015, %v4084
    %v4086 = vpop.f32.mrb[0].mxu0
    %4087 = vdwg.mxu0
    %4088 = vmatprep.subr.mxu0 0.0
    %4089 = vmatpush1.msra.mxu0 %v3787
    %4090 = vmatprep.subr.mxu0 0.0
    %4091 = vmatpush1.msra.mxu0 %v3788
    %4092 = vmatprep.subr.mxu0 0.0
    %4093 = vmatpush1.msra.mxu0 %v3789
    %4094 = vmatprep.subr.mxu0 0.0
    %4095 = vmatpush1.msra.mxu0 %v3790
    %4096 = vmatprep.subr.mxu0 0.0
    %4097 = vmatpush1.msra.mxu0 %v3791
    %4098 = vmatprep.subr.mxu0 0.0
    %4099 = vmatpush1.msra.mxu0 %v3792
    %4100 = vmatprep.subr.mxu0 0.0
    %4101 = vmatpush1.msra.mxu0 %v3793
    %4102 = vmatprep.subr.mxu0 0.0
    %4103 = vmatpush1.msra.mxu0 %v3794
    %4104 = vmatprep.subr.mxu0 0.0
    %4105 = vmatpush1.msra.mxu0 %v3795
    %4106 = vmatprep.subr.mxu0 0.0
    %4107 = vmatpush1.msra.mxu0 %v3796
    %4108 = vmatprep.subr.mxu0 0.0
    %4109 = vmatpush1.msra.mxu0 %v3797
    %4110 = vmatprep.subr.mxu0 0.0
    %4111 = vmatpush1.msra.mxu0 %v3798
    %4112 = vmatprep.subr.mxu0 0.0
    %4113 = vmatpush1.msra.mxu0 %v3799
    %4114 = vmatprep.subr.mxu0 0.0
    %4115 = vmatpush1.msra.mxu0 %v3800
    %4116 = vmatprep.subr.mxu0 0.0
    %4117 = vmatpush1.msra.mxu0 %v3801
    %4118 = vmatprep.subr.mxu0 0.0
    %4119 = vmatpush1.msra.mxu0 %v3802
    %4120 = vmatprep.subr.mxu0 0.0
    %4121 = vmatpush1.msra.mxu0 %v3803
    %4122 = vmatprep.subr.mxu0 0.0
    %4123 = vmatpush1.msra.mxu0 %v3804
    %4124 = vmatprep.subr.mxu0 0.0
    %4125 = vmatpush1.msra.mxu0 %v3805
    %4126 = vmatprep.subr.mxu0 0.0
    %4127 = vmatpush1.msra.mxu0 %v3806
    %4128 = vmatprep.subr.mxu0 0.0
    %4129 = vmatpush1.msra.mxu0 %v3807
    %4130 = vmatprep.subr.mxu0 0.0
    %4131 = vmatpush1.msra.mxu0 %v3808
    %4132 = vmatprep.subr.mxu0 0.0
    %4133 = vmatpush1.msra.mxu0 %v3809
    %4134 = vmatprep.subr.mxu0 0.0
    %4135 = vmatpush1.msra.mxu0 %v3810
    %4136 = vmatprep.subr.mxu0 0.0
    %4137 = vmatpush1.msra.mxu0 %v3811
    %4138 = vmatprep.subr.mxu0 0.0
    %4139 = vmatpush1.msra.mxu0 %v3812
    %4140 = vmatprep.subr.mxu0 0.0
    %4141 = vmatpush1.msra.mxu0 %v3813
    %4142 = vmatprep.subr.mxu0 0.0
    %4143 = vmatpush1.msra.mxu0 %v3814
    %4144 = vmatprep.subr.mxu0 0.0
    %4145 = vmatpush1.msra.mxu0 %v3815
    %4146 = vmatprep.subr.mxu0 0.0
    %4147 = vmatpush1.msra.mxu0 %v3816
    %4148 = vmatprep.subr.mxu0 0.0
    %4149 = vmatpush1.msra.mxu0 %v3817
    %4150 = vmatprep.subr.mxu0 0.0
    %4151 = vmatpush1.msra.mxu0 %v3818
    %4152 = vmatprep.mubr.f32.mxu0 %v3932
    %4153 = vmatmul.mubr.f32.gmra.mrb[0].mxu0 %v3925
    %v4154 = vpop.f32.mrb[0].mxu0
    %v4155 = vadd.f32 %v4085, %v4154
    %v4156 = vpop.f32.mrb[0].mxu0
    %4157 = vdwg.mxu0
    %4158 = vmatprep.subr.mxu0 0.0
    %4159 = vmatpush1.msra.mxu0 %v3819
    %4160 = vmatprep.subr.mxu0 0.0
    %4161 = vmatpush1.msra.mxu0 %v3820
    %4162 = vmatprep.subr.mxu0 0.0
    %4163 = vmatpush1.msra.mxu0 0.0
    %4164 = vmatprep.subr.mxu0 0.0
    %4165 = vmatpush1.msra.mxu0 0.0
    %4166 = vmatprep.subr.mxu0 0.0
    %4167 = vmatpush1.msra.mxu0 0.0
    %4168 = vmatprep.subr.mxu0 0.0
    %4169 = vmatpush1.msra.mxu0 0.0
    %4170 = vmatprep.subr.mxu0 0.0
    %4171 = vmatpush1.msra.mxu0 0.0
    %4172 = vmatprep.subr.mxu0 0.0
    %4173 = vmatpush1.msra.mxu0 0.0
    %4174 = vmatprep.subr.mxu0 0.0
    %4175 = vmatpush1.msra.mxu0 0.0
    %4176 = vmatprep.subr.mxu0 0.0
    %4177 = vmatpush1.msra.mxu0 0.0
    %4178 = vmatprep.subr.mxu0 0.0
    %4179 = vmatpush1.msra.mxu0 0.0
    %4180 = vmatprep.subr.mxu0 0.0
    %4181 = vmatpush1.msra.mxu0 0.0
    %4182 = vmatprep.subr.mxu0 0.0
    %4183 = vmatpush1.msra.mxu0 0.0
    %4184 = vmatprep.subr.mxu0 0.0
    %4185 = vmatpush1.msra.mxu0 0.0
    %4186 = vmatprep.subr.mxu0 0.0
    %4187 = vmatpush1.msra.mxu0 0.0
    %4188 = vmatprep.subr.mxu0 0.0
    %4189 = vmatpush1.msra.mxu0 0.0
    %4190 = vmatprep.subr.mxu0 0.0
    %4191 = vmatpush1.msra.mxu0 0.0
    %4192 = vmatprep.subr.mxu0 0.0
    %4193 = vmatpush1.msra.mxu0 0.0
    %4194 = vmatprep.subr.mxu0 0.0
    %4195 = vmatpush1.msra.mxu0 0.0
    %4196 = vmatprep.subr.mxu0 0.0
    %4197 = vmatpush1.msra.mxu0 0.0
    %4198 = vmatprep.subr.mxu0 0.0
    %4199 = vmatpush1.msra.mxu0 0.0
    %4200 = vmatprep.subr.mxu0 0.0
    %4201 = vmatpush1.msra.mxu0 0.0
    %4202 = vmatprep.subr.mxu0 0.0
    %4203 = vmatpush1.msra.mxu0 0.0
    %4204 = vmatprep.subr.mxu0 0.0
    %4205 = vmatpush1.msra.mxu0 0.0
    %4206 = vmatprep.subr.mxu0 0.0
    %4207 = vmatpush1.msra.mxu0 0.0
    %4208 = vmatprep.subr.mxu0 0.0
    %4209 = vmatpush1.msra.mxu0 0.0
    %4210 = vmatprep.subr.mxu0 0.0
    %4211 = vmatpush1.msra.mxu0 0.0
    %4212 = vmatprep.subr.mxu0 0.0
    %4213 = vmatpush1.msra.mxu0 0.0
    %4214 = vmatprep.subr.mxu0 0.0
    %4215 = vmatpush1.msra.mxu0 0.0
    %4216 = vmatprep.subr.mxu0 0.0
    %4217 = vmatpush1.msra.mxu0 0.0
    %4218 = vmatprep.subr.mxu0 0.0
    %4219 = vmatpush1.msra.mxu0 0.0
    %4220 = vmatprep.subr.mxu0 0.0
    %4221 = vmatpush1.msra.mxu0 0.0
    %4222 = vmatprep.mubr.f32.mxu0 0.0
    %4223 = vmatmul.mubr.f32.gmra.mrb[0].mxu0 %v3946
    %v4224 = vpop.f32.mrb[0].mxu0
    %v4225 = vadd.f32 %v4155, %v4224
    %v4226 = vpop.f32.mrb[0].mxu0
    %4227 = vdwg.mxu0
    %vm4228 = vcmask 261120
    %4229 = vst.msk [vmem:[#allocation2] sm:$0xff] %vm4228, %v4225
    // Predicated region
    $region18: #{tpu_custom_call.1} parent=1 // pred_check
      _
    $region19: #{tpu_custom_call.1} parent=1 // pred_check_branch
      %4231 = sbr.rel (0) target = $region21
    $region20: #{tpu_custom_call.1} parent=1 // pred_region
      %s4233 = ssub.s32 128, 128
      %4234 = vsyncadd [#allocation3], %s4233
      %s4236 = sshll.u32 [#allocation2], 4
      %s4237 = int_to_ptr.vmem [resolvable:$true] %s4236
      %4239 = dma.vmem_to_hbm [thread:$0]  %s4237, 128, %s4, [#allocation3]
    $region21: #{tpu_custom_call.1} parent=1 // pred_fallthru
      _
    // Predicated region
    $region22: #{tpu_custom_call.1} parent=1 // pred_check
      _
    $region23: #{tpu_custom_call.1} parent=1 // pred_check_branch
      %4241 = sbr.rel (0) target = $region25
    $region24: #{tpu_custom_call.1} parent=1 // pred_region
      %4242 = dma.done [#allocation3], 128
    $region25: #{tpu_custom_call.1} parent=1 // pred_fallthru
      _
    %4243 = vsyncpa [#allocation3], 1

</llo_original>
